<compile_context>
chip_gen: v5e
topology: v5e:2x2
jax: 0.10.0
libtpu: 0.0.40
codegen_flags: <defaults>
</compile_context>

<pallas_src>
import functools

import jax
import jax.numpy as jnp
from jax.experimental import pallas as pl
from jax.experimental.pallas import tpu as pltpu


# ----------------------------------------------------------------------------
# Helpers
# ----------------------------------------------------------------------------
def _layer_norm(y, g, b, eps):
    mu = jnp.mean(y, axis=-1, keepdims=True)
    var = jnp.mean((y - mu) ** 2, axis=-1, keepdims=True)
    return (y - mu) * jax.lax.rsqrt(var + eps) * g + b


def _mm(a, w):
    # bf16 operands (MXU-native on all generations), f32 accumulation.
    return jnp.dot(a.astype(jnp.bfloat16), w.astype(jnp.bfloat16),
                   preferred_element_type=jnp.float32)


# ----------------------------------------------------------------------------
# Fused forward kernel (one grid step == one batch element)
# ----------------------------------------------------------------------------
def _fused_forward_kernel(
    x_ref,
    embed_w_ref, embed_b_ref,
    wq_ref, bq_ref, wk_ref, bk_ref, wv_ref, bv_ref,
    wo_ref, bo_ref,
    g1_ref, be1_ref,
    w1_ref, b1_ref, w2_ref, b2_ref,
    g2_ref, be2_ref,
    cw1_ref, cb1_ref, cw2_ref, cb2_ref,
    o_ref,
    *, seq, num_heads, num_layers, eps=1e-5,
):
    S, H, L = seq, num_heads, num_layers

    # ---- embedding: this batch element's (S, Din) rows ---------------------
    x = x_ref[...].reshape(S, -1)                                    # (S, Din)
    h = _mm(x, embed_w_ref[...]) + embed_b_ref[...]                  # (S, D) f32
    D = h.shape[-1]
    dh = D // H
    scale = 1.0 / jnp.sqrt(jnp.float32(dh))

    # TODO(synk): for large num_layers replace this static unroll with a grid axis
    # (or lax.fori_loop over stacked weights) to bound vreg live ranges and enable
    # per-layer weight streaming on v7x (64 MiB VMEM).
    for l in range(L):
        # ---- multi-head self-attention, all heads batched ------------------
        # Three separate lane-aligned projections (no lane-slicing of a fused QKV).
        q = (_mm(h, wq_ref[l]) + bq_ref[l]) * scale                  # (S, D)
        k = _mm(h, wk_ref[l]) + bk_ref[l]
        v = _mm(h, wv_ref[l]) + bv_ref[l]

        # Heads onto a leading (batch/sublane) axis: (S, H*dh) -> (H, S, dh).
        qh = q.reshape(S, H, dh).transpose(1, 0, 2).astype(jnp.bfloat16)
        kh = k.reshape(S, H, dh).transpose(1, 0, 2).astype(jnp.bfloat16)
        vh = v.reshape(S, H, dh).transpose(1, 0, 2)

        s = jnp.einsum("hqd,hkd->hqk", qh, kh,
                       preferred_element_type=jnp.float32)           # (H, S, S)
        s = s - jnp.max(s, axis=-1, keepdims=True)
        p = jnp.exp(s)
        p = p / jnp.sum(p, axis=-1, keepdims=True)                   # exact softmax (f32)
        ctx = jnp.einsum("hqk,hkd->hqd", p.astype(jnp.bfloat16),
                         vh.astype(jnp.bfloat16),
                         preferred_element_type=jnp.float32)          # (H, S, dh)
        ctx = ctx.transpose(1, 0, 2).reshape(S, D)                   # back to (S, D)

        # Single K=D output projection against the full Wo.
        attn = _mm(ctx, wo_ref[l]) + bo_ref[l]

        # ---- residual + LayerNorm 1 (post-norm, norm_first=False) ----------
        h = _layer_norm(h + attn, g1_ref[l], be1_ref[l], eps)

        # ---- feed-forward (dropout = identity, eval mode) -------------------
        ff = jnp.maximum(_mm(h, w1_ref[l]) + b1_ref[l], 0.0)
        ff = _mm(ff, w2_ref[l]) + b2_ref[l]

        # ---- residual + LayerNorm 2 -----------------------------------------
        h = _layer_norm(h + ff, g2_ref[l], be2_ref[l], eps)

    # ---- mean-pool over sequence + classifier MLP ---------------------------
    pooled = jnp.mean(h, axis=0, keepdims=True)                      # (1, D)
    c = jnp.maximum(_mm(pooled, cw1_ref[...]) + cb1_ref[...], 0.0)
    logits = _mm(c, cw2_ref[...]) + cb2_ref[...]                     # (1, C)
    o_ref[...] = logits.reshape(1, 1, -1)


def transformer_classifier(x, params, num_heads):
    B, S, din = x.shape
    L = params["wq"].shape[0]
    C = params["cls_w2"].shape[1]

    weight_names = [
        "embed_w", "embed_b",
        "wq", "bq", "wk", "bk", "wv", "bv",
        "wo", "bo",
        "g1", "be1",
        "w1", "b1", "w2", "b2",
        "g2", "be2",
        "cls_w1", "cls_b1", "cls_w2", "cls_b2",
    ]
    weights = [params[n] for n in weight_names]

    # x is the only batch-tiled operand; every weight keeps a constant block index
    # so it stays VMEM-resident across grid steps (no re-DMA).
    in_specs = [pl.BlockSpec((1, S, din), lambda b: (b, 0, 0))]
    in_specs += [pl.BlockSpec(w.shape, lambda b, nd=w.ndim: (0,) * nd)
                 for w in weights]

    out = pl.pallas_call(
        functools.partial(_fused_forward_kernel, seq=S,
                          num_heads=num_heads, num_layers=L),
        grid=(B,),
        out_shape=jax.ShapeDtypeStruct((B, 1, C), jnp.float32),
        in_specs=in_specs,
        out_specs=pl.BlockSpec((1, 1, C), lambda b: (b, 0, 0)),
        compiler_params=pltpu.CompilerParams(
            dimension_semantics=("parallel",)),
    )(x, *weights)
    return out[:, 0, :]


# ----------------------------------------------------------------------------
# Pure-JAX f32 reference (same math, for correctness check)
# ----------------------------------------------------------------------------
def reference_forward(x, params, num_heads, eps=1e-5):
    def ln(y, g, b):
        mu = jnp.mean(y, axis=-1, keepdims=True)
        var = jnp.mean((y - mu) ** 2, axis=-1, keepdims=True)
        return (y - mu) * jax.lax.rsqrt(var + eps) * g + b

    B, S, _ = x.shape
    x = x @ params["embed_w"] + params["embed_b"]
    D = x.shape[-1]
    H = num_heads
    dh = D // H
    L = params["wq"].shape[0]
    for l in range(L):
        q = (x @ params["wq"][l] + params["bq"][l]) / jnp.sqrt(jnp.float32(dh))
        k = x @ params["wk"][l] + params["bk"][l]
        v = x @ params["wv"][l] + params["bv"][l]
        q = q.reshape(B, S, H, dh).transpose(0, 2, 1, 3)
        k = k.reshape(B, S, H, dh).transpose(0, 2, 1, 3)
        v = v.reshape(B, S, H, dh).transpose(0, 2, 1, 3)
        s = jnp.einsum("bhqd,bhkd->bhqk", q, k)
        p = jax.nn.softmax(s, axis=-1)
        ctx = jnp.einsum("bhqk,bhkd->bhqd", p, v)
        ctx = ctx.transpose(0, 2, 1, 3).reshape(B, S, D)
        attn = ctx @ params["wo"][l] + params["bo"][l]
        x = ln(x + attn, params["g1"][l], params["be1"][l])
        ff = jnp.maximum(x @ params["w1"][l] + params["b1"][l], 0.0)
        ff = ff @ params["w2"][l] + params["b2"][l]
        x = ln(x + ff, params["g2"][l], params["be2"][l])
    pooled = jnp.mean(x, axis=1)
    h = jnp.maximum(pooled @ params["cls_w1"] + params["cls_b1"], 0.0)
    return h @ params["cls_w2"] + params["cls_b2"]


# ----------------------------------------------------------------------------
# Deterministic parameter init (per-layer weights stacked along axis 0)
# ----------------------------------------------------------------------------
def init_params(key, input_dim, hidden_dim, ff_dim, num_layers, num_classes):
    def nrm(k, shape, s=0.05):
        return s * jax.random.normal(k, shape, dtype=jnp.float32)

    keys = jax.random.split(key, 4 + num_layers)
    params = {
        "embed_w": nrm(keys[0], (input_dim, hidden_dim)),
        "embed_b": nrm(keys[1], (1, hidden_dim)),
        "cls_w1": nrm(keys[2], (hidden_dim, hidden_dim // 2)),
        "cls_b1": jnp.zeros((1, hidden_dim // 2), jnp.float32),
        "cls_w2": nrm(keys[3], (hidden_dim // 2, num_classes)),
        "cls_b2": jnp.zeros((1, num_classes), jnp.float32),
    }
    per_layer = []
    for li in range(num_layers):
        ks = jax.random.split(keys[4 + li], 10)
        per_layer.append({
            "wq": nrm(ks[0], (hidden_dim, hidden_dim)),
            "wk": nrm(ks[1], (hidden_dim, hidden_dim)),
            "wv": nrm(ks[2], (hidden_dim, hidden_dim)),
            "bq": nrm(ks[3], (1, hidden_dim), 0.01),
            "bk": nrm(ks[4], (1, hidden_dim), 0.01),
            "bv": nrm(ks[5], (1, hidden_dim), 0.01),
            "wo": nrm(ks[6], (hidden_dim, hidden_dim)),
            "bo": nrm(ks[7], (1, hidden_dim), 0.01),
            "g1": jnp.ones((1, hidden_dim), jnp.float32),
            "be1": jnp.zeros((1, hidden_dim), jnp.float32),
            "w1": nrm(ks[8], (hidden_dim, ff_dim)),
            "b1": jnp.zeros((1, ff_dim), jnp.float32),
            "w2": nrm(ks[9], (ff_dim, hidden_dim)),
            "b2": jnp.zeros((1, hidden_dim), jnp.float32),
            "g2": jnp.ones((1, hidden_dim), jnp.float32),
            "be2": jnp.zeros((1, hidden_dim), jnp.float32),
        })
    for name in per_layer[0]:
        params[name] = jnp.stack([lp[name] for lp in per_layer], axis=0)
    return params


if __name__ == "__main__":
    # Small shapes consistent with the module's forward:
    B, S, INPUT_DIM = 2, 8, 16        # batch, sequence, per-timestep feature dim
    HIDDEN, HEADS, LAYERS = 32, 4, 2  # scaled-down hidden_dim / num_heads / num_layers
    FF_DIM = 64                       # scaled-down dim_feedforward
    NUM_CLASSES = 5

    key = jax.random.PRNGKey(0)
    k_x, k_p = jax.random.split(key)
    x = jax.random.normal(k_x, (B, S, INPUT_DIM), dtype=jnp.float32)
    params = init_params(k_p, INPUT_DIM, HIDDEN, FF_DIM, LAYERS, NUM_CLASSES)

    out = jax.block_until_ready(transformer_classifier(x, params, HEADS))
    assert out.shape == (B, NUM_CLASSES), out.shape

    ref = jax.block_until_ready(reference_forward(x, params, HEADS))
    # Kernel uses bf16 matmul operands (f32 accumulation) vs. the f32 reference,
    # so allow a few-percent relative / ~1e-2 absolute tolerance on the tiny logits.
    assert jnp.allclose(out, ref, rtol=5e-2, atol=2e-2), (out, ref)

    print("KERNEL_OK")
</pallas_src>

<mosaic_0001>
module attributes {stable_mosaic.version = 11 : i64} {
  func.func @_fused_forward_kernel(%arg0: i32, %arg1: memref<1x8x16xf32, #tpu.memory_space<vmem>>, %arg2: memref<16x32xf32, #tpu.memory_space<vmem>>, %arg3: memref<1x32xf32, #tpu.memory_space<vmem>>, %arg4: memref<2x32x32xf32, #tpu.memory_space<vmem>>, %arg5: memref<2x1x32xf32, #tpu.memory_space<vmem>>, %arg6: memref<2x32x32xf32, #tpu.memory_space<vmem>>, %arg7: memref<2x1x32xf32, #tpu.memory_space<vmem>>, %arg8: memref<2x32x32xf32, #tpu.memory_space<vmem>>, %arg9: memref<2x1x32xf32, #tpu.memory_space<vmem>>, %arg10: memref<2x32x32xf32, #tpu.memory_space<vmem>>, %arg11: memref<2x1x32xf32, #tpu.memory_space<vmem>>, %arg12: memref<2x1x32xf32, #tpu.memory_space<vmem>>, %arg13: memref<2x1x32xf32, #tpu.memory_space<vmem>>, %arg14: memref<2x32x64xf32, #tpu.memory_space<vmem>>, %arg15: memref<2x1x64xf32, #tpu.memory_space<vmem>>, %arg16: memref<2x64x32xf32, #tpu.memory_space<vmem>>, %arg17: memref<2x1x32xf32, #tpu.memory_space<vmem>>, %arg18: memref<2x1x32xf32, #tpu.memory_space<vmem>>, %arg19: memref<2x1x32xf32, #tpu.memory_space<vmem>>, %arg20: memref<32x16xf32, #tpu.memory_space<vmem>>, %arg21: memref<1x16xf32, #tpu.memory_space<vmem>>, %arg22: memref<16x5xf32, #tpu.memory_space<vmem>>, %arg23: memref<1x5xf32, #tpu.memory_space<vmem>>, %arg24: memref<1x1x5xf32, #tpu.memory_space<vmem>>) attributes {dimension_semantics = [#tpu.dimension_semantics<parallel>], iteration_bounds = array<i64: 2>, scalar_prefetch = 0 : i64, scratch_operands = 0 : i64, tpu.core_type = #tpu.core_type<tc>, window_params = [{transform_indices = @transform_0, window_bounds = array<i64: 1, 8, 16>}, {pipeline_mode = #tpu.pipeline_mode<synchronous>, transform_indices = @transform_1, window_bounds = array<i64: 16, 32>}, {pipeline_mode = #tpu.pipeline_mode<synchronous>, transform_indices = @transform_2, window_bounds = array<i64: 1, 32>}, {pipeline_mode = #tpu.pipeline_mode<synchronous>, transform_indices = @transform_3, window_bounds = array<i64: 2, 32, 32>}, {pipeline_mode = #tpu.pipeline_mode<synchronous>, transform_indices = @transform_4, window_bounds = array<i64: 2, 1, 32>}, {pipeline_mode = #tpu.pipeline_mode<synchronous>, transform_indices = @transform_5, window_bounds = array<i64: 2, 32, 32>}, {pipeline_mode = #tpu.pipeline_mode<synchronous>, transform_indices = @transform_6, window_bounds = array<i64: 2, 1, 32>}, {pipeline_mode = #tpu.pipeline_mode<synchronous>, transform_indices = @transform_7, window_bounds = array<i64: 2, 32, 32>}, {pipeline_mode = #tpu.pipeline_mode<synchronous>, transform_indices = @transform_8, window_bounds = array<i64: 2, 1, 32>}, {pipeline_mode = #tpu.pipeline_mode<synchronous>, transform_indices = @transform_9, window_bounds = array<i64: 2, 32, 32>}, {pipeline_mode = #tpu.pipeline_mode<synchronous>, transform_indices = @transform_10, window_bounds = array<i64: 2, 1, 32>}, {pipeline_mode = #tpu.pipeline_mode<synchronous>, transform_indices = @transform_11, window_bounds = array<i64: 2, 1, 32>}, {pipeline_mode = #tpu.pipeline_mode<synchronous>, transform_indices = @transform_12, window_bounds = array<i64: 2, 1, 32>}, {pipeline_mode = #tpu.pipeline_mode<synchronous>, transform_indices = @transform_13, window_bounds = array<i64: 2, 32, 64>}, {pipeline_mode = #tpu.pipeline_mode<synchronous>, transform_indices = @transform_14, window_bounds = array<i64: 2, 1, 64>}, {pipeline_mode = #tpu.pipeline_mode<synchronous>, transform_indices = @transform_15, window_bounds = array<i64: 2, 64, 32>}, {pipeline_mode = #tpu.pipeline_mode<synchronous>, transform_indices = @transform_16, window_bounds = array<i64: 2, 1, 32>}, {pipeline_mode = #tpu.pipeline_mode<synchronous>, transform_indices = @transform_17, window_bounds = array<i64: 2, 1, 32>}, {pipeline_mode = #tpu.pipeline_mode<synchronous>, transform_indices = @transform_18, window_bounds = array<i64: 2, 1, 32>}, {pipeline_mode = #tpu.pipeline_mode<synchronous>, transform_indices = @transform_19, window_bounds = array<i64: 32, 16>}, {pipeline_mode = #tpu.pipeline_mode<synchronous>, transform_indices = @transform_20, window_bounds = array<i64: 1, 16>}, {pipeline_mode = #tpu.pipeline_mode<synchronous>, transform_indices = @transform_21, window_bounds = array<i64: 16, 5>}, {pipeline_mode = #tpu.pipeline_mode<synchronous>, transform_indices = @transform_22, window_bounds = array<i64: 1, 5>}, {transform_indices = @transform_23, window_bounds = array<i64: 1, 1, 5>}]} {
    %c0 = arith.constant 0 : index
    %c0_0 = arith.constant 0 : index
    %c0_1 = arith.constant 0 : index
    %0 = vector.load %arg1[%c0, %c0_0, %c0_1] : memref<1x8x16xf32, #tpu.memory_space<vmem>>, vector<1x8x16xf32>
    %1 = vector.shape_cast %0 : vector<1x8x16xf32> to vector<8x16xf32>
    %c0_2 = arith.constant 0 : index
    %c0_3 = arith.constant 0 : index
    %2 = vector.load %arg2[%c0_2, %c0_3] : memref<16x32xf32, #tpu.memory_space<vmem>>, vector<16x32xf32>
    %3 = arith.truncf %1 : vector<8x16xf32> to vector<8x16xbf16>
    %4 = arith.truncf %2 : vector<16x32xf32> to vector<16x32xbf16>
    %cst = arith.constant dense<0.000000e+00> : vector<8x32xf32>
    %5 = tpu.matmul %3, %4, %cst {dimension_numbers = #tpu.dot_dimension_numbers<[1], [0], [0], [1], [0, 0, 1, 1], [], []>} : vector<8x16xbf16>, vector<16x32xbf16>, vector<8x32xf32> -> vector<8x32xf32>
    %c0_4 = arith.constant 0 : index
    %c0_5 = arith.constant 0 : index
    %6 = vector.load %arg3[%c0_4, %c0_5] : memref<1x32xf32, #tpu.memory_space<vmem>>, vector<1x32xf32>
    %7 = vector.broadcast %6 : vector<1x32xf32> to vector<8x32xf32>
    %8 = arith.addf %5, %7 : vector<8x32xf32>
    %cst_6 = arith.constant 8.000000e+00 : f32
    %9 = math.sqrt %cst_6 : f32
    %cst_7 = arith.constant 1.000000e+00 : f32
    %10 = arith.divf %cst_7, %9 : f32
    %c0_8 = arith.constant 0 : index
    %c0_9 = arith.constant 0 : index
    %c0_10 = arith.constant 0 : index
    %11 = vector.load %arg4[%c0_8, %c0_9, %c0_10] : memref<2x32x32xf32, #tpu.memory_space<vmem>>, vector<1x32x32xf32>
    %12 = vector.shape_cast %11 : vector<1x32x32xf32> to vector<32x32xf32>
    %13 = arith.truncf %8 : vector<8x32xf32> to vector<8x32xbf16>
    %14 = arith.truncf %12 : vector<32x32xf32> to vector<32x32xbf16>
    %cst_11 = arith.constant dense<0.000000e+00> : vector<8x32xf32>
    %15 = tpu.matmul %13, %14, %cst_11 {dimension_numbers = #tpu.dot_dimension_numbers<[1], [0], [0], [1], [0, 0, 1, 1], [], []>} : vector<8x32xbf16>, vector<32x32xbf16>, vector<8x32xf32> -> vector<8x32xf32>
    %c0_12 = arith.constant 0 : index
    %c0_13 = arith.constant 0 : index
    %c0_14 = arith.constant 0 : index
    %16 = vector.load %arg5[%c0_12, %c0_13, %c0_14] : memref<2x1x32xf32, #tpu.memory_space<vmem>>, vector<1x1x32xf32>
    %17 = vector.shape_cast %16 : vector<1x1x32xf32> to vector<1x32xf32>
    %18 = vector.broadcast %17 : vector<1x32xf32> to vector<8x32xf32>
    %19 = arith.addf %15, %18 : vector<8x32xf32>
    %20 = vector.broadcast %10 : f32 to vector<8x32xf32>
    %21 = arith.mulf %19, %20 : vector<8x32xf32>
    %c0_15 = arith.constant 0 : index
    %c0_16 = arith.constant 0 : index
    %c0_17 = arith.constant 0 : index
    %22 = vector.load %arg6[%c0_15, %c0_16, %c0_17] : memref<2x32x32xf32, #tpu.memory_space<vmem>>, vector<1x32x32xf32>
    %23 = vector.shape_cast %22 : vector<1x32x32xf32> to vector<32x32xf32>
    %24 = arith.truncf %8 : vector<8x32xf32> to vector<8x32xbf16>
    %25 = arith.truncf %23 : vector<32x32xf32> to vector<32x32xbf16>
    %cst_18 = arith.constant dense<0.000000e+00> : vector<8x32xf32>
    %26 = tpu.matmul %24, %25, %cst_18 {dimension_numbers = #tpu.dot_dimension_numbers<[1], [0], [0], [1], [0, 0, 1, 1], [], []>} : vector<8x32xbf16>, vector<32x32xbf16>, vector<8x32xf32> -> vector<8x32xf32>
    %c0_19 = arith.constant 0 : index
    %c0_20 = arith.constant 0 : index
    %c0_21 = arith.constant 0 : index
    %27 = vector.load %arg7[%c0_19, %c0_20, %c0_21] : memref<2x1x32xf32, #tpu.memory_space<vmem>>, vector<1x1x32xf32>
    %28 = vector.shape_cast %27 : vector<1x1x32xf32> to vector<1x32xf32>
    %29 = vector.broadcast %28 : vector<1x32xf32> to vector<8x32xf32>
    %30 = arith.addf %26, %29 : vector<8x32xf32>
    %c0_22 = arith.constant 0 : index
    %c0_23 = arith.constant 0 : index
    %c0_24 = arith.constant 0 : index
    %31 = vector.load %arg8[%c0_22, %c0_23, %c0_24] : memref<2x32x32xf32, #tpu.memory_space<vmem>>, vector<1x32x32xf32>
    %32 = vector.shape_cast %31 : vector<1x32x32xf32> to vector<32x32xf32>
    %33 = arith.truncf %8 : vector<8x32xf32> to vector<8x32xbf16>
    %34 = arith.truncf %32 : vector<32x32xf32> to vector<32x32xbf16>
    %cst_25 = arith.constant dense<0.000000e+00> : vector<8x32xf32>
    %35 = tpu.matmul %33, %34, %cst_25 {dimension_numbers = #tpu.dot_dimension_numbers<[1], [0], [0], [1], [0, 0, 1, 1], [], []>} : vector<8x32xbf16>, vector<32x32xbf16>, vector<8x32xf32> -> vector<8x32xf32>
    %c0_26 = arith.constant 0 : index
    %c0_27 = arith.constant 0 : index
    %c0_28 = arith.constant 0 : index
    %36 = vector.load %arg9[%c0_26, %c0_27, %c0_28] : memref<2x1x32xf32, #tpu.memory_space<vmem>>, vector<1x1x32xf32>
    %37 = vector.shape_cast %36 : vector<1x1x32xf32> to vector<1x32xf32>
    %38 = vector.broadcast %37 : vector<1x32xf32> to vector<8x32xf32>
    %39 = arith.addf %35, %38 : vector<8x32xf32>
    %40 = vector.shape_cast %21 : vector<8x32xf32> to vector<8x4x8xf32>
    %41 = tpu.transpose %40, [1, 0, 2] : vector<8x4x8xf32> -> vector<4x8x8xf32>
    %42 = arith.truncf %41 : vector<4x8x8xf32> to vector<4x8x8xbf16>
    %43 = vector.shape_cast %30 : vector<8x32xf32> to vector<8x4x8xf32>
    %44 = tpu.transpose %43, [1, 0, 2] : vector<8x4x8xf32> -> vector<4x8x8xf32>
    %45 = arith.truncf %44 : vector<4x8x8xf32> to vector<4x8x8xbf16>
    %46 = vector.shape_cast %39 : vector<8x32xf32> to vector<8x4x8xf32>
    %47 = tpu.transpose %46, [1, 0, 2] : vector<8x4x8xf32> -> vector<4x8x8xf32>
    "tpu.trace_start"() <{level = 10 : i32, message = "hqd,hkd->hqk"}> : () -> ()
    %cst_29 = arith.constant dense<0.000000e+00> : vector<4x8x8xf32>
    %48 = tpu.matmul %42, %45, %cst_29 {dimension_numbers = #tpu.dot_dimension_numbers<[2], [2], [1], [1], [0, 0, 0, 1, 1, 1], [0], [0]>} : vector<4x8x8xbf16>, vector<4x8x8xbf16>, vector<4x8x8xf32> -> vector<4x8x8xf32>
    "tpu.trace_stop"() : () -> ()
    %cst_30 = arith.constant dense<0xFF800000> : vector<4x8xf32>
    %49 = vector.multi_reduction <maximumf>, %48, %cst_30 [2] : vector<4x8x8xf32> to vector<4x8xf32>
    %50 = vector.shape_cast %49 : vector<4x8xf32> to vector<4x8x1xf32>
    %51 = vector.broadcast %50 : vector<4x8x1xf32> to vector<4x8x8xf32>
    %52 = arith.subf %48, %51 : vector<4x8x8xf32>
    %53 = math.exp %52 : vector<4x8x8xf32>
    %cst_31 = arith.constant dense<0.000000e+00> : vector<4x8xf32>
    %54 = vector.multi_reduction <add>, %53, %cst_31 [2] : vector<4x8x8xf32> to vector<4x8xf32>
    %55 = vector.shape_cast %54 : vector<4x8xf32> to vector<4x8x1xf32>
    %56 = vector.broadcast %55 : vector<4x8x1xf32> to vector<4x8x8xf32>
    %57 = arith.divf %53, %56 : vector<4x8x8xf32>
    %58 = arith.truncf %57 : vector<4x8x8xf32> to vector<4x8x8xbf16>
    %59 = arith.truncf %47 : vector<4x8x8xf32> to vector<4x8x8xbf16>
    "tpu.trace_start"() <{level = 10 : i32, message = "hqk,hkd->hqd"}> : () -> ()
    %cst_32 = arith.constant dense<0.000000e+00> : vector<4x8x8xf32>
    %60 = tpu.matmul %58, %59, %cst_32 {dimension_numbers = #tpu.dot_dimension_numbers<[2], [1], [1], [2], [0, 0, 0, 1, 1, 2], [0], [0]>} : vector<4x8x8xbf16>, vector<4x8x8xbf16>, vector<4x8x8xf32> -> vector<4x8x8xf32>
    "tpu.trace_stop"() : () -> ()
    %61 = tpu.transpose %60, [1, 0, 2] : vector<4x8x8xf32> -> vector<8x4x8xf32>
    %62 = vector.shape_cast %61 : vector<8x4x8xf32> to vector<8x32xf32>
    %c0_33 = arith.constant 0 : index
    %c0_34 = arith.constant 0 : index
    %c0_35 = arith.constant 0 : index
    %63 = vector.load %arg10[%c0_33, %c0_34, %c0_35] : memref<2x32x32xf32, #tpu.memory_space<vmem>>, vector<1x32x32xf32>
    %64 = vector.shape_cast %63 : vector<1x32x32xf32> to vector<32x32xf32>
    %65 = arith.truncf %62 : vector<8x32xf32> to vector<8x32xbf16>
    %66 = arith.truncf %64 : vector<32x32xf32> to vector<32x32xbf16>
    %cst_36 = arith.constant dense<0.000000e+00> : vector<8x32xf32>
    %67 = tpu.matmul %65, %66, %cst_36 {dimension_numbers = #tpu.dot_dimension_numbers<[1], [0], [0], [1], [0, 0, 1, 1], [], []>} : vector<8x32xbf16>, vector<32x32xbf16>, vector<8x32xf32> -> vector<8x32xf32>
    %c0_37 = arith.constant 0 : index
    %c0_38 = arith.constant 0 : index
    %c0_39 = arith.constant 0 : index
    %68 = vector.load %arg11[%c0_37, %c0_38, %c0_39] : memref<2x1x32xf32, #tpu.memory_space<vmem>>, vector<1x1x32xf32>
    %69 = vector.shape_cast %68 : vector<1x1x32xf32> to vector<1x32xf32>
    %70 = vector.broadcast %69 : vector<1x32xf32> to vector<8x32xf32>
    %71 = arith.addf %67, %70 : vector<8x32xf32>
    %72 = arith.addf %8, %71 : vector<8x32xf32>
    %c0_40 = arith.constant 0 : index
    %c0_41 = arith.constant 0 : index
    %c0_42 = arith.constant 0 : index
    %73 = vector.load %arg12[%c0_40, %c0_41, %c0_42] : memref<2x1x32xf32, #tpu.memory_space<vmem>>, vector<1x1x32xf32>
    %74 = vector.shape_cast %73 : vector<1x1x32xf32> to vector<1x32xf32>
    %c0_43 = arith.constant 0 : index
    %c0_44 = arith.constant 0 : index
    %c0_45 = arith.constant 0 : index
    %75 = vector.load %arg13[%c0_43, %c0_44, %c0_45] : memref<2x1x32xf32, #tpu.memory_space<vmem>>, vector<1x1x32xf32>
    %76 = vector.shape_cast %75 : vector<1x1x32xf32> to vector<1x32xf32>
    %cst_46 = arith.constant dense<0.000000e+00> : vector<8xf32>
    %77 = vector.multi_reduction <add>, %72, %cst_46 [1] : vector<8x32xf32> to vector<8xf32>
    %78 = vector.shape_cast %77 : vector<8xf32> to vector<8x1xf32>
    %cst_47 = arith.constant 3.200000e+01 : f32
    %79 = vector.broadcast %cst_47 : f32 to vector<8x1xf32>
    %80 = arith.divf %78, %79 : vector<8x1xf32>
    %81 = vector.broadcast %80 : vector<8x1xf32> to vector<8x32xf32>
    %82 = arith.subf %72, %81 : vector<8x32xf32>
    %83 = arith.mulf %82, %82 : vector<8x32xf32>
    %cst_48 = arith.constant dense<0.000000e+00> : vector<8xf32>
    %84 = vector.multi_reduction <add>, %83, %cst_48 [1] : vector<8x32xf32> to vector<8xf32>
    %85 = vector.shape_cast %84 : vector<8xf32> to vector<8x1xf32>
    %cst_49 = arith.constant 3.200000e+01 : f32
    %86 = vector.broadcast %cst_49 : f32 to vector<8x1xf32>
    %87 = arith.divf %85, %86 : vector<8x1xf32>
    %88 = vector.broadcast %80 : vector<8x1xf32> to vector<8x32xf32>
    %89 = arith.subf %72, %88 : vector<8x32xf32>
    %cst_50 = arith.constant 9.99999974E-6 : f32
    %90 = vector.broadcast %cst_50 : f32 to vector<8x1xf32>
    %91 = arith.addf %87, %90 : vector<8x1xf32>
    %92 = math.rsqrt %91 : vector<8x1xf32>
    %93 = vector.broadcast %92 : vector<8x1xf32> to vector<8x32xf32>
    %94 = arith.mulf %89, %93 : vector<8x32xf32>
    %95 = vector.broadcast %74 : vector<1x32xf32> to vector<8x32xf32>
    %96 = arith.mulf %94, %95 : vector<8x32xf32>
    %97 = vector.broadcast %76 : vector<1x32xf32> to vector<8x32xf32>
    %98 = arith.addf %96, %97 : vector<8x32xf32>
    %c0_51 = arith.constant 0 : index
    %c0_52 = arith.constant 0 : index
    %c0_53 = arith.constant 0 : index
    %99 = vector.load %arg14[%c0_51, %c0_52, %c0_53] : memref<2x32x64xf32, #tpu.memory_space<vmem>>, vector<1x32x64xf32>
    %100 = vector.shape_cast %99 : vector<1x32x64xf32> to vector<32x64xf32>
    %101 = arith.truncf %98 : vector<8x32xf32> to vector<8x32xbf16>
    %102 = arith.truncf %100 : vector<32x64xf32> to vector<32x64xbf16>
    %cst_54 = arith.constant dense<0.000000e+00> : vector<8x64xf32>
    %103 = tpu.matmul %101, %102, %cst_54 {dimension_numbers = #tpu.dot_dimension_numbers<[1], [0], [0], [1], [0, 0, 1, 1], [], []>} : vector<8x32xbf16>, vector<32x64xbf16>, vector<8x64xf32> -> vector<8x64xf32>
    %c0_55 = arith.constant 0 : index
    %c0_56 = arith.constant 0 : index
    %c0_57 = arith.constant 0 : index
    %104 = vector.load %arg15[%c0_55, %c0_56, %c0_57] : memref<2x1x64xf32, #tpu.memory_space<vmem>>, vector<1x1x64xf32>
    %105 = vector.shape_cast %104 : vector<1x1x64xf32> to vector<1x64xf32>
    %106 = vector.broadcast %105 : vector<1x64xf32> to vector<8x64xf32>
    %107 = arith.addf %103, %106 : vector<8x64xf32>
    %cst_58 = arith.constant 0.000000e+00 : f32
    %108 = vector.broadcast %cst_58 : f32 to vector<8x64xf32>
    %109 = arith.maximumf %107, %108 : vector<8x64xf32>
    %c0_59 = arith.constant 0 : index
    %c0_60 = arith.constant 0 : index
    %c0_61 = arith.constant 0 : index
    %110 = vector.load %arg16[%c0_59, %c0_60, %c0_61] : memref<2x64x32xf32, #tpu.memory_space<vmem>>, vector<1x64x32xf32>
    %111 = vector.shape_cast %110 : vector<1x64x32xf32> to vector<64x32xf32>
    %112 = arith.truncf %109 : vector<8x64xf32> to vector<8x64xbf16>
    %113 = arith.truncf %111 : vector<64x32xf32> to vector<64x32xbf16>
    %cst_62 = arith.constant dense<0.000000e+00> : vector<8x32xf32>
    %114 = tpu.matmul %112, %113, %cst_62 {dimension_numbers = #tpu.dot_dimension_numbers<[1], [0], [0], [1], [0, 0, 1, 1], [], []>} : vector<8x64xbf16>, vector<64x32xbf16>, vector<8x32xf32> -> vector<8x32xf32>
    %c0_63 = arith.constant 0 : index
    %c0_64 = arith.constant 0 : index
    %c0_65 = arith.constant 0 : index
    %115 = vector.load %arg17[%c0_63, %c0_64, %c0_65] : memref<2x1x32xf32, #tpu.memory_space<vmem>>, vector<1x1x32xf32>
    %116 = vector.shape_cast %115 : vector<1x1x32xf32> to vector<1x32xf32>
    %117 = vector.broadcast %116 : vector<1x32xf32> to vector<8x32xf32>
    %118 = arith.addf %114, %117 : vector<8x32xf32>
    %119 = arith.addf %98, %118 : vector<8x32xf32>
    %c0_66 = arith.constant 0 : index
    %c0_67 = arith.constant 0 : index
    %c0_68 = arith.constant 0 : index
    %120 = vector.load %arg18[%c0_66, %c0_67, %c0_68] : memref<2x1x32xf32, #tpu.memory_space<vmem>>, vector<1x1x32xf32>
    %121 = vector.shape_cast %120 : vector<1x1x32xf32> to vector<1x32xf32>
    %c0_69 = arith.constant 0 : index
    %c0_70 = arith.constant 0 : index
    %c0_71 = arith.constant 0 : index
    %122 = vector.load %arg19[%c0_69, %c0_70, %c0_71] : memref<2x1x32xf32, #tpu.memory_space<vmem>>, vector<1x1x32xf32>
    %123 = vector.shape_cast %122 : vector<1x1x32xf32> to vector<1x32xf32>
    %cst_72 = arith.constant dense<0.000000e+00> : vector<8xf32>
    %124 = vector.multi_reduction <add>, %119, %cst_72 [1] : vector<8x32xf32> to vector<8xf32>
    %125 = vector.shape_cast %124 : vector<8xf32> to vector<8x1xf32>
    %cst_73 = arith.constant 3.200000e+01 : f32
    %126 = vector.broadcast %cst_73 : f32 to vector<8x1xf32>
    %127 = arith.divf %125, %126 : vector<8x1xf32>
    %128 = vector.broadcast %127 : vector<8x1xf32> to vector<8x32xf32>
    %129 = arith.subf %119, %128 : vector<8x32xf32>
    %130 = arith.mulf %129, %129 : vector<8x32xf32>
    %cst_74 = arith.constant dense<0.000000e+00> : vector<8xf32>
    %131 = vector.multi_reduction <add>, %130, %cst_74 [1] : vector<8x32xf32> to vector<8xf32>
    %132 = vector.shape_cast %131 : vector<8xf32> to vector<8x1xf32>
    %cst_75 = arith.constant 3.200000e+01 : f32
    %133 = vector.broadcast %cst_75 : f32 to vector<8x1xf32>
    %134 = arith.divf %132, %133 : vector<8x1xf32>
    %135 = vector.broadcast %127 : vector<8x1xf32> to vector<8x32xf32>
    %136 = arith.subf %119, %135 : vector<8x32xf32>
    %cst_76 = arith.constant 9.99999974E-6 : f32
    %137 = vector.broadcast %cst_76 : f32 to vector<8x1xf32>
    %138 = arith.addf %134, %137 : vector<8x1xf32>
    %139 = math.rsqrt %138 : vector<8x1xf32>
    %140 = vector.broadcast %139 : vector<8x1xf32> to vector<8x32xf32>
    %141 = arith.mulf %136, %140 : vector<8x32xf32>
    %142 = vector.broadcast %121 : vector<1x32xf32> to vector<8x32xf32>
    %143 = arith.mulf %141, %142 : vector<8x32xf32>
    %144 = vector.broadcast %123 : vector<1x32xf32> to vector<8x32xf32>
    %145 = arith.addf %143, %144 : vector<8x32xf32>
    %c1 = arith.constant 1 : index
    %c0_77 = arith.constant 0 : index
    %c0_78 = arith.constant 0 : index
    %146 = vector.load %arg4[%c1, %c0_77, %c0_78] : memref<2x32x32xf32, #tpu.memory_space<vmem>>, vector<1x32x32xf32>
    %147 = vector.shape_cast %146 : vector<1x32x32xf32> to vector<32x32xf32>
    %148 = arith.truncf %145 : vector<8x32xf32> to vector<8x32xbf16>
    %149 = arith.truncf %147 : vector<32x32xf32> to vector<32x32xbf16>
    %cst_79 = arith.constant dense<0.000000e+00> : vector<8x32xf32>
    %150 = tpu.matmul %148, %149, %cst_79 {dimension_numbers = #tpu.dot_dimension_numbers<[1], [0], [0], [1], [0, 0, 1, 1], [], []>} : vector<8x32xbf16>, vector<32x32xbf16>, vector<8x32xf32> -> vector<8x32xf32>
    %c1_80 = arith.constant 1 : index
    %c0_81 = arith.constant 0 : index
    %c0_82 = arith.constant 0 : index
    %151 = vector.load %arg5[%c1_80, %c0_81, %c0_82] : memref<2x1x32xf32, #tpu.memory_space<vmem>>, vector<1x1x32xf32>
    %152 = vector.shape_cast %151 : vector<1x1x32xf32> to vector<1x32xf32>
    %153 = vector.broadcast %152 : vector<1x32xf32> to vector<8x32xf32>
    %154 = arith.addf %150, %153 : vector<8x32xf32>
    %155 = vector.broadcast %10 : f32 to vector<8x32xf32>
    %156 = arith.mulf %154, %155 : vector<8x32xf32>
    %c1_83 = arith.constant 1 : index
    %c0_84 = arith.constant 0 : index
    %c0_85 = arith.constant 0 : index
    %157 = vector.load %arg6[%c1_83, %c0_84, %c0_85] : memref<2x32x32xf32, #tpu.memory_space<vmem>>, vector<1x32x32xf32>
    %158 = vector.shape_cast %157 : vector<1x32x32xf32> to vector<32x32xf32>
    %159 = arith.truncf %145 : vector<8x32xf32> to vector<8x32xbf16>
    %160 = arith.truncf %158 : vector<32x32xf32> to vector<32x32xbf16>
    %cst_86 = arith.constant dense<0.000000e+00> : vector<8x32xf32>
    %161 = tpu.matmul %159, %160, %cst_86 {dimension_numbers = #tpu.dot_dimension_numbers<[1], [0], [0], [1], [0, 0, 1, 1], [], []>} : vector<8x32xbf16>, vector<32x32xbf16>, vector<8x32xf32> -> vector<8x32xf32>
    %c1_87 = arith.constant 1 : index
    %c0_88 = arith.constant 0 : index
    %c0_89 = arith.constant 0 : index
    %162 = vector.load %arg7[%c1_87, %c0_88, %c0_89] : memref<2x1x32xf32, #tpu.memory_space<vmem>>, vector<1x1x32xf32>
    %163 = vector.shape_cast %162 : vector<1x1x32xf32> to vector<1x32xf32>
    %164 = vector.broadcast %163 : vector<1x32xf32> to vector<8x32xf32>
    %165 = arith.addf %161, %164 : vector<8x32xf32>
    %c1_90 = arith.constant 1 : index
    %c0_91 = arith.constant 0 : index
    %c0_92 = arith.constant 0 : index
    %166 = vector.load %arg8[%c1_90, %c0_91, %c0_92] : memref<2x32x32xf32, #tpu.memory_space<vmem>>, vector<1x32x32xf32>
    %167 = vector.shape_cast %166 : vector<1x32x32xf32> to vector<32x32xf32>
    %168 = arith.truncf %145 : vector<8x32xf32> to vector<8x32xbf16>
    %169 = arith.truncf %167 : vector<32x32xf32> to vector<32x32xbf16>
    %cst_93 = arith.constant dense<0.000000e+00> : vector<8x32xf32>
    %170 = tpu.matmul %168, %169, %cst_93 {dimension_numbers = #tpu.dot_dimension_numbers<[1], [0], [0], [1], [0, 0, 1, 1], [], []>} : vector<8x32xbf16>, vector<32x32xbf16>, vector<8x32xf32> -> vector<8x32xf32>
    %c1_94 = arith.constant 1 : index
    %c0_95 = arith.constant 0 : index
    %c0_96 = arith.constant 0 : index
    %171 = vector.load %arg9[%c1_94, %c0_95, %c0_96] : memref<2x1x32xf32, #tpu.memory_space<vmem>>, vector<1x1x32xf32>
    %172 = vector.shape_cast %171 : vector<1x1x32xf32> to vector<1x32xf32>
    %173 = vector.broadcast %172 : vector<1x32xf32> to vector<8x32xf32>
    %174 = arith.addf %170, %173 : vector<8x32xf32>
    %175 = vector.shape_cast %156 : vector<8x32xf32> to vector<8x4x8xf32>
    %176 = tpu.transpose %175, [1, 0, 2] : vector<8x4x8xf32> -> vector<4x8x8xf32>
    %177 = arith.truncf %176 : vector<4x8x8xf32> to vector<4x8x8xbf16>
    %178 = vector.shape_cast %165 : vector<8x32xf32> to vector<8x4x8xf32>
    %179 = tpu.transpose %178, [1, 0, 2] : vector<8x4x8xf32> -> vector<4x8x8xf32>
    %180 = arith.truncf %179 : vector<4x8x8xf32> to vector<4x8x8xbf16>
    %181 = vector.shape_cast %174 : vector<8x32xf32> to vector<8x4x8xf32>
    %182 = tpu.transpose %181, [1, 0, 2] : vector<8x4x8xf32> -> vector<4x8x8xf32>
    "tpu.trace_start"() <{level = 10 : i32, message = "hqd,hkd->hqk"}> : () -> ()
    %cst_97 = arith.constant dense<0.000000e+00> : vector<4x8x8xf32>
    %183 = tpu.matmul %177, %180, %cst_97 {dimension_numbers = #tpu.dot_dimension_numbers<[2], [2], [1], [1], [0, 0, 0, 1, 1, 1], [0], [0]>} : vector<4x8x8xbf16>, vector<4x8x8xbf16>, vector<4x8x8xf32> -> vector<4x8x8xf32>
    "tpu.trace_stop"() : () -> ()
    %cst_98 = arith.constant dense<0xFF800000> : vector<4x8xf32>
    %184 = vector.multi_reduction <maximumf>, %183, %cst_98 [2] : vector<4x8x8xf32> to vector<4x8xf32>
    %185 = vector.shape_cast %184 : vector<4x8xf32> to vector<4x8x1xf32>
    %186 = vector.broadcast %185 : vector<4x8x1xf32> to vector<4x8x8xf32>
    %187 = arith.subf %183, %186 : vector<4x8x8xf32>
    %188 = math.exp %187 : vector<4x8x8xf32>
    %cst_99 = arith.constant dense<0.000000e+00> : vector<4x8xf32>
    %189 = vector.multi_reduction <add>, %188, %cst_99 [2] : vector<4x8x8xf32> to vector<4x8xf32>
    %190 = vector.shape_cast %189 : vector<4x8xf32> to vector<4x8x1xf32>
    %191 = vector.broadcast %190 : vector<4x8x1xf32> to vector<4x8x8xf32>
    %192 = arith.divf %188, %191 : vector<4x8x8xf32>
    %193 = arith.truncf %192 : vector<4x8x8xf32> to vector<4x8x8xbf16>
    %194 = arith.truncf %182 : vector<4x8x8xf32> to vector<4x8x8xbf16>
    "tpu.trace_start"() <{level = 10 : i32, message = "hqk,hkd->hqd"}> : () -> ()
    %cst_100 = arith.constant dense<0.000000e+00> : vector<4x8x8xf32>
    %195 = tpu.matmul %193, %194, %cst_100 {dimension_numbers = #tpu.dot_dimension_numbers<[2], [1], [1], [2], [0, 0, 0, 1, 1, 2], [0], [0]>} : vector<4x8x8xbf16>, vector<4x8x8xbf16>, vector<4x8x8xf32> -> vector<4x8x8xf32>
    "tpu.trace_stop"() : () -> ()
    %196 = tpu.transpose %195, [1, 0, 2] : vector<4x8x8xf32> -> vector<8x4x8xf32>
    %197 = vector.shape_cast %196 : vector<8x4x8xf32> to vector<8x32xf32>
    %c1_101 = arith.constant 1 : index
    %c0_102 = arith.constant 0 : index
    %c0_103 = arith.constant 0 : index
    %198 = vector.load %arg10[%c1_101, %c0_102, %c0_103] : memref<2x32x32xf32, #tpu.memory_space<vmem>>, vector<1x32x32xf32>
    %199 = vector.shape_cast %198 : vector<1x32x32xf32> to vector<32x32xf32>
    %200 = arith.truncf %197 : vector<8x32xf32> to vector<8x32xbf16>
    %201 = arith.truncf %199 : vector<32x32xf32> to vector<32x32xbf16>
    %cst_104 = arith.constant dense<0.000000e+00> : vector<8x32xf32>
    %202 = tpu.matmul %200, %201, %cst_104 {dimension_numbers = #tpu.dot_dimension_numbers<[1], [0], [0], [1], [0, 0, 1, 1], [], []>} : vector<8x32xbf16>, vector<32x32xbf16>, vector<8x32xf32> -> vector<8x32xf32>
    %c1_105 = arith.constant 1 : index
    %c0_106 = arith.constant 0 : index
    %c0_107 = arith.constant 0 : index
    %203 = vector.load %arg11[%c1_105, %c0_106, %c0_107] : memref<2x1x32xf32, #tpu.memory_space<vmem>>, vector<1x1x32xf32>
    %204 = vector.shape_cast %203 : vector<1x1x32xf32> to vector<1x32xf32>
    %205 = vector.broadcast %204 : vector<1x32xf32> to vector<8x32xf32>
    %206 = arith.addf %202, %205 : vector<8x32xf32>
    %207 = arith.addf %145, %206 : vector<8x32xf32>
    %c1_108 = arith.constant 1 : index
    %c0_109 = arith.constant 0 : index
    %c0_110 = arith.constant 0 : index
    %208 = vector.load %arg12[%c1_108, %c0_109, %c0_110] : memref<2x1x32xf32, #tpu.memory_space<vmem>>, vector<1x1x32xf32>
    %209 = vector.shape_cast %208 : vector<1x1x32xf32> to vector<1x32xf32>
    %c1_111 = arith.constant 1 : index
    %c0_112 = arith.constant 0 : index
    %c0_113 = arith.constant 0 : index
    %210 = vector.load %arg13[%c1_111, %c0_112, %c0_113] : memref<2x1x32xf32, #tpu.memory_space<vmem>>, vector<1x1x32xf32>
    %211 = vector.shape_cast %210 : vector<1x1x32xf32> to vector<1x32xf32>
    %cst_114 = arith.constant dense<0.000000e+00> : vector<8xf32>
    %212 = vector.multi_reduction <add>, %207, %cst_114 [1] : vector<8x32xf32> to vector<8xf32>
    %213 = vector.shape_cast %212 : vector<8xf32> to vector<8x1xf32>
    %cst_115 = arith.constant 3.200000e+01 : f32
    %214 = vector.broadcast %cst_115 : f32 to vector<8x1xf32>
    %215 = arith.divf %213, %214 : vector<8x1xf32>
    %216 = vector.broadcast %215 : vector<8x1xf32> to vector<8x32xf32>
    %217 = arith.subf %207, %216 : vector<8x32xf32>
    %218 = arith.mulf %217, %217 : vector<8x32xf32>
    %cst_116 = arith.constant dense<0.000000e+00> : vector<8xf32>
    %219 = vector.multi_reduction <add>, %218, %cst_116 [1] : vector<8x32xf32> to vector<8xf32>
    %220 = vector.shape_cast %219 : vector<8xf32> to vector<8x1xf32>
    %cst_117 = arith.constant 3.200000e+01 : f32
    %221 = vector.broadcast %cst_117 : f32 to vector<8x1xf32>
    %222 = arith.divf %220, %221 : vector<8x1xf32>
    %223 = vector.broadcast %215 : vector<8x1xf32> to vector<8x32xf32>
    %224 = arith.subf %207, %223 : vector<8x32xf32>
    %cst_118 = arith.constant 9.99999974E-6 : f32
    %225 = vector.broadcast %cst_118 : f32 to vector<8x1xf32>
    %226 = arith.addf %222, %225 : vector<8x1xf32>
    %227 = math.rsqrt %226 : vector<8x1xf32>
    %228 = vector.broadcast %227 : vector<8x1xf32> to vector<8x32xf32>
    %229 = arith.mulf %224, %228 : vector<8x32xf32>
    %230 = vector.broadcast %209 : vector<1x32xf32> to vector<8x32xf32>
    %231 = arith.mulf %229, %230 : vector<8x32xf32>
    %232 = vector.broadcast %211 : vector<1x32xf32> to vector<8x32xf32>
    %233 = arith.addf %231, %232 : vector<8x32xf32>
    %c1_119 = arith.constant 1 : index
    %c0_120 = arith.constant 0 : index
    %c0_121 = arith.constant 0 : index
    %234 = vector.load %arg14[%c1_119, %c0_120, %c0_121] : memref<2x32x64xf32, #tpu.memory_space<vmem>>, vector<1x32x64xf32>
    %235 = vector.shape_cast %234 : vector<1x32x64xf32> to vector<32x64xf32>
    %236 = arith.truncf %233 : vector<8x32xf32> to vector<8x32xbf16>
    %237 = arith.truncf %235 : vector<32x64xf32> to vector<32x64xbf16>
    %cst_122 = arith.constant dense<0.000000e+00> : vector<8x64xf32>
    %238 = tpu.matmul %236, %237, %cst_122 {dimension_numbers = #tpu.dot_dimension_numbers<[1], [0], [0], [1], [0, 0, 1, 1], [], []>} : vector<8x32xbf16>, vector<32x64xbf16>, vector<8x64xf32> -> vector<8x64xf32>
    %c1_123 = arith.constant 1 : index
    %c0_124 = arith.constant 0 : index
    %c0_125 = arith.constant 0 : index
    %239 = vector.load %arg15[%c1_123, %c0_124, %c0_125] : memref<2x1x64xf32, #tpu.memory_space<vmem>>, vector<1x1x64xf32>
    %240 = vector.shape_cast %239 : vector<1x1x64xf32> to vector<1x64xf32>
    %241 = vector.broadcast %240 : vector<1x64xf32> to vector<8x64xf32>
    %242 = arith.addf %238, %241 : vector<8x64xf32>
    %cst_126 = arith.constant 0.000000e+00 : f32
    %243 = vector.broadcast %cst_126 : f32 to vector<8x64xf32>
    %244 = arith.maximumf %242, %243 : vector<8x64xf32>
    %c1_127 = arith.constant 1 : index
    %c0_128 = arith.constant 0 : index
    %c0_129 = arith.constant 0 : index
    %245 = vector.load %arg16[%c1_127, %c0_128, %c0_129] : memref<2x64x32xf32, #tpu.memory_space<vmem>>, vector<1x64x32xf32>
    %246 = vector.shape_cast %245 : vector<1x64x32xf32> to vector<64x32xf32>
    %247 = arith.truncf %244 : vector<8x64xf32> to vector<8x64xbf16>
    %248 = arith.truncf %246 : vector<64x32xf32> to vector<64x32xbf16>
    %cst_130 = arith.constant dense<0.000000e+00> : vector<8x32xf32>
    %249 = tpu.matmul %247, %248, %cst_130 {dimension_numbers = #tpu.dot_dimension_numbers<[1], [0], [0], [1], [0, 0, 1, 1], [], []>} : vector<8x64xbf16>, vector<64x32xbf16>, vector<8x32xf32> -> vector<8x32xf32>
    %c1_131 = arith.constant 1 : index
    %c0_132 = arith.constant 0 : index
    %c0_133 = arith.constant 0 : index
    %250 = vector.load %arg17[%c1_131, %c0_132, %c0_133] : memref<2x1x32xf32, #tpu.memory_space<vmem>>, vector<1x1x32xf32>
    %251 = vector.shape_cast %250 : vector<1x1x32xf32> to vector<1x32xf32>
    %252 = vector.broadcast %251 : vector<1x32xf32> to vector<8x32xf32>
    %253 = arith.addf %249, %252 : vector<8x32xf32>
    %254 = arith.addf %233, %253 : vector<8x32xf32>
    %c1_134 = arith.constant 1 : index
    %c0_135 = arith.constant 0 : index
    %c0_136 = arith.constant 0 : index
    %255 = vector.load %arg18[%c1_134, %c0_135, %c0_136] : memref<2x1x32xf32, #tpu.memory_space<vmem>>, vector<1x1x32xf32>
    %256 = vector.shape_cast %255 : vector<1x1x32xf32> to vector<1x32xf32>
    %c1_137 = arith.constant 1 : index
    %c0_138 = arith.constant 0 : index
    %c0_139 = arith.constant 0 : index
    %257 = vector.load %arg19[%c1_137, %c0_138, %c0_139] : memref<2x1x32xf32, #tpu.memory_space<vmem>>, vector<1x1x32xf32>
    %258 = vector.shape_cast %257 : vector<1x1x32xf32> to vector<1x32xf32>
    %cst_140 = arith.constant dense<0.000000e+00> : vector<8xf32>
    %259 = vector.multi_reduction <add>, %254, %cst_140 [1] : vector<8x32xf32> to vector<8xf32>
    %260 = vector.shape_cast %259 : vector<8xf32> to vector<8x1xf32>
    %cst_141 = arith.constant 3.200000e+01 : f32
    %261 = vector.broadcast %cst_141 : f32 to vector<8x1xf32>
    %262 = arith.divf %260, %261 : vector<8x1xf32>
    %263 = vector.broadcast %262 : vector<8x1xf32> to vector<8x32xf32>
    %264 = arith.subf %254, %263 : vector<8x32xf32>
    %265 = arith.mulf %264, %264 : vector<8x32xf32>
    %cst_142 = arith.constant dense<0.000000e+00> : vector<8xf32>
    %266 = vector.multi_reduction <add>, %265, %cst_142 [1] : vector<8x32xf32> to vector<8xf32>
    %267 = vector.shape_cast %266 : vector<8xf32> to vector<8x1xf32>
    %cst_143 = arith.constant 3.200000e+01 : f32
    %268 = vector.broadcast %cst_143 : f32 to vector<8x1xf32>
    %269 = arith.divf %267, %268 : vector<8x1xf32>
    %270 = vector.broadcast %262 : vector<8x1xf32> to vector<8x32xf32>
    %271 = arith.subf %254, %270 : vector<8x32xf32>
    %cst_144 = arith.constant 9.99999974E-6 : f32
    %272 = vector.broadcast %cst_144 : f32 to vector<8x1xf32>
    %273 = arith.addf %269, %272 : vector<8x1xf32>
    %274 = math.rsqrt %273 : vector<8x1xf32>
    %275 = vector.broadcast %274 : vector<8x1xf32> to vector<8x32xf32>
    %276 = arith.mulf %271, %275 : vector<8x32xf32>
    %277 = vector.broadcast %256 : vector<1x32xf32> to vector<8x32xf32>
    %278 = arith.mulf %276, %277 : vector<8x32xf32>
    %279 = vector.broadcast %258 : vector<1x32xf32> to vector<8x32xf32>
    %280 = arith.addf %278, %279 : vector<8x32xf32>
    %cst_145 = arith.constant dense<0.000000e+00> : vector<32xf32>
    %281 = vector.multi_reduction <add>, %280, %cst_145 [0] : vector<8x32xf32> to vector<32xf32>
    %282 = vector.shape_cast %281 : vector<32xf32> to vector<1x32xf32>
    %cst_146 = arith.constant 8.000000e+00 : f32
    %283 = vector.broadcast %cst_146 : f32 to vector<1x32xf32>
    %284 = arith.divf %282, %283 : vector<1x32xf32>
    %c0_147 = arith.constant 0 : index
    %c0_148 = arith.constant 0 : index
    %285 = vector.load %arg20[%c0_147, %c0_148] : memref<32x16xf32, #tpu.memory_space<vmem>>, vector<32x16xf32>
    %286 = arith.truncf %284 : vector<1x32xf32> to vector<1x32xbf16>
    %287 = arith.truncf %285 : vector<32x16xf32> to vector<32x16xbf16>
    %cst_149 = arith.constant dense<0.000000e+00> : vector<1x16xf32>
    %288 = tpu.matmul %286, %287, %cst_149 {dimension_numbers = #tpu.dot_dimension_numbers<[1], [0], [0], [1], [0, 0, 1, 1], [], []>} : vector<1x32xbf16>, vector<32x16xbf16>, vector<1x16xf32> -> vector<1x16xf32>
    %c0_150 = arith.constant 0 : index
    %c0_151 = arith.constant 0 : index
    %289 = vector.load %arg21[%c0_150, %c0_151] : memref<1x16xf32, #tpu.memory_space<vmem>>, vector<1x16xf32>
    %290 = arith.addf %288, %289 : vector<1x16xf32>
    %cst_152 = arith.constant 0.000000e+00 : f32
    %291 = vector.broadcast %cst_152 : f32 to vector<1x16xf32>
    %292 = arith.maximumf %290, %291 : vector<1x16xf32>
    %c0_153 = arith.constant 0 : index
    %c0_154 = arith.constant 0 : index
    %293 = vector.load %arg22[%c0_153, %c0_154] : memref<16x5xf32, #tpu.memory_space<vmem>>, vector<16x5xf32>
    %294 = arith.truncf %292 : vector<1x16xf32> to vector<1x16xbf16>
    %295 = arith.truncf %293 : vector<16x5xf32> to vector<16x5xbf16>
    %cst_155 = arith.constant dense<0.000000e+00> : vector<1x5xf32>
    %296 = tpu.matmul %294, %295, %cst_155 {dimension_numbers = #tpu.dot_dimension_numbers<[1], [0], [0], [1], [0, 0, 1, 1], [], []>} : vector<1x16xbf16>, vector<16x5xbf16>, vector<1x5xf32> -> vector<1x5xf32>
    %c0_156 = arith.constant 0 : index
    %c0_157 = arith.constant 0 : index
    %297 = vector.load %arg23[%c0_156, %c0_157] : memref<1x5xf32, #tpu.memory_space<vmem>>, vector<1x5xf32>
    %298 = arith.addf %296, %297 : vector<1x5xf32>
    %299 = vector.shape_cast %298 : vector<1x5xf32> to vector<1x1x5xf32>
    %c0_158 = arith.constant 0 : index
    %c0_159 = arith.constant 0 : index
    %c0_160 = arith.constant 0 : index
    %300 = vector.load %arg24[%c0_158, %c0_159, %c0_160] : memref<1x1x5xf32, #tpu.memory_space<vmem>>, vector<1x1x5xf32>
    tpu.vector_store %arg24[%c0_158, %c0_159, %c0_160], %299 {strides = array<i32>} : memref<1x1x5xf32, #tpu.memory_space<vmem>>, vector<1x1x5xf32>,
    return
  }
  func.func @transform_0(%arg0: i32) -> (i32, i32, i32) {
    %c0_i32 = arith.constant 0 : i32
    %c0_i32_0 = arith.constant 0 : i32
    %c0_i32_1 = arith.constant 0 : i32
    return %arg0, %c0_i32, %c0_i32_0 : i32, i32, i32
  }
  func.func @transform_1(%arg0: i32) -> (i32, i32) {
    %c0_i32 = arith.constant 0 : i32
    %c0_i32_0 = arith.constant 0 : i32
    %c0_i32_1 = arith.constant 0 : i32
    return %c0_i32, %c0_i32_0 : i32, i32
  }
  func.func @transform_2(%arg0: i32) -> (i32, i32) {
    %c0_i32 = arith.constant 0 : i32
    %c0_i32_0 = arith.constant 0 : i32
    %c0_i32_1 = arith.constant 0 : i32
    return %c0_i32, %c0_i32_0 : i32, i32
  }
  func.func @transform_3(%arg0: i32) -> (i32, i32, i32) {
    %c0_i32 = arith.constant 0 : i32
    %c0_i32_0 = arith.constant 0 : i32
    %c0_i32_1 = arith.constant 0 : i32
    %c0_i32_2 = arith.constant 0 : i32
    return %c0_i32, %c0_i32_0, %c0_i32_1 : i32, i32, i32
  }
  func.func @transform_4(%arg0: i32) -> (i32, i32, i32) {
    %c0_i32 = arith.constant 0 : i32
    %c0_i32_0 = arith.constant 0 : i32
    %c0_i32_1 = arith.constant 0 : i32
    %c0_i32_2 = arith.constant 0 : i32
    return %c0_i32, %c0_i32_0, %c0_i32_1 : i32, i32, i32
  }
  func.func @transform_5(%arg0: i32) -> (i32, i32, i32) {
    %c0_i32 = arith.constant 0 : i32
    %c0_i32_0 = arith.constant 0 : i32
    %c0_i32_1 = arith.constant 0 : i32
    %c0_i32_2 = arith.constant 0 : i32
    return %c0_i32, %c0_i32_0, %c0_i32_1 : i32, i32, i32
  }
  func.func @transform_6(%arg0: i32) -> (i32, i32, i32) {
    %c0_i32 = arith.constant 0 : i32
    %c0_i32_0 = arith.constant 0 : i32
    %c0_i32_1 = arith.constant 0 : i32
    %c0_i32_2 = arith.constant 0 : i32
    return %c0_i32, %c0_i32_0, %c0_i32_1 : i32, i32, i32
  }
  func.func @transform_7(%arg0: i32) -> (i32, i32, i32) {
    %c0_i32 = arith.constant 0 : i32
    %c0_i32_0 = arith.constant 0 : i32
    %c0_i32_1 = arith.constant 0 : i32
    %c0_i32_2 = arith.constant 0 : i32
    return %c0_i32, %c0_i32_0, %c0_i32_1 : i32, i32, i32
  }
  func.func @transform_8(%arg0: i32) -> (i32, i32, i32) {
    %c0_i32 = arith.constant 0 : i32
    %c0_i32_0 = arith.constant 0 : i32
    %c0_i32_1 = arith.constant 0 : i32
    %c0_i32_2 = arith.constant 0 : i32
    return %c0_i32, %c0_i32_0, %c0_i32_1 : i32, i32, i32
  }
  func.func @transform_9(%arg0: i32) -> (i32, i32, i32) {
    %c0_i32 = arith.constant 0 : i32
    %c0_i32_0 = arith.constant 0 : i32
    %c0_i32_1 = arith.constant 0 : i32
    %c0_i32_2 = arith.constant 0 : i32
    return %c0_i32, %c0_i32_0, %c0_i32_1 : i32, i32, i32
  }
  func.func @transform_10(%arg0: i32) -> (i32, i32, i32) {
    %c0_i32 = arith.constant 0 : i32
    %c0_i32_0 = arith.constant 0 : i32
    %c0_i32_1 = arith.constant 0 : i32
    %c0_i32_2 = arith.constant 0 : i32
    return %c0_i32, %c0_i32_0, %c0_i32_1 : i32, i32, i32
  }
  func.func @transform_11(%arg0: i32) -> (i32, i32, i32) {
    %c0_i32 = arith.constant 0 : i32
    %c0_i32_0 = arith.constant 0 : i32
    %c0_i32_1 = arith.constant 0 : i32
    %c0_i32_2 = arith.constant 0 : i32
    return %c0_i32, %c0_i32_0, %c0_i32_1 : i32, i32, i32
  }
  func.func @transform_12(%arg0: i32) -> (i32, i32, i32) {
    %c0_i32 = arith.constant 0 : i32
    %c0_i32_0 = arith.constant 0 : i32
    %c0_i32_1 = arith.constant 0 : i32
    %c0_i32_2 = arith.constant 0 : i32
    return %c0_i32, %c0_i32_0, %c0_i32_1 : i32, i32, i32
  }
  func.func @transform_13(%arg0: i32) -> (i32, i32, i32) {
    %c0_i32 = arith.constant 0 : i32
    %c0_i32_0 = arith.constant 0 : i32
    %c0_i32_1 = arith.constant 0 : i32
    %c0_i32_2 = arith.constant 0 : i32
    return %c0_i32, %c0_i32_0, %c0_i32_1 : i32, i32, i32
  }
  func.func @transform_14(%arg0: i32) -> (i32, i32, i32) {
    %c0_i32 = arith.constant 0 : i32
    %c0_i32_0 = arith.constant 0 : i32
    %c0_i32_1 = arith.constant 0 : i32
    %c0_i32_2 = arith.constant 0 : i32
    return %c0_i32, %c0_i32_0, %c0_i32_1 : i32, i32, i32
  }
  func.func @transform_15(%arg0: i32) -> (i32, i32, i32) {
    %c0_i32 = arith.constant 0 : i32
    %c0_i32_0 = arith.constant 0 : i32
    %c0_i32_1 = arith.constant 0 : i32
    %c0_i32_2 = arith.constant 0 : i32
    return %c0_i32, %c0_i32_0, %c0_i32_1 : i32, i32, i32
  }
  func.func @transform_16(%arg0: i32) -> (i32, i32, i32) {
    %c0_i32 = arith.constant 0 : i32
    %c0_i32_0 = arith.constant 0 : i32
    %c0_i32_1 = arith.constant 0 : i32
    %c0_i32_2 = arith.constant 0 : i32
    return %c0_i32, %c0_i32_0, %c0_i32_1 : i32, i32, i32
  }
  func.func @transform_17(%arg0: i32) -> (i32, i32, i32) {
    %c0_i32 = arith.constant 0 : i32
    %c0_i32_0 = arith.constant 0 : i32
    %c0_i32_1 = arith.constant 0 : i32
    %c0_i32_2 = arith.constant 0 : i32
    return %c0_i32, %c0_i32_0, %c0_i32_1 : i32, i32, i32
  }
  func.func @transform_18(%arg0: i32) -> (i32, i32, i32) {
    %c0_i32 = arith.constant 0 : i32
    %c0_i32_0 = arith.constant 0 : i32
    %c0_i32_1 = arith.constant 0 : i32
    %c0_i32_2 = arith.constant 0 : i32
    return %c0_i32, %c0_i32_0, %c0_i32_1 : i32, i32, i32
  }
  func.func @transform_19(%arg0: i32) -> (i32, i32) {
    %c0_i32 = arith.constant 0 : i32
    %c0_i32_0 = arith.constant 0 : i32
    %c0_i32_1 = arith.constant 0 : i32
    return %c0_i32, %c0_i32_0 : i32, i32
  }
  func.func @transform_20(%arg0: i32) -> (i32, i32) {
    %c0_i32 = arith.constant 0 : i32
    %c0_i32_0 = arith.constant 0 : i32
    %c0_i32_1 = arith.constant 0 : i32
    return %c0_i32, %c0_i32_0 : i32, i32
  }
  func.func @transform_21(%arg0: i32) -> (i32, i32) {
    %c0_i32 = arith.constant 0 : i32
    %c0_i32_0 = arith.constant 0 : i32
    %c0_i32_1 = arith.constant 0 : i32
    return %c0_i32, %c0_i32_0 : i32, i32
  }
  func.func @transform_22(%arg0: i32) -> (i32, i32) {
    %c0_i32 = arith.constant 0 : i32
    %c0_i32_0 = arith.constant 0 : i32
    %c0_i32_1 = arith.constant 0 : i32
    return %c0_i32, %c0_i32_0 : i32, i32
  }
  func.func @transform_23(%arg0: i32) -> (i32, i32, i32) {
    %c0_i32 = arith.constant 0 : i32
    %c0_i32_0 = arith.constant 0 : i32
    %c0_i32_1 = arith.constant 0 : i32
    return %arg0, %c0_i32, %c0_i32_0 : i32, i32, i32
  }
}

</mosaic_0001>

<llo_original>
// kernel: tpu_custom_call.1
$region0: #{tpu_custom_call.1}
  #allocation0 [shape = 'u32[]', space=smem, size = 0x4, offset = 0x4, fixed_abs, tag = 'smem constant byte address 0x4 - core index']
  #allocation1 [shape = 'u32[72,128]{1,0:T(1,128)}', space=vmem, size = 0x9000, scoped, tag = 'internal scratch']
  %s0 = inlined_call_operand.hbm [shape: f32[2,8,16], index: 0, kind: input, shape index: {}]
  %s1 = inlined_call_operand.hbm [shape: f32[16,32], index: 1, kind: input, shape index: {}]
  %s2 = inlined_call_operand.hbm [shape: f32[1,32], index: 2, kind: input, shape index: {}]
  %s3 = inlined_call_operand.vmem [shape: f32[2,32,32], index: 3, kind: input, shape index: {}]
  %s4 = inlined_call_operand.hbm [shape: f32[2,1,32], index: 4, kind: input, shape index: {}]
  %s5 = inlined_call_operand.vmem [shape: f32[2,32,32], index: 5, kind: input, shape index: {}]
  %s6 = inlined_call_operand.hbm [shape: f32[2,1,32], index: 6, kind: input, shape index: {}]
  %s7 = inlined_call_operand.vmem [shape: f32[2,32,32], index: 7, kind: input, shape index: {}]
  %s8 = inlined_call_operand.hbm [shape: f32[2,1,32], index: 8, kind: input, shape index: {}]
  %s9 = inlined_call_operand.hbm [shape: f32[2,32,32], index: 9, kind: input, shape index: {}]
  %s10 = inlined_call_operand.hbm [shape: f32[2,1,32], index: 10, kind: input, shape index: {}]
  %s11 = inlined_call_operand.hbm [shape: f32[2,1,32], index: 11, kind: input, shape index: {}]
  %s12 = inlined_call_operand.hbm [shape: f32[2,1,32], index: 12, kind: input, shape index: {}]
  %s13 = inlined_call_operand.hbm [shape: f32[2,32,64], index: 13, kind: input, shape index: {}]
  %s14 = inlined_call_operand.hbm [shape: f32[2,1,64], index: 14, kind: input, shape index: {}]
  %s15 = inlined_call_operand.vmem [shape: f32[2,64,32], index: 15, kind: input, shape index: {}]
  %s16 = inlined_call_operand.hbm [shape: f32[2,1,32], index: 16, kind: input, shape index: {}]
  %s17 = inlined_call_operand.hbm [shape: f32[2,1,32], index: 17, kind: input, shape index: {}]
  %s18 = inlined_call_operand.hbm [shape: f32[2,1,32], index: 18, kind: input, shape index: {}]
  %s19 = inlined_call_operand.vmem [shape: f32[32,16], index: 19, kind: input, shape index: {}]
  %s20 = inlined_call_operand.vmem [shape: f32[1,16], index: 20, kind: input, shape index: {}]
  %s21 = inlined_call_operand.vmem [shape: f32[16,5], index: 21, kind: input, shape index: {}]
  %s22 = inlined_call_operand.vmem [shape: f32[1,5], index: 22, kind: input, shape index: {}]
  %s23 = inlined_call_operand.hbm [shape: f32[2,1,5], index: 23, kind: output, shape index: {}]
  %s24 = sld [smem:[#allocation0]]
  $region185: #{tpu_custom_call.1} parent=0
    _
  %s26 = ssub.s32 1, %s24
  %s27 = scalar_select 0, %s26, %s24
  $region1: #{tpu_custom_call.1} parent=0
    #allocation2 [shape = 'u8[8192]{0}', space=vmem, size = 0x2000, scoped, tag = 'input window, operand 0']
    #allocation3 [shape = 's32[2]{0}', space=sflag, size = 0x8, scoped, tag = 'scoped memory for tpu_custom_call.1']
    #allocation4 [shape = 's32[2]{0}', space=sflag, size = 0x8, scoped, tag = 'scoped memory for tpu_custom_call.1']
    #allocation5 [shape = 'u8[8192]{0}', space=vmem, size = 0x2000, scoped, tag = 'input window, operand 1, single buffered']
    #allocation6 [shape = 's32[1]{0}', space=sflag, size = 0x4, scoped, tag = 'scoped memory for tpu_custom_call.1']
    #allocation7 [shape = 'u8[512]{0}', space=vmem, size = 0x400, scoped, tag = 'input window, operand 2, single buffered']
    #allocation8 [shape = 'u8[1024]{0}', space=vmem, size = 0x400, scoped, tag = 'input window, operand 4, single buffered']
    #allocation9 [shape = 's32[1]{0}', space=sflag, size = 0x4, scoped, tag = 'scoped memory for tpu_custom_call.1']
    #allocation10 [shape = 'u8[1024]{0}', space=vmem, size = 0x400, scoped, tag = 'input window, operand 6, single buffered']
    #allocation11 [shape = 'u8[1024]{0}', space=vmem, size = 0x400, scoped, tag = 'input window, operand 8, single buffered']
    #allocation12 [shape = 's32[1]{0}', space=sflag, size = 0x4, scoped, tag = 'scoped memory for tpu_custom_call.1']
    #allocation13 [shape = 'u8[32768]{0}', space=vmem, size = 0x8000, scoped, tag = 'input window, operand 9, single buffered']
    #allocation14 [shape = 'u8[1024]{0}', space=vmem, size = 0x400, scoped, tag = 'input window, operand 10, single buffered']
    #allocation15 [shape = 's32[1]{0}', space=sflag, size = 0x4, scoped, tag = 'scoped memory for tpu_custom_call.1']
    #allocation16 [shape = 'u8[1024]{0}', space=vmem, size = 0x400, scoped, tag = 'input window, operand 11, single buffered']
    #allocation17 [shape = 'u8[1024]{0}', space=vmem, size = 0x400, scoped, tag = 'input window, operand 12, single buffered']
    #allocation18 [shape = 's32[1]{0}', space=sflag, size = 0x4, scoped, tag = 'scoped memory for tpu_custom_call.1']
    #allocation19 [shape = 'u8[32768]{0}', space=vmem, size = 0x8000, scoped, tag = 'input window, operand 13, single buffered']
    #allocation20 [shape = 'u8[1024]{0}', space=vmem, size = 0x400, scoped, tag = 'input window, operand 14, single buffered']
    #allocation21 [shape = 's32[1]{0}', space=sflag, size = 0x4, scoped, tag = 'scoped memory for tpu_custom_call.1']
    #allocation22 [shape = 'u8[1024]{0}', space=vmem, size = 0x400, scoped, tag = 'input window, operand 16, single buffered']
    #allocation23 [shape = 'u8[1024]{0}', space=vmem, size = 0x400, scoped, tag = 'input window, operand 17, single buffered']
    #allocation24 [shape = 's32[1]{0}', space=sflag, size = 0x4, scoped, tag = 'scoped memory for tpu_custom_call.1']
    #allocation25 [shape = 'u8[1024]{0}', space=vmem, size = 0x400, scoped, tag = 'input window, operand 18, single buffered']
    #allocation26 [shape = 'u8[1024]{0}', space=vmem, size = 0x400, scoped, tag = 'output window, operand 0']
    %28 = vsyncpa [#allocation3], 0
    %s29 = scalar_lea.sflag [#allocation3], 1
    %30 = vsyncpa %s29, 0
    %31 = vsyncpa [#allocation6], 0
    %32 = vsyncpa [#allocation9], 0
    %33 = vsyncpa [#allocation12], 0
    %34 = vsyncpa [#allocation15], 0
    %35 = vsyncpa [#allocation18], 0
    %36 = vsyncpa [#allocation21], 0
    %37 = vsyncpa [#allocation24], 0
    %38 = vsyncpa [#allocation4], 0
    %s39 = scalar_lea.sflag [#allocation4], 1
    %40 = vsyncpa %s39, 0
    loop: start=0, step=1, limit=4
    $region2: #{tpu_custom_call.1} parent=1 // loop_pre_header
      _
    $region3: #{tpu_custom_call.1} parent=1 // loop_header
      %s42 = sphi 0, %s46
      %p43 = scmp.ge.s32.totalorder %s42, 4
      %s52 = sphi 0, %s54
      %s55 = sphi 0, %s52
      %s56 = sphi 0, %s55
      %s72 = sphi 0, %s56
      %s76 = sphi 0, %s76
      %s78 = sphi 0, %s76
      %s79 = sphi 0, %s78
      %s93 = sphi 0, %s79
      %s97 = sphi 0, %s97
      %s99 = sphi 0, %s97
      %s100 = sphi 0, %s99
      %s114 = sphi 0, %s100
      %s118 = sphi 0, %s118
      %s120 = sphi 0, %s118
      %s121 = sphi 0, %s120
      %s135 = sphi 0, %s121
      %s139 = sphi 0, %s139
      %s141 = sphi 0, %s139
      %s142 = sphi 0, %s141
      %s156 = sphi 0, %s142
      %s160 = sphi 0, %s160
      %s162 = sphi 0, %s160
      %s163 = sphi 0, %s162
      %s177 = sphi 0, %s163
      %s181 = sphi 0, %s181
      %s183 = sphi 0, %s181
      %s184 = sphi 0, %s183
      %s198 = sphi 0, %s184
      %s202 = sphi 0, %s202
      %s204 = sphi 0, %s202
      %s205 = sphi 0, %s204
      %s219 = sphi 0, %s205
      %s223 = sphi 0, %s223
      %s225 = sphi 0, %s223
      %s226 = sphi 0, %s225
      %s240 = sphi 0, %s226
      %s244 = sphi 0, %s244
      %s246 = sphi 0, %s244
      %s247 = sphi 0, %s246
      %s261 = sphi 0, %s247
      %s265 = sphi 0, %s265
      %s267 = sphi 0, %s265
      %s268 = sphi 0, %s267
      %s282 = sphi 0, %s268
      %s286 = sphi 0, %s286
      %s288 = sphi 0, %s286
      %s289 = sphi 0, %s288
      %s303 = sphi 0, %s289
      %s307 = sphi 0, %s307
      %s309 = sphi 0, %s307
      %s310 = sphi 0, %s309
      %s324 = sphi 0, %s310
      %s328 = sphi 0, %s328
      %s330 = sphi 0, %s328
      %s331 = sphi 0, %s330
      %s345 = sphi 0, %s331
      %s349 = sphi 0, %s349
      %s351 = sphi 0, %s349
      %s352 = sphi 0, %s351
      %s366 = sphi 0, %s352
      %s370 = sphi 0, %s370
      %s372 = sphi 0, %s370
      %s373 = sphi 0, %s372
      %s387 = sphi 0, %s373
      %s391 = sphi 0, %s391
      %s393 = sphi 0, %s391
      %s394 = sphi 0, %s393
      %s408 = sphi 0, %s394
      %s412 = sphi 0, %s412
      %s414 = sphi 0, %s412
      %s415 = sphi 0, %s414
      %s429 = sphi 0, %s415
      %s433 = sphi 0, %s433
      %s435 = sphi 0, %s433
      %s436 = sphi 0, %s435
      %s450 = sphi 0, %s436
      %s454 = sphi 0, %s454
      %s456 = sphi 0, %s454
      %s457 = sphi 0, %s456
      %s471 = sphi 0, %s457
      %s475 = sphi 0, %s475
      %s477 = sphi 0, %s475
      %s478 = sphi 0, %s477
      %s492 = sphi 0, %s478
      %s496 = sphi 0, %s496
      %s498 = sphi 0, %s496
      %s499 = sphi 0, %s498
      %s513 = sphi 0, %s499
      %s517 = sphi 0, %s517
      %s519 = sphi 0, %s517
      %s520 = sphi 0, %s519
      %s534 = sphi 0, %s520
      %s540 = sphi 0, %s542
      %s543 = sphi 0, %s540
      %s544 = sphi 0, %s543
      %s560 = sphi 0, %s544
    $region4: #{tpu_custom_call.1} parent=1 // loop_header_branch
      %45 = sbr.rel (%p43) target = $region8
    $region5: #{tpu_custom_call.1} parent=1 // loop_body
      %s47 = ssub.s32 %s42, 1
      %s48 = ssub.s32 %s42, 2
      %s49 = sadd.s32 %s42, 1
      %s50 = ssub.s32 %s42, %s49
      %p51 = scmp.eq.s32.totalorder %s50, 0
      %s53 = sadd.s32 %s52, 1
      %s54 = scalar_select %p51, %s52, %s53
      %p57 = pneg %p51
      %p58 = scmp.eq.s32.totalorder %s42, 1
      %p59 = por %p57, %p58
      %p60 = scmp.ne.s32.totalorder %s52, %s55
      %p61 = scmp.eq.s32.totalorder %s42, 0
      %p62 = por %p60, %p61
      %p63 = scmp.ne.s32.totalorder %s52, %s55
      %p64 = scmp.eq.s32.totalorder %s47, 1
      %p65 = por %p63, %p64
      %p66 = scmp.ne.s32.totalorder %s55, %s56
      %p67 = scmp.eq.s32.totalorder %s47, 0
      %p68 = por %p66, %p67
      %p69 = scmp.ne.s32.totalorder %s55, %s56
      %p70 = scmp.eq.s32.totalorder %s48, 1
      %p71 = por %p69, %p70
      %p73 = scmp.ne.s32.totalorder %s56, %s72
      %p74 = scmp.eq.s32.totalorder %s48, 0
      %p75 = por %p73, %p74
      %s77 = sadd.s32 %s76, 1
      %p80 = scmp.eq.s32.totalorder %s42, 1
      %p81 = scmp.ne.s32.totalorder %s76, %s78
      %p82 = scmp.eq.s32.totalorder %s42, 0
      %p83 = por %p81, %p82
      %p84 = scmp.ne.s32.totalorder %s76, %s78
      %p85 = scmp.eq.s32.totalorder %s47, 1
      %p86 = por %p84, %p85
      %p87 = scmp.ne.s32.totalorder %s78, %s79
      %p88 = scmp.eq.s32.totalorder %s47, 0
      %p89 = por %p87, %p88
      %p90 = scmp.ne.s32.totalorder %s78, %s79
      %p91 = scmp.eq.s32.totalorder %s48, 1
      %p92 = por %p90, %p91
      %p94 = scmp.ne.s32.totalorder %s79, %s93
      %p95 = scmp.eq.s32.totalorder %s48, 0
      %p96 = por %p94, %p95
      %s98 = sadd.s32 %s97, 1
      %p101 = scmp.eq.s32.totalorder %s42, 1
      %p102 = scmp.ne.s32.totalorder %s97, %s99
      %p103 = scmp.eq.s32.totalorder %s42, 0
      %p104 = por %p102, %p103
      %p105 = scmp.ne.s32.totalorder %s97, %s99
      %p106 = scmp.eq.s32.totalorder %s47, 1
      %p107 = por %p105, %p106
      %p108 = scmp.ne.s32.totalorder %s99, %s100
      %p109 = scmp.eq.s32.totalorder %s47, 0
      %p110 = por %p108, %p109
      %p111 = scmp.ne.s32.totalorder %s99, %s100
      %p112 = scmp.eq.s32.totalorder %s48, 1
      %p113 = por %p111, %p112
      %p115 = scmp.ne.s32.totalorder %s100, %s114
      %p116 = scmp.eq.s32.totalorder %s48, 0
      %p117 = por %p115, %p116
      %s119 = sadd.s32 %s118, 1
      %p122 = scmp.eq.s32.totalorder %s42, 1
      %p123 = scmp.ne.s32.totalorder %s118, %s120
      %p124 = scmp.eq.s32.totalorder %s42, 0
      %p125 = por %p123, %p124
      %p126 = scmp.ne.s32.totalorder %s118, %s120
      %p127 = scmp.eq.s32.totalorder %s47, 1
      %p128 = por %p126, %p127
      %p129 = scmp.ne.s32.totalorder %s120, %s121
      %p130 = scmp.eq.s32.totalorder %s47, 0
      %p131 = por %p129, %p130
      %p132 = scmp.ne.s32.totalorder %s120, %s121
      %p133 = scmp.eq.s32.totalorder %s48, 1
      %p134 = por %p132, %p133
      %p136 = scmp.ne.s32.totalorder %s121, %s135
      %p137 = scmp.eq.s32.totalorder %s48, 0
      %p138 = por %p136, %p137
      %s140 = sadd.s32 %s139, 1
      %p143 = scmp.eq.s32.totalorder %s42, 1
      %p144 = scmp.ne.s32.totalorder %s139, %s141
      %p145 = scmp.eq.s32.totalorder %s42, 0
      %p146 = por %p144, %p145
      %p147 = scmp.ne.s32.totalorder %s139, %s141
      %p148 = scmp.eq.s32.totalorder %s47, 1
      %p149 = por %p147, %p148
      %p150 = scmp.ne.s32.totalorder %s141, %s142
      %p151 = scmp.eq.s32.totalorder %s47, 0
      %p152 = por %p150, %p151
      %p153 = scmp.ne.s32.totalorder %s141, %s142
      %p154 = scmp.eq.s32.totalorder %s48, 1
      %p155 = por %p153, %p154
      %p157 = scmp.ne.s32.totalorder %s142, %s156
      %p158 = scmp.eq.s32.totalorder %s48, 0
      %p159 = por %p157, %p158
      %s161 = sadd.s32 %s160, 1
      %p164 = scmp.eq.s32.totalorder %s42, 1
      %p165 = scmp.ne.s32.totalorder %s160, %s162
      %p166 = scmp.eq.s32.totalorder %s42, 0
      %p167 = por %p165, %p166
      %p168 = scmp.ne.s32.totalorder %s160, %s162
      %p169 = scmp.eq.s32.totalorder %s47, 1
      %p170 = por %p168, %p169
      %p171 = scmp.ne.s32.totalorder %s162, %s163
      %p172 = scmp.eq.s32.totalorder %s47, 0
      %p173 = por %p171, %p172
      %p174 = scmp.ne.s32.totalorder %s162, %s163
      %p175 = scmp.eq.s32.totalorder %s48, 1
      %p176 = por %p174, %p175
      %p178 = scmp.ne.s32.totalorder %s163, %s177
      %p179 = scmp.eq.s32.totalorder %s48, 0
      %p180 = por %p178, %p179
      %s182 = sadd.s32 %s181, 1
      %p185 = scmp.eq.s32.totalorder %s42, 1
      %p186 = scmp.ne.s32.totalorder %s181, %s183
      %p187 = scmp.eq.s32.totalorder %s42, 0
      %p188 = por %p186, %p187
      %p189 = scmp.ne.s32.totalorder %s181, %s183
      %p190 = scmp.eq.s32.totalorder %s47, 1
      %p191 = por %p189, %p190
      %p192 = scmp.ne.s32.totalorder %s183, %s184
      %p193 = scmp.eq.s32.totalorder %s47, 0
      %p194 = por %p192, %p193
      %p195 = scmp.ne.s32.totalorder %s183, %s184
      %p196 = scmp.eq.s32.totalorder %s48, 1
      %p197 = por %p195, %p196
      %p199 = scmp.ne.s32.totalorder %s184, %s198
      %p200 = scmp.eq.s32.totalorder %s48, 0
      %p201 = por %p199, %p200
      %s203 = sadd.s32 %s202, 1
      %p206 = scmp.eq.s32.totalorder %s42, 1
      %p207 = scmp.ne.s32.totalorder %s202, %s204
      %p208 = scmp.eq.s32.totalorder %s42, 0
      %p209 = por %p207, %p208
      %p210 = scmp.ne.s32.totalorder %s202, %s204
      %p211 = scmp.eq.s32.totalorder %s47, 1
      %p212 = por %p210, %p211
      %p213 = scmp.ne.s32.totalorder %s204, %s205
      %p214 = scmp.eq.s32.totalorder %s47, 0
      %p215 = por %p213, %p214
      %p216 = scmp.ne.s32.totalorder %s204, %s205
      %p217 = scmp.eq.s32.totalorder %s48, 1
      %p218 = por %p216, %p217
      %p220 = scmp.ne.s32.totalorder %s205, %s219
      %p221 = scmp.eq.s32.totalorder %s48, 0
      %p222 = por %p220, %p221
      %s224 = sadd.s32 %s223, 1
      %p227 = scmp.eq.s32.totalorder %s42, 1
      %p228 = scmp.ne.s32.totalorder %s223, %s225
      %p229 = scmp.eq.s32.totalorder %s42, 0
      %p230 = por %p228, %p229
      %p231 = scmp.ne.s32.totalorder %s223, %s225
      %p232 = scmp.eq.s32.totalorder %s47, 1
      %p233 = por %p231, %p232
      %p234 = scmp.ne.s32.totalorder %s225, %s226
      %p235 = scmp.eq.s32.totalorder %s47, 0
      %p236 = por %p234, %p235
      %p237 = scmp.ne.s32.totalorder %s225, %s226
      %p238 = scmp.eq.s32.totalorder %s48, 1
      %p239 = por %p237, %p238
      %p241 = scmp.ne.s32.totalorder %s226, %s240
      %p242 = scmp.eq.s32.totalorder %s48, 0
      %p243 = por %p241, %p242
      %s245 = sadd.s32 %s244, 1
      %p248 = scmp.eq.s32.totalorder %s42, 1
      %p249 = scmp.ne.s32.totalorder %s244, %s246
      %p250 = scmp.eq.s32.totalorder %s42, 0
      %p251 = por %p249, %p250
      %p252 = scmp.ne.s32.totalorder %s244, %s246
      %p253 = scmp.eq.s32.totalorder %s47, 1
      %p254 = por %p252, %p253
      %p255 = scmp.ne.s32.totalorder %s246, %s247
      %p256 = scmp.eq.s32.totalorder %s47, 0
      %p257 = por %p255, %p256
      %p258 = scmp.ne.s32.totalorder %s246, %s247
      %p259 = scmp.eq.s32.totalorder %s48, 1
      %p260 = por %p258, %p259
      %p262 = scmp.ne.s32.totalorder %s247, %s261
      %p263 = scmp.eq.s32.totalorder %s48, 0
      %p264 = por %p262, %p263
      %s266 = sadd.s32 %s265, 1
      %p269 = scmp.eq.s32.totalorder %s42, 1
      %p270 = scmp.ne.s32.totalorder %s265, %s267
      %p271 = scmp.eq.s32.totalorder %s42, 0
      %p272 = por %p270, %p271
      %p273 = scmp.ne.s32.totalorder %s265, %s267
      %p274 = scmp.eq.s32.totalorder %s47, 1
      %p275 = por %p273, %p274
      %p276 = scmp.ne.s32.totalorder %s267, %s268
      %p277 = scmp.eq.s32.totalorder %s47, 0
      %p278 = por %p276, %p277
      %p279 = scmp.ne.s32.totalorder %s267, %s268
      %p280 = scmp.eq.s32.totalorder %s48, 1
      %p281 = por %p279, %p280
      %p283 = scmp.ne.s32.totalorder %s268, %s282
      %p284 = scmp.eq.s32.totalorder %s48, 0
      %p285 = por %p283, %p284
      %s287 = sadd.s32 %s286, 1
      %p290 = scmp.eq.s32.totalorder %s42, 1
      %p291 = scmp.ne.s32.totalorder %s286, %s288
      %p292 = scmp.eq.s32.totalorder %s42, 0
      %p293 = por %p291, %p292
      %p294 = scmp.ne.s32.totalorder %s286, %s288
      %p295 = scmp.eq.s32.totalorder %s47, 1
      %p296 = por %p294, %p295
      %p297 = scmp.ne.s32.totalorder %s288, %s289
      %p298 = scmp.eq.s32.totalorder %s47, 0
      %p299 = por %p297, %p298
      %p300 = scmp.ne.s32.totalorder %s288, %s289
      %p301 = scmp.eq.s32.totalorder %s48, 1
      %p302 = por %p300, %p301
      %p304 = scmp.ne.s32.totalorder %s289, %s303
      %p305 = scmp.eq.s32.totalorder %s48, 0
      %p306 = por %p304, %p305
      %s308 = sadd.s32 %s307, 1
      %p311 = scmp.eq.s32.totalorder %s42, 1
      %p312 = scmp.ne.s32.totalorder %s307, %s309
      %p313 = scmp.eq.s32.totalorder %s42, 0
      %p314 = por %p312, %p313
      %p315 = scmp.ne.s32.totalorder %s307, %s309
      %p316 = scmp.eq.s32.totalorder %s47, 1
      %p317 = por %p315, %p316
      %p318 = scmp.ne.s32.totalorder %s309, %s310
      %p319 = scmp.eq.s32.totalorder %s47, 0
      %p320 = por %p318, %p319
      %p321 = scmp.ne.s32.totalorder %s309, %s310
      %p322 = scmp.eq.s32.totalorder %s48, 1
      %p323 = por %p321, %p322
      %p325 = scmp.ne.s32.totalorder %s310, %s324
      %p326 = scmp.eq.s32.totalorder %s48, 0
      %p327 = por %p325, %p326
      %s329 = sadd.s32 %s328, 1
      %p332 = scmp.eq.s32.totalorder %s42, 1
      %p333 = scmp.ne.s32.totalorder %s328, %s330
      %p334 = scmp.eq.s32.totalorder %s42, 0
      %p335 = por %p333, %p334
      %p336 = scmp.ne.s32.totalorder %s328, %s330
      %p337 = scmp.eq.s32.totalorder %s47, 1
      %p338 = por %p336, %p337
      %p339 = scmp.ne.s32.totalorder %s330, %s331
      %p340 = scmp.eq.s32.totalorder %s47, 0
      %p341 = por %p339, %p340
      %p342 = scmp.ne.s32.totalorder %s330, %s331
      %p343 = scmp.eq.s32.totalorder %s48, 1
      %p344 = por %p342, %p343
      %p346 = scmp.ne.s32.totalorder %s331, %s345
      %p347 = scmp.eq.s32.totalorder %s48, 0
      %p348 = por %p346, %p347
      %s350 = sadd.s32 %s349, 1
      %p353 = scmp.eq.s32.totalorder %s42, 1
      %p354 = scmp.ne.s32.totalorder %s349, %s351
      %p355 = scmp.eq.s32.totalorder %s42, 0
      %p356 = por %p354, %p355
      %p357 = scmp.ne.s32.totalorder %s349, %s351
      %p358 = scmp.eq.s32.totalorder %s47, 1
      %p359 = por %p357, %p358
      %p360 = scmp.ne.s32.totalorder %s351, %s352
      %p361 = scmp.eq.s32.totalorder %s47, 0
      %p362 = por %p360, %p361
      %p363 = scmp.ne.s32.totalorder %s351, %s352
      %p364 = scmp.eq.s32.totalorder %s48, 1
      %p365 = por %p363, %p364
      %p367 = scmp.ne.s32.totalorder %s352, %s366
      %p368 = scmp.eq.s32.totalorder %s48, 0
      %p369 = por %p367, %p368
      %s371 = sadd.s32 %s370, 1
      %p374 = scmp.eq.s32.totalorder %s42, 1
      %p375 = scmp.ne.s32.totalorder %s370, %s372
      %p376 = scmp.eq.s32.totalorder %s42, 0
      %p377 = por %p375, %p376
      %p378 = scmp.ne.s32.totalorder %s370, %s372
      %p379 = scmp.eq.s32.totalorder %s47, 1
      %p380 = por %p378, %p379
      %p381 = scmp.ne.s32.totalorder %s372, %s373
      %p382 = scmp.eq.s32.totalorder %s47, 0
      %p383 = por %p381, %p382
      %p384 = scmp.ne.s32.totalorder %s372, %s373
      %p385 = scmp.eq.s32.totalorder %s48, 1
      %p386 = por %p384, %p385
      %p388 = scmp.ne.s32.totalorder %s373, %s387
      %p389 = scmp.eq.s32.totalorder %s48, 0
      %p390 = por %p388, %p389
      %s392 = sadd.s32 %s391, 1
      %p395 = scmp.eq.s32.totalorder %s42, 1
      %p396 = scmp.ne.s32.totalorder %s391, %s393
      %p397 = scmp.eq.s32.totalorder %s42, 0
      %p398 = por %p396, %p397
      %p399 = scmp.ne.s32.totalorder %s391, %s393
      %p400 = scmp.eq.s32.totalorder %s47, 1
      %p401 = por %p399, %p400
      %p402 = scmp.ne.s32.totalorder %s393, %s394
      %p403 = scmp.eq.s32.totalorder %s47, 0
      %p404 = por %p402, %p403
      %p405 = scmp.ne.s32.totalorder %s393, %s394
      %p406 = scmp.eq.s32.totalorder %s48, 1
      %p407 = por %p405, %p406
      %p409 = scmp.ne.s32.totalorder %s394, %s408
      %p410 = scmp.eq.s32.totalorder %s48, 0
      %p411 = por %p409, %p410
      %s413 = sadd.s32 %s412, 1
      %p416 = scmp.eq.s32.totalorder %s42, 1
      %p417 = scmp.ne.s32.totalorder %s412, %s414
      %p418 = scmp.eq.s32.totalorder %s42, 0
      %p419 = por %p417, %p418
      %p420 = scmp.ne.s32.totalorder %s412, %s414
      %p421 = scmp.eq.s32.totalorder %s47, 1
      %p422 = por %p420, %p421
      %p423 = scmp.ne.s32.totalorder %s414, %s415
      %p424 = scmp.eq.s32.totalorder %s47, 0
      %p425 = por %p423, %p424
      %p426 = scmp.ne.s32.totalorder %s414, %s415
      %p427 = scmp.eq.s32.totalorder %s48, 1
      %p428 = por %p426, %p427
      %p430 = scmp.ne.s32.totalorder %s415, %s429
      %p431 = scmp.eq.s32.totalorder %s48, 0
      %p432 = por %p430, %p431
      %s434 = sadd.s32 %s433, 1
      %p437 = scmp.eq.s32.totalorder %s42, 1
      %p438 = scmp.ne.s32.totalorder %s433, %s435
      %p439 = scmp.eq.s32.totalorder %s42, 0
      %p440 = por %p438, %p439
      %p441 = scmp.ne.s32.totalorder %s433, %s435
      %p442 = scmp.eq.s32.totalorder %s47, 1
      %p443 = por %p441, %p442
      %p444 = scmp.ne.s32.totalorder %s435, %s436
      %p445 = scmp.eq.s32.totalorder %s47, 0
      %p446 = por %p444, %p445
      %p447 = scmp.ne.s32.totalorder %s435, %s436
      %p448 = scmp.eq.s32.totalorder %s48, 1
      %p449 = por %p447, %p448
      %p451 = scmp.ne.s32.totalorder %s436, %s450
      %p452 = scmp.eq.s32.totalorder %s48, 0
      %p453 = por %p451, %p452
      %s455 = sadd.s32 %s454, 1
      %p458 = scmp.eq.s32.totalorder %s42, 1
      %p459 = scmp.ne.s32.totalorder %s454, %s456
      %p460 = scmp.eq.s32.totalorder %s42, 0
      %p461 = por %p459, %p460
      %p462 = scmp.ne.s32.totalorder %s454, %s456
      %p463 = scmp.eq.s32.totalorder %s47, 1
      %p464 = por %p462, %p463
      %p465 = scmp.ne.s32.totalorder %s456, %s457
      %p466 = scmp.eq.s32.totalorder %s47, 0
      %p467 = por %p465, %p466
      %p468 = scmp.ne.s32.totalorder %s456, %s457
      %p469 = scmp.eq.s32.totalorder %s48, 1
      %p470 = por %p468, %p469
      %p472 = scmp.ne.s32.totalorder %s457, %s471
      %p473 = scmp.eq.s32.totalorder %s48, 0
      %p474 = por %p472, %p473
      %s476 = sadd.s32 %s475, 1
      %p479 = scmp.eq.s32.totalorder %s42, 1
      %p480 = scmp.ne.s32.totalorder %s475, %s477
      %p481 = scmp.eq.s32.totalorder %s42, 0
      %p482 = por %p480, %p481
      %p483 = scmp.ne.s32.totalorder %s475, %s477
      %p484 = scmp.eq.s32.totalorder %s47, 1
      %p485 = por %p483, %p484
      %p486 = scmp.ne.s32.totalorder %s477, %s478
      %p487 = scmp.eq.s32.totalorder %s47, 0
      %p488 = por %p486, %p487
      %p489 = scmp.ne.s32.totalorder %s477, %s478
      %p490 = scmp.eq.s32.totalorder %s48, 1
      %p491 = por %p489, %p490
      %p493 = scmp.ne.s32.totalorder %s478, %s492
      %p494 = scmp.eq.s32.totalorder %s48, 0
      %p495 = por %p493, %p494
      %s497 = sadd.s32 %s496, 1
      %p500 = scmp.eq.s32.totalorder %s42, 1
      %p501 = scmp.ne.s32.totalorder %s496, %s498
      %p502 = scmp.eq.s32.totalorder %s42, 0
      %p503 = por %p501, %p502
      %p504 = scmp.ne.s32.totalorder %s496, %s498
      %p505 = scmp.eq.s32.totalorder %s47, 1
      %p506 = por %p504, %p505
      %p507 = scmp.ne.s32.totalorder %s498, %s499
      %p508 = scmp.eq.s32.totalorder %s47, 0
      %p509 = por %p507, %p508
      %p510 = scmp.ne.s32.totalorder %s498, %s499
      %p511 = scmp.eq.s32.totalorder %s48, 1
      %p512 = por %p510, %p511
      %p514 = scmp.ne.s32.totalorder %s499, %s513
      %p515 = scmp.eq.s32.totalorder %s48, 0
      %p516 = por %p514, %p515
      %s518 = sadd.s32 %s517, 1
      %p521 = scmp.eq.s32.totalorder %s42, 1
      %p522 = scmp.ne.s32.totalorder %s517, %s519
      %p523 = scmp.eq.s32.totalorder %s42, 0
      %p524 = por %p522, %p523
      %p525 = scmp.ne.s32.totalorder %s517, %s519
      %p526 = scmp.eq.s32.totalorder %s47, 1
      %p527 = por %p525, %p526
      %p528 = scmp.ne.s32.totalorder %s519, %s520
      %p529 = scmp.eq.s32.totalorder %s47, 0
      %p530 = por %p528, %p529
      %p531 = scmp.ne.s32.totalorder %s519, %s520
      %p532 = scmp.eq.s32.totalorder %s48, 1
      %p533 = por %p531, %p532
      %p535 = scmp.ne.s32.totalorder %s520, %s534
      %p536 = scmp.eq.s32.totalorder %s48, 0
      %p537 = por %p535, %p536
      %s538 = ssub.s32 %s42, %s49
      %p539 = scmp.eq.s32.totalorder %s538, 0
      %s541 = sadd.s32 %s540, 1
      %s542 = scalar_select %p539, %s540, %s541
      %p545 = pneg %p539
      %p546 = scmp.eq.s32.totalorder %s42, 1
      %p547 = por %p545, %p546
      %p548 = scmp.ne.s32.totalorder %s540, %s543
      %p549 = scmp.eq.s32.totalorder %s42, 0
      %p550 = por %p548, %p549
      %p551 = scmp.ne.s32.totalorder %s540, %s543
      %p552 = scmp.eq.s32.totalorder %s47, 1
      %p553 = por %p551, %p552
      %p554 = scmp.ne.s32.totalorder %s543, %s544
      %p555 = scmp.eq.s32.totalorder %s47, 0
      %p556 = por %p554, %p555
      %p557 = scmp.ne.s32.totalorder %s543, %s544
      %p558 = scmp.eq.s32.totalorder %s48, 1
      %p559 = por %p557, %p558
      %p561 = scmp.ne.s32.totalorder %s544, %s560
      %p562 = scmp.eq.s32.totalorder %s48, 0
      %p563 = por %p561, %p562
      %p564 = scmp.le.s32.totalorder 1, %s42
      %p565 = scmp.lt.s32.totalorder %s42, 3
      %p566 = pnand %p564, %p565
      %p567 = pneg %p566
      // Predicated region
      $region9: #{tpu_custom_call.1} parent=5 // pred_check
        _
      $region10: #{tpu_custom_call.1} parent=5 // pred_check_branch
        %569 = sbr.rel (%p566) target = $region12
      $region11: #{tpu_custom_call.1} parent=5 // pred_region
        %s570 = ssub.s32 %s42, 1
        // Predicated region
        $region13: #{tpu_custom_call.1} parent=11 // pred_check
          %p571 = pneg %p89
        $region14: #{tpu_custom_call.1} parent=11 // pred_check_branch
          %573 = sbr.rel (%p571) target = $region16
        $region15: #{tpu_custom_call.1} parent=11 // pred_region
          %575 = vsyncadd [#allocation6], 0
          %s576 = sshll.u32 %s1, 4
          %s577 = int_to_ptr.hbm [resolvable:$true] %s576
          %s578 = sshll.u32 [#allocation5], 4
          %s579 = int_to_ptr.vmem [resolvable:$true] %s578
          %584 = dma.hbm_to_vmem [thread:$0]  %s577, 256, %s579, [#allocation6], 128, 128, 8
        $region16: #{tpu_custom_call.1} parent=11 // pred_fallthru
          _
        // Predicated region
        $region17: #{tpu_custom_call.1} parent=11 // pred_check
          %p585 = pneg %p110
        $region18: #{tpu_custom_call.1} parent=11 // pred_check_branch
          %587 = sbr.rel (%p585) target = $region20
        $region19: #{tpu_custom_call.1} parent=11 // pred_region
          %589 = vsyncadd [#allocation6], 0
          %s591 = sshll.u32 %s2, 4
          %s592 = int_to_ptr.hbm [resolvable:$true] %s591
          %s593 = sshll.u32 [#allocation7], 4
          %s594 = int_to_ptr.vmem [resolvable:$true] %s593
          %596 = dma.hbm_to_vmem [thread:$0]  %s592, 16, %s594, [#allocation6]
        $region20: #{tpu_custom_call.1} parent=11 // pred_fallthru
          _
        // Predicated region
        $region21: #{tpu_custom_call.1} parent=11 // pred_check
          %p597 = pneg %p131
        $region22: #{tpu_custom_call.1} parent=11 // pred_check_branch
          %599 = sbr.rel (%p597) target = $region24
        $region23: #{tpu_custom_call.1} parent=11 // pred_region
          _
        $region24: #{tpu_custom_call.1} parent=11 // pred_fallthru
          _
        // Predicated region
        $region25: #{tpu_custom_call.1} parent=11 // pred_check
          %p600 = pneg %p152
        $region26: #{tpu_custom_call.1} parent=11 // pred_check_branch
          %602 = sbr.rel (%p600) target = $region28
        $region27: #{tpu_custom_call.1} parent=11 // pred_region
          %604 = vsyncadd [#allocation9], 0
          %s605 = sshll.u32 %s4, 4
          %s606 = int_to_ptr.hbm [resolvable:$true] %s605
          %s607 = sshll.u32 [#allocation8], 4
          %s608 = int_to_ptr.vmem [resolvable:$true] %s607
          %613 = dma.hbm_to_vmem [thread:$0]  %s606, 32, %s608, [#allocation9], 16, 16, 1
        $region28: #{tpu_custom_call.1} parent=11 // pred_fallthru
          _
        // Predicated region
        $region29: #{tpu_custom_call.1} parent=11 // pred_check
          %p614 = pneg %p173
        $region30: #{tpu_custom_call.1} parent=11 // pred_check_branch
          %616 = sbr.rel (%p614) target = $region32
        $region31: #{tpu_custom_call.1} parent=11 // pred_region
          _
        $region32: #{tpu_custom_call.1} parent=11 // pred_fallthru
          _
        // Predicated region
        $region33: #{tpu_custom_call.1} parent=11 // pred_check
          %p617 = pneg %p194
        $region34: #{tpu_custom_call.1} parent=11 // pred_check_branch
          %619 = sbr.rel (%p617) target = $region36
        $region35: #{tpu_custom_call.1} parent=11 // pred_region
          %621 = vsyncadd [#allocation9], 0
          %s622 = sshll.u32 %s6, 4
          %s623 = int_to_ptr.hbm [resolvable:$true] %s622
          %s624 = sshll.u32 [#allocation10], 4
          %s625 = int_to_ptr.vmem [resolvable:$true] %s624
          %630 = dma.hbm_to_vmem [thread:$0]  %s623, 32, %s625, [#allocation9], 16, 16, 1
        $region36: #{tpu_custom_call.1} parent=11 // pred_fallthru
          _
        // Predicated region
        $region37: #{tpu_custom_call.1} parent=11 // pred_check
          %p631 = pneg %p215
        $region38: #{tpu_custom_call.1} parent=11 // pred_check_branch
          %633 = sbr.rel (%p631) target = $region40
        $region39: #{tpu_custom_call.1} parent=11 // pred_region
          _
        $region40: #{tpu_custom_call.1} parent=11 // pred_fallthru
          _
        // Predicated region
        $region41: #{tpu_custom_call.1} parent=11 // pred_check
          %p634 = pneg %p236
        $region42: #{tpu_custom_call.1} parent=11 // pred_check_branch
          %636 = sbr.rel (%p634) target = $region44
        $region43: #{tpu_custom_call.1} parent=11 // pred_region
          %638 = vsyncadd [#allocation12], 0
          %s639 = sshll.u32 %s8, 4
          %s640 = int_to_ptr.hbm [resolvable:$true] %s639
          %s641 = sshll.u32 [#allocation11], 4
          %s642 = int_to_ptr.vmem [resolvable:$true] %s641
          %647 = dma.hbm_to_vmem [thread:$0]  %s640, 32, %s642, [#allocation12], 16, 16, 1
        $region44: #{tpu_custom_call.1} parent=11 // pred_fallthru
          _
        // Predicated region
        $region45: #{tpu_custom_call.1} parent=11 // pred_check
          %p648 = pneg %p257
        $region46: #{tpu_custom_call.1} parent=11 // pred_check_branch
          %650 = sbr.rel (%p648) target = $region48
        $region47: #{tpu_custom_call.1} parent=11 // pred_region
          %652 = vsyncadd [#allocation12], 0
          %s653 = sshll.u32 %s9, 4
          %s654 = int_to_ptr.hbm [resolvable:$true] %s653
          %s655 = sshll.u32 [#allocation13], 4
          %s656 = int_to_ptr.vmem [resolvable:$true] %s655
          %661 = dma.hbm_to_vmem [thread:$0]  %s654, 1024, %s656, [#allocation12], 128, 128, 8
        $region48: #{tpu_custom_call.1} parent=11 // pred_fallthru
          _
        // Predicated region
        $region49: #{tpu_custom_call.1} parent=11 // pred_check
          %p662 = pneg %p278
        $region50: #{tpu_custom_call.1} parent=11 // pred_check_branch
          %664 = sbr.rel (%p662) target = $region52
        $region51: #{tpu_custom_call.1} parent=11 // pred_region
          %666 = vsyncadd [#allocation15], 0
          %s667 = sshll.u32 %s10, 4
          %s668 = int_to_ptr.hbm [resolvable:$true] %s667
          %s669 = sshll.u32 [#allocation14], 4
          %s670 = int_to_ptr.vmem [resolvable:$true] %s669
          %675 = dma.hbm_to_vmem [thread:$0]  %s668, 32, %s670, [#allocation15], 16, 16, 1
        $region52: #{tpu_custom_call.1} parent=11 // pred_fallthru
          _
        // Predicated region
        $region53: #{tpu_custom_call.1} parent=11 // pred_check
          %p676 = pneg %p299
        $region54: #{tpu_custom_call.1} parent=11 // pred_check_branch
          %678 = sbr.rel (%p676) target = $region56
        $region55: #{tpu_custom_call.1} parent=11 // pred_region
          %680 = vsyncadd [#allocation15], 0
          %s681 = sshll.u32 %s11, 4
          %s682 = int_to_ptr.hbm [resolvable:$true] %s681
          %s683 = sshll.u32 [#allocation16], 4
          %s684 = int_to_ptr.vmem [resolvable:$true] %s683
          %689 = dma.hbm_to_vmem [thread:$0]  %s682, 32, %s684, [#allocation15], 16, 16, 1
        $region56: #{tpu_custom_call.1} parent=11 // pred_fallthru
          _
        // Predicated region
        $region57: #{tpu_custom_call.1} parent=11 // pred_check
          %p690 = pneg %p320
        $region58: #{tpu_custom_call.1} parent=11 // pred_check_branch
          %692 = sbr.rel (%p690) target = $region60
        $region59: #{tpu_custom_call.1} parent=11 // pred_region
          %694 = vsyncadd [#allocation18], 0
          %s695 = sshll.u32 %s12, 4
          %s696 = int_to_ptr.hbm [resolvable:$true] %s695
          %s697 = sshll.u32 [#allocation17], 4
          %s698 = int_to_ptr.vmem [resolvable:$true] %s697
          %703 = dma.hbm_to_vmem [thread:$0]  %s696, 32, %s698, [#allocation18], 16, 16, 1
        $region60: #{tpu_custom_call.1} parent=11 // pred_fallthru
          _
        // Predicated region
        $region61: #{tpu_custom_call.1} parent=11 // pred_check
          %p704 = pneg %p341
        $region62: #{tpu_custom_call.1} parent=11 // pred_check_branch
          %706 = sbr.rel (%p704) target = $region64
        $region63: #{tpu_custom_call.1} parent=11 // pred_region
          %708 = vsyncadd [#allocation18], 0
          %s709 = sshll.u32 %s13, 4
          %s710 = int_to_ptr.hbm [resolvable:$true] %s709
          %s711 = sshll.u32 [#allocation19], 4
          %s712 = int_to_ptr.vmem [resolvable:$true] %s711
          %717 = dma.hbm_to_vmem [thread:$0]  %s710, 1024, %s712, [#allocation18], 128, 128, 8
        $region64: #{tpu_custom_call.1} parent=11 // pred_fallthru
          _
        // Predicated region
        $region65: #{tpu_custom_call.1} parent=11 // pred_check
          %p718 = pneg %p362
        $region66: #{tpu_custom_call.1} parent=11 // pred_check_branch
          %720 = sbr.rel (%p718) target = $region68
        $region67: #{tpu_custom_call.1} parent=11 // pred_region
          %722 = vsyncadd [#allocation21], 0
          %s723 = sshll.u32 %s14, 4
          %s724 = int_to_ptr.hbm [resolvable:$true] %s723
          %s725 = sshll.u32 [#allocation20], 4
          %s726 = int_to_ptr.vmem [resolvable:$true] %s725
          %731 = dma.hbm_to_vmem [thread:$0]  %s724, 32, %s726, [#allocation21], 16, 16, 1
        $region68: #{tpu_custom_call.1} parent=11 // pred_fallthru
          _
        // Predicated region
        $region69: #{tpu_custom_call.1} parent=11 // pred_check
          %p732 = pneg %p383
        $region70: #{tpu_custom_call.1} parent=11 // pred_check_branch
          %734 = sbr.rel (%p732) target = $region72
        $region71: #{tpu_custom_call.1} parent=11 // pred_region
          _
        $region72: #{tpu_custom_call.1} parent=11 // pred_fallthru
          _
        // Predicated region
        $region73: #{tpu_custom_call.1} parent=11 // pred_check
          %p735 = pneg %p404
        $region74: #{tpu_custom_call.1} parent=11 // pred_check_branch
          %737 = sbr.rel (%p735) target = $region76
        $region75: #{tpu_custom_call.1} parent=11 // pred_region
          %739 = vsyncadd [#allocation21], 0
          %s740 = sshll.u32 %s16, 4
          %s741 = int_to_ptr.hbm [resolvable:$true] %s740
          %s742 = sshll.u32 [#allocation22], 4
          %s743 = int_to_ptr.vmem [resolvable:$true] %s742
          %748 = dma.hbm_to_vmem [thread:$0]  %s741, 32, %s743, [#allocation21], 16, 16, 1
        $region76: #{tpu_custom_call.1} parent=11 // pred_fallthru
          _
        // Predicated region
        $region77: #{tpu_custom_call.1} parent=11 // pred_check
          %p749 = pneg %p425
        $region78: #{tpu_custom_call.1} parent=11 // pred_check_branch
          %751 = sbr.rel (%p749) target = $region80
        $region79: #{tpu_custom_call.1} parent=11 // pred_region
          %753 = vsyncadd [#allocation24], 0
          %s754 = sshll.u32 %s17, 4
          %s755 = int_to_ptr.hbm [resolvable:$true] %s754
          %s756 = sshll.u32 [#allocation23], 4
          %s757 = int_to_ptr.vmem [resolvable:$true] %s756
          %762 = dma.hbm_to_vmem [thread:$0]  %s755, 32, %s757, [#allocation24], 16, 16, 1
        $region80: #{tpu_custom_call.1} parent=11 // pred_fallthru
          _
        // Predicated region
        $region81: #{tpu_custom_call.1} parent=11 // pred_check
          %p763 = pneg %p446
        $region82: #{tpu_custom_call.1} parent=11 // pred_check_branch
          %765 = sbr.rel (%p763) target = $region84
        $region83: #{tpu_custom_call.1} parent=11 // pred_region
          %767 = vsyncadd [#allocation24], 0
          %s768 = sshll.u32 %s18, 4
          %s769 = int_to_ptr.hbm [resolvable:$true] %s768
          %s770 = sshll.u32 [#allocation25], 4
          %s771 = int_to_ptr.vmem [resolvable:$true] %s770
          %776 = dma.hbm_to_vmem [thread:$0]  %s769, 32, %s771, [#allocation24], 16, 16, 1
        $region84: #{tpu_custom_call.1} parent=11 // pred_fallthru
          _
        // Predicated region
        $region85: #{tpu_custom_call.1} parent=11 // pred_check
          %p777 = pneg %p467
        $region86: #{tpu_custom_call.1} parent=11 // pred_check_branch
          %779 = sbr.rel (%p777) target = $region88
        $region87: #{tpu_custom_call.1} parent=11 // pred_region
          _
        $region88: #{tpu_custom_call.1} parent=11 // pred_fallthru
          _
        // Predicated region
        $region89: #{tpu_custom_call.1} parent=11 // pred_check
          %p780 = pneg %p488
        $region90: #{tpu_custom_call.1} parent=11 // pred_check_branch
          %782 = sbr.rel (%p780) target = $region92
        $region91: #{tpu_custom_call.1} parent=11 // pred_region
          _
        $region92: #{tpu_custom_call.1} parent=11 // pred_fallthru
          _
        // Predicated region
        $region93: #{tpu_custom_call.1} parent=11 // pred_check
          %p783 = pneg %p509
        $region94: #{tpu_custom_call.1} parent=11 // pred_check_branch
          %785 = sbr.rel (%p783) target = $region96
        $region95: #{tpu_custom_call.1} parent=11 // pred_region
          _
        $region96: #{tpu_custom_call.1} parent=11 // pred_fallthru
          _
        // Predicated region
        $region97: #{tpu_custom_call.1} parent=11 // pred_check
          %p786 = pneg %p530
        $region98: #{tpu_custom_call.1} parent=11 // pred_check_branch
          %788 = sbr.rel (%p786) target = $region100
        $region99: #{tpu_custom_call.1} parent=11 // pred_region
          _
        $region100: #{tpu_custom_call.1} parent=11 // pred_fallthru
          _
      $region12: #{tpu_custom_call.1} parent=5 // pred_fallthru
        _
      %p789 = scmp.lt.s32.totalorder %s42, 2
      // Predicated region
      $region101: #{tpu_custom_call.1} parent=5 // pred_check
        %p790 = pneg %p789
      $region102: #{tpu_custom_call.1} parent=5 // pred_check_branch
        %792 = sbr.rel (%p790) target = $region104
      $region103: #{tpu_custom_call.1} parent=5 // pred_region
        // Predicated region
        $region105: #{tpu_custom_call.1} parent=103 // pred_check
          %p793 = pneg %p62
        $region106: #{tpu_custom_call.1} parent=103 // pred_check_branch
          %795 = sbr.rel (%p793) target = $region108
        $region107: #{tpu_custom_call.1} parent=103 // pred_region
          %s796 = sand.u32 %s52, 1
          %s797 = scalar_lea.sflag [#allocation3], %s796
          %s798 = sand.u32 %s52, 1
          %s799 = smul.addr %s798, 8
          %s800 = scalar_lea.vmem [#allocation2], %s799
          %802 = vsyncadd %s797, 0
          %s803 = smul.addr %s42, 8
          %s804 = scalar_lea.hbm %s0, %s803
          %s806 = sshll.u32 %s804, 4
          %s807 = int_to_ptr.hbm [resolvable:$true] %s806
          %s808 = sshll.u32 %s800, 4
          %s809 = int_to_ptr.vmem [resolvable:$true] %s808
          %811 = dma.hbm_to_vmem [thread:$0]  %s807, 128, %s809, %s797
        $region108: #{tpu_custom_call.1} parent=103 // pred_fallthru
          _
      $region104: #{tpu_custom_call.1} parent=5 // pred_fallthru
        _
      %p812 = scmp.le.s32.totalorder 1, %s42
      %p813 = scmp.lt.s32.totalorder %s42, 3
      %p814 = pnand %p812, %p813
      %p815 = pneg %p814
      // Predicated region
      $region109: #{tpu_custom_call.1} parent=5 // pred_check
        _
      $region110: #{tpu_custom_call.1} parent=5 // pred_check_branch
        %817 = sbr.rel (%p814) target = $region112
      $region111: #{tpu_custom_call.1} parent=5 // pred_region
        %s818 = ssub.s32 %s42, 1
        %s819 = sand.u32 %s55, 1
        %s820 = scalar_lea.sflag [#allocation3], %s819
        %s821 = sand.u32 %s55, 1
        %s822 = smul.addr %s821, 8
        %s823 = scalar_lea.vmem [#allocation2], %s822
        // Predicated region
        $region113: #{tpu_custom_call.1} parent=111 // pred_check
          %p824 = pneg %p68
        $region114: #{tpu_custom_call.1} parent=111 // pred_check_branch
          %826 = sbr.rel (%p824) target = $region116
        $region115: #{tpu_custom_call.1} parent=111 // pred_region
          %828 = dma.done %s820, 128
        $region116: #{tpu_custom_call.1} parent=111 // pred_fallthru
          _
        // Predicated region
        $region117: #{tpu_custom_call.1} parent=111 // pred_check
          %p829 = pneg %p89
        $region118: #{tpu_custom_call.1} parent=111 // pred_check_branch
          %831 = sbr.rel (%p829) target = $region120
        $region119: #{tpu_custom_call.1} parent=111 // pred_region
          %833 = dma.done [#allocation6], 256
        $region120: #{tpu_custom_call.1} parent=111 // pred_fallthru
          _
        // Predicated region
        $region121: #{tpu_custom_call.1} parent=111 // pred_check
          %p834 = pneg %p110
        $region122: #{tpu_custom_call.1} parent=111 // pred_check_branch
          %836 = sbr.rel (%p834) target = $region124
        $region123: #{tpu_custom_call.1} parent=111 // pred_region
          %838 = dma.done [#allocation6], 16
        $region124: #{tpu_custom_call.1} parent=111 // pred_fallthru
          _
        // Predicated region
        $region125: #{tpu_custom_call.1} parent=111 // pred_check
          %p839 = pneg %p152
        $region126: #{tpu_custom_call.1} parent=111 // pred_check_branch
          %841 = sbr.rel (%p839) target = $region128
        $region127: #{tpu_custom_call.1} parent=111 // pred_region
          %843 = dma.done [#allocation9], 32
        $region128: #{tpu_custom_call.1} parent=111 // pred_fallthru
          _
        // Predicated region
        $region129: #{tpu_custom_call.1} parent=111 // pred_check
          %p844 = pneg %p194
        $region130: #{tpu_custom_call.1} parent=111 // pred_check_branch
          %846 = sbr.rel (%p844) target = $region132
        $region131: #{tpu_custom_call.1} parent=111 // pred_region
          %848 = dma.done [#allocation9], 32
        $region132: #{tpu_custom_call.1} parent=111 // pred_fallthru
          _
        // Predicated region
        $region133: #{tpu_custom_call.1} parent=111 // pred_check
          %p849 = pneg %p236
        $region134: #{tpu_custom_call.1} parent=111 // pred_check_branch
          %851 = sbr.rel (%p849) target = $region136
        $region135: #{tpu_custom_call.1} parent=111 // pred_region
          %853 = dma.done [#allocation12], 32
        $region136: #{tpu_custom_call.1} parent=111 // pred_fallthru
          _
        // Predicated region
        $region137: #{tpu_custom_call.1} parent=111 // pred_check
          %p854 = pneg %p257
        $region138: #{tpu_custom_call.1} parent=111 // pred_check_branch
          %856 = sbr.rel (%p854) target = $region140
        $region139: #{tpu_custom_call.1} parent=111 // pred_region
          %858 = dma.done [#allocation12], 1024
        $region140: #{tpu_custom_call.1} parent=111 // pred_fallthru
          _
        // Predicated region
        $region141: #{tpu_custom_call.1} parent=111 // pred_check
          %p859 = pneg %p278
        $region142: #{tpu_custom_call.1} parent=111 // pred_check_branch
          %861 = sbr.rel (%p859) target = $region144
        $region143: #{tpu_custom_call.1} parent=111 // pred_region
          %863 = dma.done [#allocation15], 32
        $region144: #{tpu_custom_call.1} parent=111 // pred_fallthru
          _
        // Predicated region
        $region145: #{tpu_custom_call.1} parent=111 // pred_check
          %p864 = pneg %p299
        $region146: #{tpu_custom_call.1} parent=111 // pred_check_branch
          %866 = sbr.rel (%p864) target = $region148
        $region147: #{tpu_custom_call.1} parent=111 // pred_region
          %868 = dma.done [#allocation15], 32
        $region148: #{tpu_custom_call.1} parent=111 // pred_fallthru
          _
        // Predicated region
        $region149: #{tpu_custom_call.1} parent=111 // pred_check
          %p869 = pneg %p320
        $region150: #{tpu_custom_call.1} parent=111 // pred_check_branch
          %871 = sbr.rel (%p869) target = $region152
        $region151: #{tpu_custom_call.1} parent=111 // pred_region
          %873 = dma.done [#allocation18], 32
        $region152: #{tpu_custom_call.1} parent=111 // pred_fallthru
          _
        // Predicated region
        $region153: #{tpu_custom_call.1} parent=111 // pred_check
          %p874 = pneg %p341
        $region154: #{tpu_custom_call.1} parent=111 // pred_check_branch
          %876 = sbr.rel (%p874) target = $region156
        $region155: #{tpu_custom_call.1} parent=111 // pred_region
          %878 = dma.done [#allocation18], 1024
        $region156: #{tpu_custom_call.1} parent=111 // pred_fallthru
          _
        // Predicated region
        $region157: #{tpu_custom_call.1} parent=111 // pred_check
          %p879 = pneg %p362
        $region158: #{tpu_custom_call.1} parent=111 // pred_check_branch
          %881 = sbr.rel (%p879) target = $region160
        $region159: #{tpu_custom_call.1} parent=111 // pred_region
          %883 = dma.done [#allocation21], 32
        $region160: #{tpu_custom_call.1} parent=111 // pred_fallthru
          _
        // Predicated region
        $region161: #{tpu_custom_call.1} parent=111 // pred_check
          %p884 = pneg %p404
        $region162: #{tpu_custom_call.1} parent=111 // pred_check_branch
          %886 = sbr.rel (%p884) target = $region164
        $region163: #{tpu_custom_call.1} parent=111 // pred_region
          %888 = dma.done [#allocation21], 32
        $region164: #{tpu_custom_call.1} parent=111 // pred_fallthru
          _
        // Predicated region
        $region165: #{tpu_custom_call.1} parent=111 // pred_check
          %p889 = pneg %p425
        $region166: #{tpu_custom_call.1} parent=111 // pred_check_branch
          %891 = sbr.rel (%p889) target = $region168
        $region167: #{tpu_custom_call.1} parent=111 // pred_region
          %893 = dma.done [#allocation24], 32
        $region168: #{tpu_custom_call.1} parent=111 // pred_fallthru
          _
        // Predicated region
        $region169: #{tpu_custom_call.1} parent=111 // pred_check
          %p894 = pneg %p446
        $region170: #{tpu_custom_call.1} parent=111 // pred_check_branch
          %896 = sbr.rel (%p894) target = $region172
        $region171: #{tpu_custom_call.1} parent=111 // pred_region
          %898 = dma.done [#allocation24], 32
        $region172: #{tpu_custom_call.1} parent=111 // pred_fallthru
          _
        %s899 = sand.u32 %s55, 1
        %s900 = scalar_lea.sflag [#allocation3], %s899
        %s901 = sand.u32 %s55, 1
        %s902 = smul.addr %s901, 8
        %s903 = scalar_lea.vmem [#allocation2], %s902
        %p904 = pneg %p68
        %p905 = pneg %p65
        %p906 = pneg %p89
        %p907 = pneg %p86
        %p908 = pneg %p110
        %p909 = pneg %p107
        %p910 = pneg %p131
        %p911 = pneg %p128
        %p912 = pneg %p152
        %p913 = pneg %p149
        %p914 = pneg %p173
        %p915 = pneg %p170
        %p916 = pneg %p194
        %p917 = pneg %p191
        %p918 = pneg %p215
        %p919 = pneg %p212
        %p920 = pneg %p236
        %p921 = pneg %p233
        %p922 = pneg %p257
        %p923 = pneg %p254
        %p924 = pneg %p278
        %p925 = pneg %p275
        %p926 = pneg %p299
        %p927 = pneg %p296
        %p928 = pneg %p320
        %p929 = pneg %p317
        %p930 = pneg %p341
        %p931 = pneg %p338
        %p932 = pneg %p362
        %p933 = pneg %p359
        %p934 = pneg %p383
        %p935 = pneg %p380
        %p936 = pneg %p404
        %p937 = pneg %p401
        %p938 = pneg %p425
        %p939 = pneg %p422
        %p940 = pneg %p446
        %p941 = pneg %p443
        %p942 = pneg %p467
        %p943 = pneg %p464
        %p944 = pneg %p488
        %p945 = pneg %p485
        %p946 = pneg %p509
        %p947 = pneg %p506
        %p948 = pneg %p530
        %p949 = pneg %p527
        %p950 = pneg %p556
        %p951 = pneg %p553
        %s952 = sand.u32 %s543, 1
        %s953 = scalar_lea.sflag [#allocation4], %s952
        %s954 = sand.u32 %s543, 1
        %s955 = scalar_lea.vmem [#allocation26], %s954
        %v957 = vld [vmem:[%s823] sm:$0xff]
        %v958 = vld [vmem:[#allocation5] sm:$0xff]
        %v959 = vld [vmem:[#allocation5 + $0x8] sm:$0xff]
        %v960 = vpack.c.bf16 %v957, %v957
        %v961 = vpack.c.bf16 %v959, %v958
        %v962 = vld [vmem:[#allocation7] sm:$0x1]
        %v964 = vperm.slane %v962, 0
        %vm966 = vcmask 130048
        %v968 = vsel %vm966, %v960, 0
        %970 = vmatpush.bf16.msra.mxu0 0
        %971 = vmatpush.bf16.msra.mxu0 0
        %972 = vmatpush.bf16.msra.mxu0 0
        %973 = vmatpush.bf16.msra.mxu0 0
        %974 = vmatpush.bf16.msra.mxu0 0
        %975 = vmatpush.bf16.msra.mxu0 0
        %976 = vmatpush.bf16.msra.mxu0 0
        %977 = vmatpush.bf16.msra.mxu0 %v961
        %978 = vmatmul.bf16.gmra.mxu0 %v968
        %v979 = vpop.f32.mrf.mxu0
        %v980 = vadd.f32 %v964, %v979
        %v981 = vpop.f32.mrf.mxu0
        %982 = vdwg.mxu0
        %v983 = vld [vmem:[%s3] sm:$0xff]
        %v984 = vld [vmem:[%s3 + $0x8] sm:$0xff]
        %v985 = vld [vmem:[%s3 + $0x10] sm:$0xff]
        %v986 = vld [vmem:[%s3 + $0x18] sm:$0xff]
        %v987 = vpack.c.bf16 %v980, %v980
        %v988 = vpack.c.bf16 %v984, %v983
        %v989 = vpack.c.bf16 %v986, %v985
        %v990 = vld [vmem:[#allocation8] sm:$0x1]
        %v992 = vperm.slane %v990, 0
        %vm994 = vcmask 261120
        %v996 = vsel %vm994, %v987, 0
        %998 = vmatpush.bf16.msra.mxu0 0
        %999 = vmatpush.bf16.msra.mxu0 0
        %1000 = vmatpush.bf16.msra.mxu0 0
        %1001 = vmatpush.bf16.msra.mxu0 0
        %1002 = vmatpush.bf16.msra.mxu0 0
        %1003 = vmatpush.bf16.msra.mxu0 0
        %1004 = vmatpush.bf16.msra.mxu0 %v989
        %1005 = vmatpush.bf16.msra.mxu0 %v988
        %1006 = vmatmul.bf16.gmra.mxu0 %v996
        %v1007 = vpop.f32.mrf.mxu0
        %v1008 = vadd.f32 %v992, %v1007
        %v1009 = vpop.f32.mrf.mxu0
        %1010 = vdwg.mxu0
        %v1011 = vmul.f32 %v1008, 0.35355338
        %v1012 = vld [vmem:[%s5] sm:$0xff]
        %v1013 = vld [vmem:[%s5 + $0x8] sm:$0xff]
        %v1014 = vld [vmem:[%s5 + $0x10] sm:$0xff]
        %v1015 = vld [vmem:[%s5 + $0x18] sm:$0xff]
        %v1016 = vpack.c.bf16 %v1013, %v1012
        %v1017 = vpack.c.bf16 %v1015, %v1014
        %v1018 = vld [vmem:[#allocation10] sm:$0x1]
        %v1020 = vperm.slane %v1018, 0
        %1022 = vmatpush.bf16.msra.mxu0 0
        %1023 = vmatpush.bf16.msra.mxu0 0
        %1024 = vmatpush.bf16.msra.mxu0 0
        %1025 = vmatpush.bf16.msra.mxu0 0
        %1026 = vmatpush.bf16.msra.mxu0 0
        %1027 = vmatpush.bf16.msra.mxu0 0
        %1028 = vmatpush.bf16.msra.mxu0 %v1017
        %1029 = vmatpush.bf16.msra.mxu0 %v1016
        %1030 = vmatmul.bf16.gmra.mxu0 %v996
        %v1031 = vpop.f32.mrf.mxu0
        %v1032 = vadd.f32 %v1020, %v1031
        %v1033 = vpop.f32.mrf.mxu0
        %1034 = vdwg.mxu0
        %v1035 = vld [vmem:[%s7] sm:$0xff]
        %v1036 = vld [vmem:[%s7 + $0x8] sm:$0xff]
        %v1037 = vld [vmem:[%s7 + $0x10] sm:$0xff]
        %v1038 = vld [vmem:[%s7 + $0x18] sm:$0xff]
        %v1039 = vpack.c.bf16 %v1036, %v1035
        %v1040 = vpack.c.bf16 %v1038, %v1037
        %v1041 = vld [vmem:[#allocation11] sm:$0x1]
        %v1043 = vperm.slane %v1041, 0
        %1045 = vmatpush.bf16.msra.mxu0 0
        %1046 = vmatpush.bf16.msra.mxu0 0
        %1047 = vmatpush.bf16.msra.mxu0 0
        %1048 = vmatpush.bf16.msra.mxu0 0
        %1049 = vmatpush.bf16.msra.mxu0 0
        %1050 = vmatpush.bf16.msra.mxu0 0
        %1051 = vmatpush.bf16.msra.mxu0 %v1040
        %1052 = vmatpush.bf16.msra.mxu0 %v1039
        %1053 = vmatmul.bf16.gmra.mxu0 %v996
        %v1054 = vpop.f32.mrf.mxu0
        %v1055 = vadd.f32 %v1043, %v1054
        %v1056 = vpop.f32.mrf.mxu0
        %1057 = vdwg.mxu0
        %1059 = vrot.lane.b32.xlu0 %v1011, 120
        %v1060 = vpop.permute.xlu0 %1059
        %1062 = vrot.lane.b32.xlu0 %v1011, 112
        %v1063 = vpop.permute.xlu0 %1062
        %1065 = vrot.lane.b32.xlu0 %v1011, 104
        %v1066 = vpop.permute.xlu0 %1065
        %v1068 = vrot.slane %v1063, 4
        %vm1069 = vcmask 1047556
        %v1070 = vsel %vm1069, %v1068, %v1011
        %v1071 = vrot.slane %v1011, 4
        %v1072 = vsel %vm1069, %v1063, %v1071
        %v1074 = vunpack.c.l.s4 1983009808
        %v1075 = vunpack.c.0.s8 %v1074
        %v1076 = vperm.slane %v1070, %v1075
        %v1078 = vunpack.c.l.s4 1983009808
        %v1079 = vunpack.c.0.s8 %v1078
        %v1080 = vperm.slane %v1072, %v1079
        %v1081 = vrot.slane %v1066, 4
        %v1082 = vsel %vm1069, %v1081, %v1060
        %v1083 = vrot.slane %v1060, 4
        %v1084 = vsel %vm1069, %v1066, %v1083
        %v1086 = vunpack.c.l.s4 1983009808
        %v1087 = vunpack.c.0.s8 %v1086
        %v1088 = vperm.slane %v1082, %v1087
        %v1090 = vunpack.c.l.s4 1983009808
        %v1091 = vunpack.c.0.s8 %v1090
        %v1092 = vperm.slane %v1084, %v1091
        %v1093 = vrot.slane %v1088, 4
        %v1094 = vsel %vm1069, %v1093, %v1076
        %v1095 = vrot.slane %v1076, 4
        %v1096 = vsel %vm1069, %v1088, %v1095
        %v1098 = vunpack.c.l.s4 1934713408
        %v1099 = vunpack.c.0.s8 %v1098
        %v1100 = vperm.slane %v1094, %v1099
        %v1102 = vunpack.c.l.s4 1934713408
        %v1103 = vunpack.c.0.s8 %v1102
        %v1104 = vperm.slane %v1096, %v1103
        %v1105 = vrot.slane %v1092, 4
        %v1106 = vsel %vm1069, %v1105, %v1080
        %v1107 = vrot.slane %v1080, 4
        %v1108 = vsel %vm1069, %v1092, %v1107
        %v1110 = vunpack.c.l.s4 1934713408
        %v1111 = vunpack.c.0.s8 %v1110
        %v1112 = vperm.slane %v1106, %v1111
        %v1114 = vunpack.c.l.s4 1934713408
        %v1115 = vunpack.c.0.s8 %v1114
        %v1116 = vperm.slane %v1108, %v1115
        %v1117 = vrot.slane %v1100, 4
        %v1118 = vsel %vm1069, 0.0, %v1117
        %v1119 = vrot.slane %v1104, 4
        %v1120 = vsel %vm1069, 0.0, %v1119
        %v1121 = vrot.slane %v1112, 4
        %v1122 = vsel %vm1069, 0.0, %v1121
        %v1123 = vrot.slane %v1116, 4
        %v1124 = vsel %vm1069, 0.0, %v1123
        %v1125 = vsel %vm1069, %v1119, %v1100
        %v1127 = vunpack.c.l.s4 1983009808
        %v1128 = vunpack.c.0.s8 %v1127
        %v1129 = vperm.slane %v1125, %v1128
        %v1130 = vrot.slane %v1120, 4
        %v1131 = vsel %vm1069, %v1130, %v1118
        %v1133 = vunpack.c.l.s4 1983009808
        %v1134 = vunpack.c.0.s8 %v1133
        %v1135 = vperm.slane %v1131, %v1134
        %v1136 = vsel %vm1069, %v1123, %v1112
        %v1138 = vunpack.c.l.s4 1983009808
        %v1139 = vunpack.c.0.s8 %v1138
        %v1140 = vperm.slane %v1136, %v1139
        %v1141 = vrot.slane %v1124, 4
        %v1142 = vsel %vm1069, %v1141, %v1122
        %v1144 = vunpack.c.l.s4 1983009808
        %v1145 = vunpack.c.0.s8 %v1144
        %v1146 = vperm.slane %v1142, %v1145
        %v1147 = vrot.slane %v1135, 4
        %v1148 = vsel %vm1069, %v1147, %v1129
        %v1149 = vrot.slane %v1129, 4
        %v1150 = vsel %vm1069, %v1135, %v1149
        %v1152 = vunpack.c.l.s4 1934713408
        %v1153 = vunpack.c.0.s8 %v1152
        %v1154 = vperm.slane %v1148, %v1153
        %v1156 = vunpack.c.l.s4 1934713408
        %v1157 = vunpack.c.0.s8 %v1156
        %v1158 = vperm.slane %v1150, %v1157
        %v1159 = vrot.slane %v1146, 4
        %v1160 = vsel %vm1069, %v1159, %v1140
        %v1161 = vrot.slane %v1140, 4
        %v1162 = vsel %vm1069, %v1146, %v1161
        %v1164 = vunpack.c.l.s4 1934713408
        %v1165 = vunpack.c.0.s8 %v1164
        %v1166 = vperm.slane %v1160, %v1165
        %v1168 = vunpack.c.l.s4 1934713408
        %v1169 = vunpack.c.0.s8 %v1168
        %v1170 = vperm.slane %v1162, %v1169
        %v1171 = vrot.slane %v1166, 4
        %v1172 = vsel %vm1069, %v1171, %v1154
        %v1173 = vrot.slane %v1154, 4
        %v1174 = vsel %vm1069, %v1166, %v1173
        %v1175 = vrot.slane %v1170, 4
        %v1176 = vsel %vm1069, %v1175, %v1158
        %v1177 = vrot.slane %v1158, 4
        %v1178 = vsel %vm1069, %v1170, %v1177
        %v1179 = vpack.c.bf16 %v1172, %v1172
        %v1180 = vpack.c.bf16 %v1174, %v1174
        %v1181 = vpack.c.bf16 %v1176, %v1176
        %v1182 = vpack.c.bf16 %v1178, %v1178
        %1184 = vrot.lane.b32.xlu0 %v1032, 120
        %v1185 = vpop.permute.xlu0 %1184
        %1187 = vrot.lane.b32.xlu0 %v1032, 112
        %v1188 = vpop.permute.xlu0 %1187
        %1190 = vrot.lane.b32.xlu0 %v1032, 104
        %v1191 = vpop.permute.xlu0 %1190
        %v1193 = vrot.slane %v1188, 4
        %v1194 = vsel %vm1069, %v1193, %v1032
        %v1195 = vrot.slane %v1032, 4
        %v1196 = vsel %vm1069, %v1188, %v1195
        %v1198 = vunpack.c.l.s4 1983009808
        %v1199 = vunpack.c.0.s8 %v1198
        %v1200 = vperm.slane %v1194, %v1199
        %v1202 = vunpack.c.l.s4 1983009808
        %v1203 = vunpack.c.0.s8 %v1202
        %v1204 = vperm.slane %v1196, %v1203
        %v1205 = vrot.slane %v1191, 4
        %v1206 = vsel %vm1069, %v1205, %v1185
        %v1207 = vrot.slane %v1185, 4
        %v1208 = vsel %vm1069, %v1191, %v1207
        %v1210 = vunpack.c.l.s4 1983009808
        %v1211 = vunpack.c.0.s8 %v1210
        %v1212 = vperm.slane %v1206, %v1211
        %v1214 = vunpack.c.l.s4 1983009808
        %v1215 = vunpack.c.0.s8 %v1214
        %v1216 = vperm.slane %v1208, %v1215
        %v1217 = vrot.slane %v1212, 4
        %v1218 = vsel %vm1069, %v1217, %v1200
        %v1219 = vrot.slane %v1200, 4
        %v1220 = vsel %vm1069, %v1212, %v1219
        %v1222 = vunpack.c.l.s4 1934713408
        %v1223 = vunpack.c.0.s8 %v1222
        %v1224 = vperm.slane %v1218, %v1223
        %v1226 = vunpack.c.l.s4 1934713408
        %v1227 = vunpack.c.0.s8 %v1226
        %v1228 = vperm.slane %v1220, %v1227
        %v1229 = vrot.slane %v1216, 4
        %v1230 = vsel %vm1069, %v1229, %v1204
        %v1231 = vrot.slane %v1204, 4
        %v1232 = vsel %vm1069, %v1216, %v1231
        %v1234 = vunpack.c.l.s4 1934713408
        %v1235 = vunpack.c.0.s8 %v1234
        %v1236 = vperm.slane %v1230, %v1235
        %v1238 = vunpack.c.l.s4 1934713408
        %v1239 = vunpack.c.0.s8 %v1238
        %v1240 = vperm.slane %v1232, %v1239
        %v1241 = vrot.slane %v1224, 4
        %v1242 = vsel %vm1069, 0.0, %v1241
        %v1243 = vrot.slane %v1228, 4
        %v1244 = vsel %vm1069, 0.0, %v1243
        %v1245 = vrot.slane %v1236, 4
        %v1246 = vsel %vm1069, 0.0, %v1245
        %v1247 = vrot.slane %v1240, 4
        %v1248 = vsel %vm1069, 0.0, %v1247
        %v1249 = vsel %vm1069, %v1243, %v1224
        %v1251 = vunpack.c.l.s4 1983009808
        %v1252 = vunpack.c.0.s8 %v1251
        %v1253 = vperm.slane %v1249, %v1252
        %v1254 = vrot.slane %v1244, 4
        %v1255 = vsel %vm1069, %v1254, %v1242
        %v1257 = vunpack.c.l.s4 1983009808
        %v1258 = vunpack.c.0.s8 %v1257
        %v1259 = vperm.slane %v1255, %v1258
        %v1260 = vsel %vm1069, %v1247, %v1236
        %v1262 = vunpack.c.l.s4 1983009808
        %v1263 = vunpack.c.0.s8 %v1262
        %v1264 = vperm.slane %v1260, %v1263
        %v1265 = vrot.slane %v1248, 4
        %v1266 = vsel %vm1069, %v1265, %v1246
        %v1268 = vunpack.c.l.s4 1983009808
        %v1269 = vunpack.c.0.s8 %v1268
        %v1270 = vperm.slane %v1266, %v1269
        %v1271 = vrot.slane %v1259, 4
        %v1272 = vsel %vm1069, %v1271, %v1253
        %v1273 = vrot.slane %v1253, 4
        %v1274 = vsel %vm1069, %v1259, %v1273
        %v1276 = vunpack.c.l.s4 1934713408
        %v1277 = vunpack.c.0.s8 %v1276
        %v1278 = vperm.slane %v1272, %v1277
        %v1280 = vunpack.c.l.s4 1934713408
        %v1281 = vunpack.c.0.s8 %v1280
        %v1282 = vperm.slane %v1274, %v1281
        %v1283 = vrot.slane %v1270, 4
        %v1284 = vsel %vm1069, %v1283, %v1264
        %v1285 = vrot.slane %v1264, 4
        %v1286 = vsel %vm1069, %v1270, %v1285
        %v1288 = vunpack.c.l.s4 1934713408
        %v1289 = vunpack.c.0.s8 %v1288
        %v1290 = vperm.slane %v1284, %v1289
        %v1292 = vunpack.c.l.s4 1934713408
        %v1293 = vunpack.c.0.s8 %v1292
        %v1294 = vperm.slane %v1286, %v1293
        %v1295 = vrot.slane %v1290, 4
        %v1296 = vsel %vm1069, %v1295, %v1278
        %v1297 = vrot.slane %v1278, 4
        %v1298 = vsel %vm1069, %v1290, %v1297
        %v1299 = vrot.slane %v1294, 4
        %v1300 = vsel %vm1069, %v1299, %v1282
        %v1301 = vrot.slane %v1282, 4
        %v1302 = vsel %vm1069, %v1294, %v1301
        %v1303 = vpack.c.bf16 %v1296, %v1296
        %v1304 = vpack.c.bf16 %v1298, %v1298
        %v1305 = vpack.c.bf16 %v1300, %v1300
        %v1306 = vpack.c.bf16 %v1302, %v1302
        %1308 = vrot.lane.b32.xlu0 %v1055, 120
        %v1309 = vpop.permute.xlu0 %1308
        %1311 = vrot.lane.b32.xlu0 %v1055, 112
        %v1312 = vpop.permute.xlu0 %1311
        %1314 = vrot.lane.b32.xlu0 %v1055, 104
        %v1315 = vpop.permute.xlu0 %1314
        %v1317 = vrot.slane %v1312, 4
        %v1318 = vsel %vm1069, %v1317, %v1055
        %v1319 = vrot.slane %v1055, 4
        %v1320 = vsel %vm1069, %v1312, %v1319
        %v1322 = vunpack.c.l.s4 1983009808
        %v1323 = vunpack.c.0.s8 %v1322
        %v1324 = vperm.slane %v1318, %v1323
        %v1326 = vunpack.c.l.s4 1983009808
        %v1327 = vunpack.c.0.s8 %v1326
        %v1328 = vperm.slane %v1320, %v1327
        %v1329 = vrot.slane %v1315, 4
        %v1330 = vsel %vm1069, %v1329, %v1309
        %v1331 = vrot.slane %v1309, 4
        %v1332 = vsel %vm1069, %v1315, %v1331
        %v1334 = vunpack.c.l.s4 1983009808
        %v1335 = vunpack.c.0.s8 %v1334
        %v1336 = vperm.slane %v1330, %v1335
        %v1338 = vunpack.c.l.s4 1983009808
        %v1339 = vunpack.c.0.s8 %v1338
        %v1340 = vperm.slane %v1332, %v1339
        %v1341 = vrot.slane %v1336, 4
        %v1342 = vsel %vm1069, %v1341, %v1324
        %v1343 = vrot.slane %v1324, 4
        %v1344 = vsel %vm1069, %v1336, %v1343
        %v1346 = vunpack.c.l.s4 1934713408
        %v1347 = vunpack.c.0.s8 %v1346
        %v1348 = vperm.slane %v1342, %v1347
        %v1350 = vunpack.c.l.s4 1934713408
        %v1351 = vunpack.c.0.s8 %v1350
        %v1352 = vperm.slane %v1344, %v1351
        %v1353 = vrot.slane %v1340, 4
        %v1354 = vsel %vm1069, %v1353, %v1328
        %v1355 = vrot.slane %v1328, 4
        %v1356 = vsel %vm1069, %v1340, %v1355
        %v1358 = vunpack.c.l.s4 1934713408
        %v1359 = vunpack.c.0.s8 %v1358
        %v1360 = vperm.slane %v1354, %v1359
        %v1362 = vunpack.c.l.s4 1934713408
        %v1363 = vunpack.c.0.s8 %v1362
        %v1364 = vperm.slane %v1356, %v1363
        %v1365 = vrot.slane %v1348, 4
        %v1366 = vsel %vm1069, 0.0, %v1365
        %v1367 = vrot.slane %v1352, 4
        %v1368 = vsel %vm1069, 0.0, %v1367
        %v1369 = vrot.slane %v1360, 4
        %v1370 = vsel %vm1069, 0.0, %v1369
        %v1371 = vrot.slane %v1364, 4
        %v1372 = vsel %vm1069, 0.0, %v1371
        %v1373 = vsel %vm1069, %v1367, %v1348
        %v1375 = vunpack.c.l.s4 1983009808
        %v1376 = vunpack.c.0.s8 %v1375
        %v1377 = vperm.slane %v1373, %v1376
        %v1378 = vrot.slane %v1368, 4
        %v1379 = vsel %vm1069, %v1378, %v1366
        %v1381 = vunpack.c.l.s4 1983009808
        %v1382 = vunpack.c.0.s8 %v1381
        %v1383 = vperm.slane %v1379, %v1382
        %v1384 = vsel %vm1069, %v1371, %v1360
        %v1386 = vunpack.c.l.s4 1983009808
        %v1387 = vunpack.c.0.s8 %v1386
        %v1388 = vperm.slane %v1384, %v1387
        %v1389 = vrot.slane %v1372, 4
        %v1390 = vsel %vm1069, %v1389, %v1370
        %v1392 = vunpack.c.l.s4 1983009808
        %v1393 = vunpack.c.0.s8 %v1392
        %v1394 = vperm.slane %v1390, %v1393
        %v1395 = vrot.slane %v1383, 4
        %v1396 = vsel %vm1069, %v1395, %v1377
        %v1397 = vrot.slane %v1377, 4
        %v1398 = vsel %vm1069, %v1383, %v1397
        %v1400 = vunpack.c.l.s4 1934713408
        %v1401 = vunpack.c.0.s8 %v1400
        %v1402 = vperm.slane %v1396, %v1401
        %v1404 = vunpack.c.l.s4 1934713408
        %v1405 = vunpack.c.0.s8 %v1404
        %v1406 = vperm.slane %v1398, %v1405
        %v1407 = vrot.slane %v1394, 4
        %v1408 = vsel %vm1069, %v1407, %v1388
        %v1409 = vrot.slane %v1388, 4
        %v1410 = vsel %vm1069, %v1394, %v1409
        %v1412 = vunpack.c.l.s4 1934713408
        %v1413 = vunpack.c.0.s8 %v1412
        %v1414 = vperm.slane %v1408, %v1413
        %v1416 = vunpack.c.l.s4 1934713408
        %v1417 = vunpack.c.0.s8 %v1416
        %v1418 = vperm.slane %v1410, %v1417
        %v1419 = vrot.slane %v1414, 4
        %v1420 = vsel %vm1069, %v1419, %v1402
        %v1421 = vrot.slane %v1402, 4
        %v1422 = vsel %vm1069, %v1414, %v1421
        %v1423 = vrot.slane %v1418, 4
        %v1424 = vsel %vm1069, %v1423, %v1406
        %v1425 = vrot.slane %v1406, 4
        %v1426 = vsel %vm1069, %v1418, %v1425
        %vm1427 = vcmask 64512
        %v1429 = vsel %vm1427, %v1179, 0
        %v1432 = vsel %vm1427, %v1303, 0
        %1434 = vmatpush.bf16.xpose.msra.mxu0 0
        %1435 = vmatpush.bf16.xpose.msra.mxu0 0
        %1436 = vmatpush.bf16.xpose.msra.mxu0 0
        %1437 = vmatpush.bf16.xpose.msra.mxu0 0
        %1438 = vmatpush.bf16.xpose.msra.mxu0 0
        %1439 = vmatpush.bf16.xpose.msra.mxu0 0
        %1440 = vmatpush.bf16.xpose.msra.mxu0 0
        %1441 = vmatpush.bf16.xpose.msra.mxu0 %v1432
        %1442 = vmatmul.bf16.gmra.mxu0 %v1429
        %v1443 = vpop.f32.mrf.mxu0
        %v1444 = vadd.f32 0.0, %v1443
        %v1445 = vpop.f32.mrf.mxu0
        %1446 = vdwg.mxu0
        %v1448 = vsel %vm1427, %v1180, 0
        %v1451 = vsel %vm1427, %v1304, 0
        %1453 = vmatpush.bf16.xpose.msra.mxu0 0
        %1454 = vmatpush.bf16.xpose.msra.mxu0 0
        %1455 = vmatpush.bf16.xpose.msra.mxu0 0
        %1456 = vmatpush.bf16.xpose.msra.mxu0 0
        %1457 = vmatpush.bf16.xpose.msra.mxu0 0
        %1458 = vmatpush.bf16.xpose.msra.mxu0 0
        %1459 = vmatpush.bf16.xpose.msra.mxu0 0
        %1460 = vmatpush.bf16.xpose.msra.mxu0 %v1451
        %1461 = vmatmul.bf16.gmra.mxu0 %v1448
        %v1462 = vpop.f32.mrf.mxu0
        %v1463 = vadd.f32 0.0, %v1462
        %v1464 = vpop.f32.mrf.mxu0
        %1465 = vdwg.mxu0
        %v1467 = vsel %vm1427, %v1181, 0
        %v1470 = vsel %vm1427, %v1305, 0
        %1472 = vmatpush.bf16.xpose.msra.mxu0 0
        %1473 = vmatpush.bf16.xpose.msra.mxu0 0
        %1474 = vmatpush.bf16.xpose.msra.mxu0 0
        %1475 = vmatpush.bf16.xpose.msra.mxu0 0
        %1476 = vmatpush.bf16.xpose.msra.mxu0 0
        %1477 = vmatpush.bf16.xpose.msra.mxu0 0
        %1478 = vmatpush.bf16.xpose.msra.mxu0 0
        %1479 = vmatpush.bf16.xpose.msra.mxu0 %v1470
        %1480 = vmatmul.bf16.gmra.mxu0 %v1467
        %v1481 = vpop.f32.mrf.mxu0
        %v1482 = vadd.f32 0.0, %v1481
        %v1483 = vpop.f32.mrf.mxu0
        %1484 = vdwg.mxu0
        %v1486 = vsel %vm1427, %v1182, 0
        %v1489 = vsel %vm1427, %v1306, 0
        %1491 = vmatpush.bf16.xpose.msra.mxu0 0
        %1492 = vmatpush.bf16.xpose.msra.mxu0 0
        %1493 = vmatpush.bf16.xpose.msra.mxu0 0
        %1494 = vmatpush.bf16.xpose.msra.mxu0 0
        %1495 = vmatpush.bf16.xpose.msra.mxu0 0
        %1496 = vmatpush.bf16.xpose.msra.mxu0 0
        %1497 = vmatpush.bf16.xpose.msra.mxu0 0
        %1498 = vmatpush.bf16.xpose.msra.mxu0 %v1489
        %1499 = vmatmul.bf16.gmra.mxu0 %v1486
        %v1500 = vpop.f32.mrf.mxu0
        %v1501 = vadd.f32 0.0, %v1500
        %v1502 = vpop.f32.mrf.mxu0
        %1503 = vdwg.mxu0
        %v1504 = vsel %vm1427, %v1444, -inf
        %1505 = vmax.xlane.f32.xlu0 %v1504
        %v1506 = vpop.xlane.xlu0 %1505
        %v1507 = vsel %vm1427, %v1463, -inf
        %1508 = vmax.xlane.f32.xlu0 %v1507
        %v1509 = vpop.xlane.xlu0 %1508
        %v1510 = vsel %vm1427, %v1482, -inf
        %1511 = vmax.xlane.f32.xlu0 %v1510
        %v1512 = vpop.xlane.xlu0 %1511
        %v1513 = vsel %vm1427, %v1501, -inf
        %1514 = vmax.xlane.f32.xlu0 %v1513
        %v1515 = vpop.xlane.xlu0 %1514
        %v1516 = vsub.f32 %v1444, %v1506
        %v1517 = vsub.f32 %v1463, %v1509
        %v1518 = vsub.f32 %v1482, %v1512
        %v1519 = vsub.f32 %v1501, %v1515
        %v1520 = vmul.f32 %v1516, 1.442695
        %v1521 = vpow.pop %v1520
        %v1522 = vmul.f32 %v1517, 1.442695
        %v1523 = vpow.pop %v1522
        %v1524 = vmul.f32 %v1518, 1.442695
        %v1525 = vpow.pop %v1524
        %v1526 = vmul.f32 %v1519, 1.442695
        %v1527 = vpow.pop %v1526
        %v1528 = vsel %vm1427, %v1521, 0.0
        %1529 = vadd.xlane.f32.xlu0 %v1528
        %v1530 = vpop.xlane.xlu0 %1529
        %v1531 = vsel %vm1427, %v1523, 0.0
        %1532 = vadd.xlane.f32.xlu0 %v1531
        %v1533 = vpop.xlane.xlu0 %1532
        %v1534 = vsel %vm1427, %v1525, 0.0
        %1535 = vadd.xlane.f32.xlu0 %v1534
        %v1536 = vpop.xlane.xlu0 %1535
        %v1537 = vsel %vm1427, %v1527, 0.0
        %1538 = vadd.xlane.f32.xlu0 %v1537
        %v1539 = vpop.xlane.xlu0 %1538
        %v1540 = vrcp.pop %v1530
        %v1541 = vmul.f32 %v1530, %v1540
        %v1542 = vsub.f32 1.0, %v1541
        %v1543 = vmul.f32 %v1540, %v1542
        %v1544 = vadd.f32 %v1540, %v1543
        %vm1545 = vweird.f32 %v1530
        %vm1546 = vweird.f32 %v1540
        %vm1547 = vmor %vm1545, %vm1546
        %v1548 = vsel %vm1547, %v1540, %v1544
        %v1549 = vand.u32 2147483647, %v1530
        %vm1550 = vcmp.eq.f32.partialorder %v1549, 8.507059e+37
        %v1551 = vand.u32 %v1530, 2147483648
        %v1552 = vor.u32 1.1754944e-38, %v1551
        %v1553 = vsel %vm1550, %v1552, %v1548
        %v1554 = vmul.f32 %v1521, %v1553
        %v1555 = vrcp.pop %v1533
        %v1556 = vmul.f32 %v1533, %v1555
        %v1557 = vsub.f32 1.0, %v1556
        %v1558 = vmul.f32 %v1555, %v1557
        %v1559 = vadd.f32 %v1555, %v1558
        %vm1560 = vweird.f32 %v1533
        %vm1561 = vweird.f32 %v1555
        %vm1562 = vmor %vm1560, %vm1561
        %v1563 = vsel %vm1562, %v1555, %v1559
        %v1564 = vand.u32 2147483647, %v1533
        %vm1565 = vcmp.eq.f32.partialorder %v1564, 8.507059e+37
        %v1566 = vand.u32 %v1533, 2147483648
        %v1567 = vor.u32 1.1754944e-38, %v1566
        %v1568 = vsel %vm1565, %v1567, %v1563
        %v1569 = vmul.f32 %v1523, %v1568
        %v1570 = vrcp.pop %v1536
        %v1571 = vmul.f32 %v1536, %v1570
        %v1572 = vsub.f32 1.0, %v1571
        %v1573 = vmul.f32 %v1570, %v1572
        %v1574 = vadd.f32 %v1570, %v1573
        %vm1575 = vweird.f32 %v1536
        %vm1576 = vweird.f32 %v1570
        %vm1577 = vmor %vm1575, %vm1576
        %v1578 = vsel %vm1577, %v1570, %v1574
        %v1579 = vand.u32 2147483647, %v1536
        %vm1580 = vcmp.eq.f32.partialorder %v1579, 8.507059e+37
        %v1581 = vand.u32 %v1536, 2147483648
        %v1582 = vor.u32 1.1754944e-38, %v1581
        %v1583 = vsel %vm1580, %v1582, %v1578
        %v1584 = vmul.f32 %v1525, %v1583
        %v1585 = vrcp.pop %v1539
        %v1586 = vmul.f32 %v1539, %v1585
        %v1587 = vsub.f32 1.0, %v1586
        %v1588 = vmul.f32 %v1585, %v1587
        %v1589 = vadd.f32 %v1585, %v1588
        %vm1590 = vweird.f32 %v1539
        %vm1591 = vweird.f32 %v1585
        %vm1592 = vmor %vm1590, %vm1591
        %v1593 = vsel %vm1592, %v1585, %v1589
        %v1594 = vand.u32 2147483647, %v1539
        %vm1595 = vcmp.eq.f32.partialorder %v1594, 8.507059e+37
        %v1596 = vand.u32 %v1539, 2147483648
        %v1597 = vor.u32 1.1754944e-38, %v1596
        %v1598 = vsel %vm1595, %v1597, %v1593
        %v1599 = vmul.f32 %v1527, %v1598
        %v1600 = vpack.c.bf16 %v1554, %v1554
        %v1601 = vpack.c.bf16 %v1569, %v1569
        %v1602 = vpack.c.bf16 %v1584, %v1584
        %v1603 = vpack.c.bf16 %v1599, %v1599
        %v1604 = vpack.c.bf16 %v1420, %v1420
        %v1605 = vpack.c.bf16 %v1422, %v1422
        %v1606 = vpack.c.bf16 %v1424, %v1424
        %v1607 = vpack.c.bf16 %v1426, %v1426
        %v1609 = vsel %vm1427, %v1600, 0
        %vm1611 = vcmask 1043456
        %v1613 = vsel %vm1611, %v1604, 0
        %1615 = vmatpush.bf16.msra.mxu0 0
        %1616 = vmatpush.bf16.msra.mxu0 0
        %1617 = vmatpush.bf16.msra.mxu0 0
        %1618 = vmatpush.bf16.msra.mxu0 0
        %1619 = vmatpush.bf16.msra.mxu0 0
        %1620 = vmatpush.bf16.msra.mxu0 0
        %1621 = vmatpush.bf16.msra.mxu0 0
        %1622 = vmatpush.bf16.msra.mxu0 %v1613
        %1623 = vmatmul.bf16.gmra.mxu0 %v1609
        %v1624 = vpop.f32.mrf.mxu0
        %v1625 = vadd.f32 0.0, %v1624
        %v1626 = vpop.f32.mrf.mxu0
        %1627 = vdwg.mxu0
        %v1629 = vsel %vm1427, %v1601, 0
        %v1632 = vsel %vm1611, %v1605, 0
        %1634 = vmatpush.bf16.msra.mxu0 0
        %1635 = vmatpush.bf16.msra.mxu0 0
        %1636 = vmatpush.bf16.msra.mxu0 0
        %1637 = vmatpush.bf16.msra.mxu0 0
        %1638 = vmatpush.bf16.msra.mxu0 0
        %1639 = vmatpush.bf16.msra.mxu0 0
        %1640 = vmatpush.bf16.msra.mxu0 0
        %1641 = vmatpush.bf16.msra.mxu0 %v1632
        %1642 = vmatmul.bf16.gmra.mxu0 %v1629
        %v1643 = vpop.f32.mrf.mxu0
        %v1644 = vadd.f32 0.0, %v1643
        %v1645 = vpop.f32.mrf.mxu0
        %1646 = vdwg.mxu0
        %v1648 = vsel %vm1427, %v1602, 0
        %v1651 = vsel %vm1611, %v1606, 0
        %1653 = vmatpush.bf16.msra.mxu0 0
        %1654 = vmatpush.bf16.msra.mxu0 0
        %1655 = vmatpush.bf16.msra.mxu0 0
        %1656 = vmatpush.bf16.msra.mxu0 0
        %1657 = vmatpush.bf16.msra.mxu0 0
        %1658 = vmatpush.bf16.msra.mxu0 0
        %1659 = vmatpush.bf16.msra.mxu0 0
        %1660 = vmatpush.bf16.msra.mxu0 %v1651
        %1661 = vmatmul.bf16.gmra.mxu0 %v1648
        %v1662 = vpop.f32.mrf.mxu0
        %v1663 = vadd.f32 0.0, %v1662
        %v1664 = vpop.f32.mrf.mxu0
        %1665 = vdwg.mxu0
        %v1667 = vsel %vm1427, %v1603, 0
        %v1670 = vsel %vm1611, %v1607, 0
        %1672 = vmatpush.bf16.msra.mxu0 0
        %1673 = vmatpush.bf16.msra.mxu0 0
        %1674 = vmatpush.bf16.msra.mxu0 0
        %1675 = vmatpush.bf16.msra.mxu0 0
        %1676 = vmatpush.bf16.msra.mxu0 0
        %1677 = vmatpush.bf16.msra.mxu0 0
        %1678 = vmatpush.bf16.msra.mxu0 0
        %1679 = vmatpush.bf16.msra.mxu0 %v1670
        %1680 = vmatmul.bf16.gmra.mxu0 %v1667
        %v1681 = vpop.f32.mrf.mxu0
        %v1682 = vadd.f32 0.0, %v1681
        %v1683 = vpop.f32.mrf.mxu0
        %1684 = vdwg.mxu0
        %v1685 = vrot.slane %v1663, 4
        %v1686 = vsel %vm1069, %v1685, %v1625
        %v1687 = vrot.slane %v1625, 4
        %v1688 = vsel %vm1069, %v1663, %v1687
        %v1690 = vunpack.c.l.s4 1983009808
        %v1691 = vunpack.c.0.s8 %v1690
        %v1692 = vperm.slane %v1686, %v1691
        %v1694 = vunpack.c.l.s4 1983009808
        %v1695 = vunpack.c.0.s8 %v1694
        %v1696 = vperm.slane %v1688, %v1695
        %v1697 = vrot.slane %v1682, 4
        %v1698 = vsel %vm1069, %v1697, %v1644
        %v1699 = vrot.slane %v1644, 4
        %v1700 = vsel %vm1069, %v1682, %v1699
        %v1702 = vunpack.c.l.s4 1983009808
        %v1703 = vunpack.c.0.s8 %v1702
        %v1704 = vperm.slane %v1698, %v1703
        %v1706 = vunpack.c.l.s4 1983009808
        %v1707 = vunpack.c.0.s8 %v1706
        %v1708 = vperm.slane %v1700, %v1707
        %v1709 = vrot.slane %v1704, 4
        %v1710 = vsel %vm1069, %v1709, %v1692
        %v1711 = vrot.slane %v1692, 4
        %v1712 = vsel %vm1069, %v1704, %v1711
        %v1714 = vunpack.c.l.s4 1934713408
        %v1715 = vunpack.c.0.s8 %v1714
        %v1716 = vperm.slane %v1710, %v1715
        %v1718 = vunpack.c.l.s4 1934713408
        %v1719 = vunpack.c.0.s8 %v1718
        %v1720 = vperm.slane %v1712, %v1719
        %v1721 = vrot.slane %v1708, 4
        %v1722 = vsel %vm1069, %v1721, %v1696
        %v1723 = vrot.slane %v1696, 4
        %v1724 = vsel %vm1069, %v1708, %v1723
        %v1726 = vunpack.c.l.s4 1934713408
        %v1727 = vunpack.c.0.s8 %v1726
        %v1728 = vperm.slane %v1722, %v1727
        %v1730 = vunpack.c.l.s4 1934713408
        %v1731 = vunpack.c.0.s8 %v1730
        %v1732 = vperm.slane %v1724, %v1731
        %v1733 = vrot.slane %v1716, 4
        %v1734 = vsel %vm1069, 0.0, %v1733
        %v1735 = vrot.slane %v1720, 4
        %v1736 = vsel %vm1069, 0.0, %v1735
        %v1737 = vrot.slane %v1728, 4
        %v1738 = vsel %vm1069, 0.0, %v1737
        %v1739 = vrot.slane %v1732, 4
        %v1740 = vsel %vm1069, 0.0, %v1739
        %v1741 = vsel %vm1069, %v1735, %v1716
        %v1743 = vunpack.c.l.s4 1983009808
        %v1744 = vunpack.c.0.s8 %v1743
        %v1745 = vperm.slane %v1741, %v1744
        %v1746 = vrot.slane %v1736, 4
        %v1747 = vsel %vm1069, %v1746, %v1734
        %v1749 = vunpack.c.l.s4 1983009808
        %v1750 = vunpack.c.0.s8 %v1749
        %v1751 = vperm.slane %v1747, %v1750
        %v1752 = vsel %vm1069, %v1739, %v1728
        %v1754 = vunpack.c.l.s4 1983009808
        %v1755 = vunpack.c.0.s8 %v1754
        %v1756 = vperm.slane %v1752, %v1755
        %v1757 = vrot.slane %v1740, 4
        %v1758 = vsel %vm1069, %v1757, %v1738
        %v1760 = vunpack.c.l.s4 1983009808
        %v1761 = vunpack.c.0.s8 %v1760
        %v1762 = vperm.slane %v1758, %v1761
        %v1763 = vrot.slane %v1751, 4
        %v1764 = vsel %vm1069, %v1763, %v1745
        %v1765 = vrot.slane %v1745, 4
        %v1766 = vsel %vm1069, %v1751, %v1765
        %v1768 = vunpack.c.l.s4 1934713408
        %v1769 = vunpack.c.0.s8 %v1768
        %v1770 = vperm.slane %v1764, %v1769
        %v1772 = vunpack.c.l.s4 1934713408
        %v1773 = vunpack.c.0.s8 %v1772
        %v1774 = vperm.slane %v1766, %v1773
        %v1775 = vrot.slane %v1762, 4
        %v1776 = vsel %vm1069, %v1775, %v1756
        %v1777 = vrot.slane %v1756, 4
        %v1778 = vsel %vm1069, %v1762, %v1777
        %v1780 = vunpack.c.l.s4 1934713408
        %v1781 = vunpack.c.0.s8 %v1780
        %v1782 = vperm.slane %v1776, %v1781
        %v1784 = vunpack.c.l.s4 1934713408
        %v1785 = vunpack.c.0.s8 %v1784
        %v1786 = vperm.slane %v1778, %v1785
        %v1787 = vrot.slane %v1782, 4
        %v1788 = vsel %vm1069, %v1787, %v1770
        %v1789 = vrot.slane %v1770, 4
        %v1790 = vsel %vm1069, %v1782, %v1789
        %v1791 = vrot.slane %v1786, 4
        %v1792 = vsel %vm1069, %v1791, %v1774
        %v1793 = vrot.slane %v1774, 4
        %v1794 = vsel %vm1069, %v1786, %v1793
        %1796 = vrot.lane.b32.xlu0 %v1790, 8
        %v1797 = vpop.permute.xlu0 %1796
        %1800 = vrot.lane.b32.xlu0 %v1792, 16
        %v1801 = vpop.permute.xlu0 %1800
        %1804 = vrot.lane.b32.xlu0 %v1794, 24
        %v1805 = vpop.permute.xlu0 %1804
        %v1807 = vsel %vm1427, %v1788, %v1797
        %v1808 = vsel %vm966, %v1807, %v1801
        %vm1809 = vcmask 195584
        %v1810 = vsel %vm1809, %v1808, %v1805
        %v1811 = vld [vmem:[#allocation13] sm:$0xff]
        %v1812 = vld [vmem:[#allocation13 + $0x8] sm:$0xff]
        %v1813 = vld [vmem:[#allocation13 + $0x10] sm:$0xff]
        %v1814 = vld [vmem:[#allocation13 + $0x18] sm:$0xff]
        %v1815 = vpack.c.bf16 %v1810, %v1810
        %v1816 = vpack.c.bf16 %v1812, %v1811
        %v1817 = vpack.c.bf16 %v1814, %v1813
        %v1818 = vld [vmem:[#allocation14] sm:$0x1]
        %v1820 = vperm.slane %v1818, 0
        %v1823 = vsel %vm994, %v1815, 0
        %1825 = vmatpush.bf16.msra.mxu0 0
        %1826 = vmatpush.bf16.msra.mxu0 0
        %1827 = vmatpush.bf16.msra.mxu0 0
        %1828 = vmatpush.bf16.msra.mxu0 0
        %1829 = vmatpush.bf16.msra.mxu0 0
        %1830 = vmatpush.bf16.msra.mxu0 0
        %1831 = vmatpush.bf16.msra.mxu0 %v1817
        %1832 = vmatpush.bf16.msra.mxu0 %v1816
        %1833 = vmatmul.bf16.gmra.mxu0 %v1823
        %v1834 = vpop.f32.mrf.mxu0
        %v1835 = vadd.f32 %v1820, %v1834
        %v1836 = vpop.f32.mrf.mxu0
        %1837 = vdwg.mxu0
        %v1838 = vadd.f32 %v980, %v1835
        %v1839 = vld [vmem:[#allocation16] sm:$0x1]
        %v1840 = vld [vmem:[#allocation17] sm:$0x1]
        %v1841 = vsel %vm994, %v1838, 0.0
        %1842 = vadd.xlane.f32.xlu0 %v1841
        %v1843 = vpop.xlane.xlu0 %1842
        %v1844 = vrcp.pop 32.0
        %v1845 = vmul.f32 32.0, %v1844
        %v1846 = vsub.f32 1.0, %v1845
        %v1847 = vmul.f32 %v1844, %v1846
        %v1848 = vadd.f32 %v1844, %v1847
        %vm1849 = vweird.f32 %v1844
        %v1850 = vsel %vm1849, %v1844, %v1848
        %v1851 = vmul.f32 %v1843, %v1850
        %v1852 = vsub.f32 %v1838, %v1851
        %v1853 = vmul.f32 %v1852, %v1852
        %v1854 = vsel %vm994, %v1853, 0.0
        %1855 = vadd.xlane.f32.xlu0 %v1854
        %v1856 = vpop.xlane.xlu0 %1855
        %v1857 = vmul.f32 %v1856, %v1850
        %v1858 = vadd.f32 %v1857, 1e-05
        %v1859 = vrsqrt.pop %v1858
        %v1860 = vmul.f32 %v1859, %v1858
        %v1861 = vmul.f32 %v1860, %v1859
        %v1862 = vmul.f32 0.5, %v1861
        %v1863 = vsub.f32 1.5, %v1862
        %v1864 = vmul.f32 %v1859, %v1863
        %vm1865 = vweird.f32 %v1858
        %vm1866 = vweird.f32 %v1859
        %vm1867 = vmor %vm1865, %vm1866
        %v1868 = vsel %vm1867, %v1859, %v1864
        %v1869 = vmul.f32 %v1852, %v1868
        %v1871 = vperm.slane %v1839, 0
        %v1873 = vmul.f32 %v1869, %v1871
        %v1875 = vperm.slane %v1840, 0
        %v1877 = vadd.f32 %v1873, %v1875
        %v1878 = vld [vmem:[#allocation19] sm:$0xff]
        %v1879 = vld [vmem:[#allocation19 + $0x8] sm:$0xff]
        %v1880 = vld [vmem:[#allocation19 + $0x10] sm:$0xff]
        %v1881 = vld [vmem:[#allocation19 + $0x18] sm:$0xff]
        %v1882 = vpack.c.bf16 %v1877, %v1877
        %v1883 = vpack.c.bf16 %v1879, %v1878
        %v1884 = vpack.c.bf16 %v1881, %v1880
        %v1885 = vld [vmem:[#allocation20] sm:$0x1]
        %v1887 = vperm.slane %v1885, 0
        %v1890 = vsel %vm994, %v1882, 0
        %1892 = vmatpush.bf16.msra.mxu0 0
        %1893 = vmatpush.bf16.msra.mxu0 0
        %1894 = vmatpush.bf16.msra.mxu0 0
        %1895 = vmatpush.bf16.msra.mxu0 0
        %1896 = vmatpush.bf16.msra.mxu0 0
        %1897 = vmatpush.bf16.msra.mxu0 0
        %1898 = vmatpush.bf16.msra.mxu0 %v1884
        %1899 = vmatpush.bf16.msra.mxu0 %v1883
        %1900 = vmatmul.bf16.gmra.mxu0 %v1890
        %v1901 = vpop.f32.mrf.mxu0
        %v1902 = vadd.f32 %v1887, %v1901
        %v1903 = vpop.f32.mrf.mxu0
        %1904 = vdwg.mxu0
        %v1905 = vmax.f32 %v1902, 0.0
        %v1906 = vld [vmem:[%s15] sm:$0xff]
        %v1907 = vld [vmem:[%s15 + $0x8] sm:$0xff]
        %v1908 = vld [vmem:[%s15 + $0x10] sm:$0xff]
        %v1909 = vld [vmem:[%s15 + $0x18] sm:$0xff]
        %v1910 = vld [vmem:[%s15 + $0x20] sm:$0xff]
        %v1911 = vld [vmem:[%s15 + $0x28] sm:$0xff]
        %v1912 = vld [vmem:[%s15 + $0x30] sm:$0xff]
        %v1913 = vld [vmem:[%s15 + $0x38] sm:$0xff]
        %v1914 = vpack.c.bf16 %v1905, %v1905
        %v1915 = vpack.c.bf16 %v1907, %v1906
        %v1916 = vpack.c.bf16 %v1909, %v1908
        %v1917 = vpack.c.bf16 %v1911, %v1910
        %v1918 = vpack.c.bf16 %v1913, %v1912
        %v1919 = vld [vmem:[#allocation22] sm:$0x1]
        %v1921 = vperm.slane %v1919, 0
        %vm1923 = vcmask 523264
        %v1925 = vsel %vm1923, %v1914, 0
        %1927 = vmatpush.bf16.msra.mxu0 0
        %1928 = vmatpush.bf16.msra.mxu0 0
        %1929 = vmatpush.bf16.msra.mxu0 0
        %1930 = vmatpush.bf16.msra.mxu0 0
        %1931 = vmatpush.bf16.msra.mxu0 %v1918
        %1932 = vmatpush.bf16.msra.mxu0 %v1917
        %1933 = vmatpush.bf16.msra.mxu0 %v1916
        %1934 = vmatpush.bf16.msra.mxu0 %v1915
        %1935 = vmatmul.bf16.gmra.mxu0 %v1925
        %v1936 = vpop.f32.mrf.mxu0
        %v1937 = vadd.f32 %v1921, %v1936
        %v1938 = vpop.f32.mrf.mxu0
        %1939 = vdwg.mxu0
        %v1940 = vadd.f32 %v1877, %v1937
        %v1941 = vld [vmem:[#allocation23] sm:$0x1]
        %v1942 = vld [vmem:[#allocation25] sm:$0x1]
        %v1943 = vsel %vm994, %v1940, 0.0
        %1944 = vadd.xlane.f32.xlu0 %v1943
        %v1945 = vpop.xlane.xlu0 %1944
        %v1946 = vmul.f32 %v1945, %v1850
        %v1947 = vsub.f32 %v1940, %v1946
        %v1948 = vmul.f32 %v1947, %v1947
        %v1949 = vsel %vm994, %v1948, 0.0
        %1950 = vadd.xlane.f32.xlu0 %v1949
        %v1951 = vpop.xlane.xlu0 %1950
        %v1952 = vmul.f32 %v1951, %v1850
        %v1953 = vadd.f32 %v1952, 1e-05
        %v1954 = vrsqrt.pop %v1953
        %v1955 = vmul.f32 %v1954, %v1953
        %v1956 = vmul.f32 %v1955, %v1954
        %v1957 = vmul.f32 0.5, %v1956
        %v1958 = vsub.f32 1.5, %v1957
        %v1959 = vmul.f32 %v1954, %v1958
        %vm1960 = vweird.f32 %v1953
        %vm1961 = vweird.f32 %v1954
        %vm1962 = vmor %vm1960, %vm1961
        %v1963 = vsel %vm1962, %v1954, %v1959
        %v1964 = vmul.f32 %v1947, %v1963
        %v1966 = vperm.slane %v1941, 0
        %v1968 = vmul.f32 %v1964, %v1966
        %v1970 = vperm.slane %v1942, 0
        %v1972 = vadd.f32 %v1968, %v1970
        %s1973 = scalar_lea.vmem %s3, 32
        %v1974 = vld [vmem:[%s1973] sm:$0xff]
        %v1975 = vld [vmem:[%s1973 + $0x8] sm:$0xff]
        %v1976 = vld [vmem:[%s1973 + $0x10] sm:$0xff]
        %v1977 = vld [vmem:[%s1973 + $0x18] sm:$0xff]
        %v1978 = vpack.c.bf16 %v1972, %v1972
        %v1979 = vpack.c.bf16 %v1975, %v1974
        %v1980 = vpack.c.bf16 %v1977, %v1976
        %s1981 = scalar_lea.vmem [#allocation8], 1
        %v1982 = vld [vmem:[%s1981] sm:$0x1]
        %v1984 = vperm.slane %v1982, 0
        %v1987 = vsel %vm994, %v1978, 0
        %1989 = vmatpush.bf16.msra.mxu0 0
        %1990 = vmatpush.bf16.msra.mxu0 0
        %1991 = vmatpush.bf16.msra.mxu0 0
        %1992 = vmatpush.bf16.msra.mxu0 0
        %1993 = vmatpush.bf16.msra.mxu0 0
        %1994 = vmatpush.bf16.msra.mxu0 0
        %1995 = vmatpush.bf16.msra.mxu0 %v1980
        %1996 = vmatpush.bf16.msra.mxu0 %v1979
        %1997 = vmatmul.bf16.gmra.mxu0 %v1987
        %v1998 = vpop.f32.mrf.mxu0
        %v1999 = vadd.f32 %v1984, %v1998
        %v2000 = vpop.f32.mrf.mxu0
        %2001 = vdwg.mxu0
        %v2002 = vmul.f32 %v1999, 0.35355338
        %s2003 = scalar_lea.vmem %s5, 32
        %v2004 = vld [vmem:[%s2003] sm:$0xff]
        %v2005 = vld [vmem:[%s2003 + $0x8] sm:$0xff]
        %v2006 = vld [vmem:[%s2003 + $0x10] sm:$0xff]
        %v2007 = vld [vmem:[%s2003 + $0x18] sm:$0xff]
        %v2008 = vpack.c.bf16 %v2005, %v2004
        %v2009 = vpack.c.bf16 %v2007, %v2006
        %s2010 = scalar_lea.vmem [#allocation10], 1
        %v2011 = vld [vmem:[%s2010] sm:$0x1]
        %v2013 = vperm.slane %v2011, 0
        %2015 = vmatpush.bf16.msra.mxu0 0
        %2016 = vmatpush.bf16.msra.mxu0 0
        %2017 = vmatpush.bf16.msra.mxu0 0
        %2018 = vmatpush.bf16.msra.mxu0 0
        %2019 = vmatpush.bf16.msra.mxu0 0
        %2020 = vmatpush.bf16.msra.mxu0 0
        %2021 = vmatpush.bf16.msra.mxu0 %v2009
        %2022 = vmatpush.bf16.msra.mxu0 %v2008
        %2023 = vmatmul.bf16.gmra.mxu0 %v1987
        %v2024 = vpop.f32.mrf.mxu0
        %v2025 = vadd.f32 %v2013, %v2024
        %v2026 = vpop.f32.mrf.mxu0
        %2027 = vdwg.mxu0
        %s2028 = scalar_lea.vmem %s7, 32
        %v2029 = vld [vmem:[%s2028] sm:$0xff]
        %v2030 = vld [vmem:[%s2028 + $0x8] sm:$0xff]
        %v2031 = vld [vmem:[%s2028 + $0x10] sm:$0xff]
        %v2032 = vld [vmem:[%s2028 + $0x18] sm:$0xff]
        %v2033 = vpack.c.bf16 %v2030, %v2029
        %v2034 = vpack.c.bf16 %v2032, %v2031
        %s2035 = scalar_lea.vmem [#allocation11], 1
        %v2036 = vld [vmem:[%s2035] sm:$0x1]
        %v2038 = vperm.slane %v2036, 0
        %2040 = vmatpush.bf16.msra.mxu0 0
        %2041 = vmatpush.bf16.msra.mxu0 0
        %2042 = vmatpush.bf16.msra.mxu0 0
        %2043 = vmatpush.bf16.msra.mxu0 0
        %2044 = vmatpush.bf16.msra.mxu0 0
        %2045 = vmatpush.bf16.msra.mxu0 0
        %2046 = vmatpush.bf16.msra.mxu0 %v2034
        %2047 = vmatpush.bf16.msra.mxu0 %v2033
        %2048 = vmatmul.bf16.gmra.mxu0 %v1987
        %v2049 = vpop.f32.mrf.mxu0
        %v2050 = vadd.f32 %v2038, %v2049
        %v2051 = vpop.f32.mrf.mxu0
        %2052 = vdwg.mxu0
        %2054 = vrot.lane.b32.xlu0 %v2002, 120
        %v2055 = vpop.permute.xlu0 %2054
        %2057 = vrot.lane.b32.xlu0 %v2002, 112
        %v2058 = vpop.permute.xlu0 %2057
        %2060 = vrot.lane.b32.xlu0 %v2002, 104
        %v2061 = vpop.permute.xlu0 %2060
        %v2063 = vrot.slane %v2058, 4
        %v2064 = vsel %vm1069, %v2063, %v2002
        %v2065 = vrot.slane %v2002, 4
        %v2066 = vsel %vm1069, %v2058, %v2065
        %v2068 = vunpack.c.l.s4 1983009808
        %v2069 = vunpack.c.0.s8 %v2068
        %v2070 = vperm.slane %v2064, %v2069
        %v2072 = vunpack.c.l.s4 1983009808
        %v2073 = vunpack.c.0.s8 %v2072
        %v2074 = vperm.slane %v2066, %v2073
        %v2075 = vrot.slane %v2061, 4
        %v2076 = vsel %vm1069, %v2075, %v2055
        %v2077 = vrot.slane %v2055, 4
        %v2078 = vsel %vm1069, %v2061, %v2077
        %v2080 = vunpack.c.l.s4 1983009808
        %v2081 = vunpack.c.0.s8 %v2080
        %v2082 = vperm.slane %v2076, %v2081
        %v2084 = vunpack.c.l.s4 1983009808
        %v2085 = vunpack.c.0.s8 %v2084
        %v2086 = vperm.slane %v2078, %v2085
        %v2087 = vrot.slane %v2082, 4
        %v2088 = vsel %vm1069, %v2087, %v2070
        %v2089 = vrot.slane %v2070, 4
        %v2090 = vsel %vm1069, %v2082, %v2089
        %v2092 = vunpack.c.l.s4 1934713408
        %v2093 = vunpack.c.0.s8 %v2092
        %v2094 = vperm.slane %v2088, %v2093
        %v2096 = vunpack.c.l.s4 1934713408
        %v2097 = vunpack.c.0.s8 %v2096
        %v2098 = vperm.slane %v2090, %v2097
        %v2099 = vrot.slane %v2086, 4
        %v2100 = vsel %vm1069, %v2099, %v2074
        %v2101 = vrot.slane %v2074, 4
        %v2102 = vsel %vm1069, %v2086, %v2101
        %v2104 = vunpack.c.l.s4 1934713408
        %v2105 = vunpack.c.0.s8 %v2104
        %v2106 = vperm.slane %v2100, %v2105
        %v2108 = vunpack.c.l.s4 1934713408
        %v2109 = vunpack.c.0.s8 %v2108
        %v2110 = vperm.slane %v2102, %v2109
        %v2111 = vrot.slane %v2094, 4
        %v2112 = vsel %vm1069, 0.0, %v2111
        %v2113 = vrot.slane %v2098, 4
        %v2114 = vsel %vm1069, 0.0, %v2113
        %v2115 = vrot.slane %v2106, 4
        %v2116 = vsel %vm1069, 0.0, %v2115
        %v2117 = vrot.slane %v2110, 4
        %v2118 = vsel %vm1069, 0.0, %v2117
        %v2119 = vsel %vm1069, %v2113, %v2094
        %v2121 = vunpack.c.l.s4 1983009808
        %v2122 = vunpack.c.0.s8 %v2121
        %v2123 = vperm.slane %v2119, %v2122
        %v2124 = vrot.slane %v2114, 4
        %v2125 = vsel %vm1069, %v2124, %v2112
        %v2127 = vunpack.c.l.s4 1983009808
        %v2128 = vunpack.c.0.s8 %v2127
        %v2129 = vperm.slane %v2125, %v2128
        %v2130 = vsel %vm1069, %v2117, %v2106
        %v2132 = vunpack.c.l.s4 1983009808
        %v2133 = vunpack.c.0.s8 %v2132
        %v2134 = vperm.slane %v2130, %v2133
        %v2135 = vrot.slane %v2118, 4
        %v2136 = vsel %vm1069, %v2135, %v2116
        %v2138 = vunpack.c.l.s4 1983009808
        %v2139 = vunpack.c.0.s8 %v2138
        %v2140 = vperm.slane %v2136, %v2139
        %v2141 = vrot.slane %v2129, 4
        %v2142 = vsel %vm1069, %v2141, %v2123
        %v2143 = vrot.slane %v2123, 4
        %v2144 = vsel %vm1069, %v2129, %v2143
        %v2146 = vunpack.c.l.s4 1934713408
        %v2147 = vunpack.c.0.s8 %v2146
        %v2148 = vperm.slane %v2142, %v2147
        %v2150 = vunpack.c.l.s4 1934713408
        %v2151 = vunpack.c.0.s8 %v2150
        %v2152 = vperm.slane %v2144, %v2151
        %v2153 = vrot.slane %v2140, 4
        %v2154 = vsel %vm1069, %v2153, %v2134
        %v2155 = vrot.slane %v2134, 4
        %v2156 = vsel %vm1069, %v2140, %v2155
        %v2158 = vunpack.c.l.s4 1934713408
        %v2159 = vunpack.c.0.s8 %v2158
        %v2160 = vperm.slane %v2154, %v2159
        %v2162 = vunpack.c.l.s4 1934713408
        %v2163 = vunpack.c.0.s8 %v2162
        %v2164 = vperm.slane %v2156, %v2163
        %v2165 = vrot.slane %v2160, 4
        %v2166 = vsel %vm1069, %v2165, %v2148
        %v2167 = vrot.slane %v2148, 4
        %v2168 = vsel %vm1069, %v2160, %v2167
        %v2169 = vrot.slane %v2164, 4
        %v2170 = vsel %vm1069, %v2169, %v2152
        %v2171 = vrot.slane %v2152, 4
        %v2172 = vsel %vm1069, %v2164, %v2171
        %v2173 = vpack.c.bf16 %v2166, %v2166
        %v2174 = vpack.c.bf16 %v2168, %v2168
        %v2175 = vpack.c.bf16 %v2170, %v2170
        %v2176 = vpack.c.bf16 %v2172, %v2172
        %2178 = vrot.lane.b32.xlu0 %v2025, 120
        %v2179 = vpop.permute.xlu0 %2178
        %2181 = vrot.lane.b32.xlu0 %v2025, 112
        %v2182 = vpop.permute.xlu0 %2181
        %2184 = vrot.lane.b32.xlu0 %v2025, 104
        %v2185 = vpop.permute.xlu0 %2184
        %v2187 = vrot.slane %v2182, 4
        %v2188 = vsel %vm1069, %v2187, %v2025
        %v2189 = vrot.slane %v2025, 4
        %v2190 = vsel %vm1069, %v2182, %v2189
        %v2192 = vunpack.c.l.s4 1983009808
        %v2193 = vunpack.c.0.s8 %v2192
        %v2194 = vperm.slane %v2188, %v2193
        %v2196 = vunpack.c.l.s4 1983009808
        %v2197 = vunpack.c.0.s8 %v2196
        %v2198 = vperm.slane %v2190, %v2197
        %v2199 = vrot.slane %v2185, 4
        %v2200 = vsel %vm1069, %v2199, %v2179
        %v2201 = vrot.slane %v2179, 4
        %v2202 = vsel %vm1069, %v2185, %v2201
        %v2204 = vunpack.c.l.s4 1983009808
        %v2205 = vunpack.c.0.s8 %v2204
        %v2206 = vperm.slane %v2200, %v2205
        %v2208 = vunpack.c.l.s4 1983009808
        %v2209 = vunpack.c.0.s8 %v2208
        %v2210 = vperm.slane %v2202, %v2209
        %v2211 = vrot.slane %v2206, 4
        %v2212 = vsel %vm1069, %v2211, %v2194
        %v2213 = vrot.slane %v2194, 4
        %v2214 = vsel %vm1069, %v2206, %v2213
        %v2216 = vunpack.c.l.s4 1934713408
        %v2217 = vunpack.c.0.s8 %v2216
        %v2218 = vperm.slane %v2212, %v2217
        %v2220 = vunpack.c.l.s4 1934713408
        %v2221 = vunpack.c.0.s8 %v2220
        %v2222 = vperm.slane %v2214, %v2221
        %v2223 = vrot.slane %v2210, 4
        %v2224 = vsel %vm1069, %v2223, %v2198
        %v2225 = vrot.slane %v2198, 4
        %v2226 = vsel %vm1069, %v2210, %v2225
        %v2228 = vunpack.c.l.s4 1934713408
        %v2229 = vunpack.c.0.s8 %v2228
        %v2230 = vperm.slane %v2224, %v2229
        %v2232 = vunpack.c.l.s4 1934713408
        %v2233 = vunpack.c.0.s8 %v2232
        %v2234 = vperm.slane %v2226, %v2233
        %v2235 = vrot.slane %v2218, 4
        %v2236 = vsel %vm1069, 0.0, %v2235
        %v2237 = vrot.slane %v2222, 4
        %v2238 = vsel %vm1069, 0.0, %v2237
        %v2239 = vrot.slane %v2230, 4
        %v2240 = vsel %vm1069, 0.0, %v2239
        %v2241 = vrot.slane %v2234, 4
        %v2242 = vsel %vm1069, 0.0, %v2241
        %v2243 = vsel %vm1069, %v2237, %v2218
        %v2245 = vunpack.c.l.s4 1983009808
        %v2246 = vunpack.c.0.s8 %v2245
        %v2247 = vperm.slane %v2243, %v2246
        %v2248 = vrot.slane %v2238, 4
        %v2249 = vsel %vm1069, %v2248, %v2236
        %v2251 = vunpack.c.l.s4 1983009808
        %v2252 = vunpack.c.0.s8 %v2251
        %v2253 = vperm.slane %v2249, %v2252
        %v2254 = vsel %vm1069, %v2241, %v2230
        %v2256 = vunpack.c.l.s4 1983009808
        %v2257 = vunpack.c.0.s8 %v2256
        %v2258 = vperm.slane %v2254, %v2257
        %v2259 = vrot.slane %v2242, 4
        %v2260 = vsel %vm1069, %v2259, %v2240
        %v2262 = vunpack.c.l.s4 1983009808
        %v2263 = vunpack.c.0.s8 %v2262
        %v2264 = vperm.slane %v2260, %v2263
        %v2265 = vrot.slane %v2253, 4
        %v2266 = vsel %vm1069, %v2265, %v2247
        %v2267 = vrot.slane %v2247, 4
        %v2268 = vsel %vm1069, %v2253, %v2267
        %v2270 = vunpack.c.l.s4 1934713408
        %v2271 = vunpack.c.0.s8 %v2270
        %v2272 = vperm.slane %v2266, %v2271
        %v2274 = vunpack.c.l.s4 1934713408
        %v2275 = vunpack.c.0.s8 %v2274
        %v2276 = vperm.slane %v2268, %v2275
        %v2277 = vrot.slane %v2264, 4
        %v2278 = vsel %vm1069, %v2277, %v2258
        %v2279 = vrot.slane %v2258, 4
        %v2280 = vsel %vm1069, %v2264, %v2279
        %v2282 = vunpack.c.l.s4 1934713408
        %v2283 = vunpack.c.0.s8 %v2282
        %v2284 = vperm.slane %v2278, %v2283
        %v2286 = vunpack.c.l.s4 1934713408
        %v2287 = vunpack.c.0.s8 %v2286
        %v2288 = vperm.slane %v2280, %v2287
        %v2289 = vrot.slane %v2284, 4
        %v2290 = vsel %vm1069, %v2289, %v2272
        %v2291 = vrot.slane %v2272, 4
        %v2292 = vsel %vm1069, %v2284, %v2291
        %v2293 = vrot.slane %v2288, 4
        %v2294 = vsel %vm1069, %v2293, %v2276
        %v2295 = vrot.slane %v2276, 4
        %v2296 = vsel %vm1069, %v2288, %v2295
        %v2297 = vpack.c.bf16 %v2290, %v2290
        %v2298 = vpack.c.bf16 %v2292, %v2292
        %v2299 = vpack.c.bf16 %v2294, %v2294
        %v2300 = vpack.c.bf16 %v2296, %v2296
        %2302 = vrot.lane.b32.xlu0 %v2050, 120
        %v2303 = vpop.permute.xlu0 %2302
        %2305 = vrot.lane.b32.xlu0 %v2050, 112
        %v2306 = vpop.permute.xlu0 %2305
        %2308 = vrot.lane.b32.xlu0 %v2050, 104
        %v2309 = vpop.permute.xlu0 %2308
        %v2311 = vrot.slane %v2306, 4
        %v2312 = vsel %vm1069, %v2311, %v2050
        %v2313 = vrot.slane %v2050, 4
        %v2314 = vsel %vm1069, %v2306, %v2313
        %v2316 = vunpack.c.l.s4 1983009808
        %v2317 = vunpack.c.0.s8 %v2316
        %v2318 = vperm.slane %v2312, %v2317
        %v2320 = vunpack.c.l.s4 1983009808
        %v2321 = vunpack.c.0.s8 %v2320
        %v2322 = vperm.slane %v2314, %v2321
        %v2323 = vrot.slane %v2309, 4
        %v2324 = vsel %vm1069, %v2323, %v2303
        %v2325 = vrot.slane %v2303, 4
        %v2326 = vsel %vm1069, %v2309, %v2325
        %v2328 = vunpack.c.l.s4 1983009808
        %v2329 = vunpack.c.0.s8 %v2328
        %v2330 = vperm.slane %v2324, %v2329
        %v2332 = vunpack.c.l.s4 1983009808
        %v2333 = vunpack.c.0.s8 %v2332
        %v2334 = vperm.slane %v2326, %v2333
        %v2335 = vrot.slane %v2330, 4
        %v2336 = vsel %vm1069, %v2335, %v2318
        %v2337 = vrot.slane %v2318, 4
        %v2338 = vsel %vm1069, %v2330, %v2337
        %v2340 = vunpack.c.l.s4 1934713408
        %v2341 = vunpack.c.0.s8 %v2340
        %v2342 = vperm.slane %v2336, %v2341
        %v2344 = vunpack.c.l.s4 1934713408
        %v2345 = vunpack.c.0.s8 %v2344
        %v2346 = vperm.slane %v2338, %v2345
        %v2347 = vrot.slane %v2334, 4
        %v2348 = vsel %vm1069, %v2347, %v2322
        %v2349 = vrot.slane %v2322, 4
        %v2350 = vsel %vm1069, %v2334, %v2349
        %v2352 = vunpack.c.l.s4 1934713408
        %v2353 = vunpack.c.0.s8 %v2352
        %v2354 = vperm.slane %v2348, %v2353
        %v2356 = vunpack.c.l.s4 1934713408
        %v2357 = vunpack.c.0.s8 %v2356
        %v2358 = vperm.slane %v2350, %v2357
        %v2359 = vrot.slane %v2342, 4
        %v2360 = vsel %vm1069, 0.0, %v2359
        %v2361 = vrot.slane %v2346, 4
        %v2362 = vsel %vm1069, 0.0, %v2361
        %v2363 = vrot.slane %v2354, 4
        %v2364 = vsel %vm1069, 0.0, %v2363
        %v2365 = vrot.slane %v2358, 4
        %v2366 = vsel %vm1069, 0.0, %v2365
        %v2367 = vsel %vm1069, %v2361, %v2342
        %v2369 = vunpack.c.l.s4 1983009808
        %v2370 = vunpack.c.0.s8 %v2369
        %v2371 = vperm.slane %v2367, %v2370
        %v2372 = vrot.slane %v2362, 4
        %v2373 = vsel %vm1069, %v2372, %v2360
        %v2375 = vunpack.c.l.s4 1983009808
        %v2376 = vunpack.c.0.s8 %v2375
        %v2377 = vperm.slane %v2373, %v2376
        %v2378 = vsel %vm1069, %v2365, %v2354
        %v2380 = vunpack.c.l.s4 1983009808
        %v2381 = vunpack.c.0.s8 %v2380
        %v2382 = vperm.slane %v2378, %v2381
        %v2383 = vrot.slane %v2366, 4
        %v2384 = vsel %vm1069, %v2383, %v2364
        %v2386 = vunpack.c.l.s4 1983009808
        %v2387 = vunpack.c.0.s8 %v2386
        %v2388 = vperm.slane %v2384, %v2387
        %v2389 = vrot.slane %v2377, 4
        %v2390 = vsel %vm1069, %v2389, %v2371
        %v2391 = vrot.slane %v2371, 4
        %v2392 = vsel %vm1069, %v2377, %v2391
        %v2394 = vunpack.c.l.s4 1934713408
        %v2395 = vunpack.c.0.s8 %v2394
        %v2396 = vperm.slane %v2390, %v2395
        %v2398 = vunpack.c.l.s4 1934713408
        %v2399 = vunpack.c.0.s8 %v2398
        %v2400 = vperm.slane %v2392, %v2399
        %v2401 = vrot.slane %v2388, 4
        %v2402 = vsel %vm1069, %v2401, %v2382
        %v2403 = vrot.slane %v2382, 4
        %v2404 = vsel %vm1069, %v2388, %v2403
        %v2406 = vunpack.c.l.s4 1934713408
        %v2407 = vunpack.c.0.s8 %v2406
        %v2408 = vperm.slane %v2402, %v2407
        %v2410 = vunpack.c.l.s4 1934713408
        %v2411 = vunpack.c.0.s8 %v2410
        %v2412 = vperm.slane %v2404, %v2411
        %v2413 = vrot.slane %v2408, 4
        %v2414 = vsel %vm1069, %v2413, %v2396
        %v2415 = vrot.slane %v2396, 4
        %v2416 = vsel %vm1069, %v2408, %v2415
        %v2417 = vrot.slane %v2412, 4
        %v2418 = vsel %vm1069, %v2417, %v2400
        %v2419 = vrot.slane %v2400, 4
        %v2420 = vsel %vm1069, %v2412, %v2419
        %v2422 = vsel %vm1427, %v2173, 0
        %v2425 = vsel %vm1427, %v2297, 0
        %2427 = vmatpush.bf16.xpose.msra.mxu0 0
        %2428 = vmatpush.bf16.xpose.msra.mxu0 0
        %2429 = vmatpush.bf16.xpose.msra.mxu0 0
        %2430 = vmatpush.bf16.xpose.msra.mxu0 0
        %2431 = vmatpush.bf16.xpose.msra.mxu0 0
        %2432 = vmatpush.bf16.xpose.msra.mxu0 0
        %2433 = vmatpush.bf16.xpose.msra.mxu0 0
        %2434 = vmatpush.bf16.xpose.msra.mxu0 %v2425
        %2435 = vmatmul.bf16.gmra.mxu0 %v2422
        %v2436 = vpop.f32.mrf.mxu0
        %v2437 = vadd.f32 0.0, %v2436
        %v2438 = vpop.f32.mrf.mxu0
        %2439 = vdwg.mxu0
        %v2441 = vsel %vm1427, %v2174, 0
        %v2444 = vsel %vm1427, %v2298, 0
        %2446 = vmatpush.bf16.xpose.msra.mxu0 0
        %2447 = vmatpush.bf16.xpose.msra.mxu0 0
        %2448 = vmatpush.bf16.xpose.msra.mxu0 0
        %2449 = vmatpush.bf16.xpose.msra.mxu0 0
        %2450 = vmatpush.bf16.xpose.msra.mxu0 0
        %2451 = vmatpush.bf16.xpose.msra.mxu0 0
        %2452 = vmatpush.bf16.xpose.msra.mxu0 0
        %2453 = vmatpush.bf16.xpose.msra.mxu0 %v2444
        %2454 = vmatmul.bf16.gmra.mxu0 %v2441
        %v2455 = vpop.f32.mrf.mxu0
        %v2456 = vadd.f32 0.0, %v2455
        %v2457 = vpop.f32.mrf.mxu0
        %2458 = vdwg.mxu0
        %v2460 = vsel %vm1427, %v2175, 0
        %v2463 = vsel %vm1427, %v2299, 0
        %2465 = vmatpush.bf16.xpose.msra.mxu0 0
        %2466 = vmatpush.bf16.xpose.msra.mxu0 0
        %2467 = vmatpush.bf16.xpose.msra.mxu0 0
        %2468 = vmatpush.bf16.xpose.msra.mxu0 0
        %2469 = vmatpush.bf16.xpose.msra.mxu0 0
        %2470 = vmatpush.bf16.xpose.msra.mxu0 0
        %2471 = vmatpush.bf16.xpose.msra.mxu0 0
        %2472 = vmatpush.bf16.xpose.msra.mxu0 %v2463
        %2473 = vmatmul.bf16.gmra.mxu0 %v2460
        %v2474 = vpop.f32.mrf.mxu0
        %v2475 = vadd.f32 0.0, %v2474
        %v2476 = vpop.f32.mrf.mxu0
        %2477 = vdwg.mxu0
        %v2479 = vsel %vm1427, %v2176, 0
        %v2482 = vsel %vm1427, %v2300, 0
        %2484 = vmatpush.bf16.xpose.msra.mxu0 0
        %2485 = vmatpush.bf16.xpose.msra.mxu0 0
        %2486 = vmatpush.bf16.xpose.msra.mxu0 0
        %2487 = vmatpush.bf16.xpose.msra.mxu0 0
        %2488 = vmatpush.bf16.xpose.msra.mxu0 0
        %2489 = vmatpush.bf16.xpose.msra.mxu0 0
        %2490 = vmatpush.bf16.xpose.msra.mxu0 0
        %2491 = vmatpush.bf16.xpose.msra.mxu0 %v2482
        %2492 = vmatmul.bf16.gmra.mxu0 %v2479
        %v2493 = vpop.f32.mrf.mxu0
        %v2494 = vadd.f32 0.0, %v2493
        %v2495 = vpop.f32.mrf.mxu0
        %2496 = vdwg.mxu0
        %v2497 = vsel %vm1427, %v2437, -inf
        %2498 = vmax.xlane.f32.xlu0 %v2497
        %v2499 = vpop.xlane.xlu0 %2498
        %v2500 = vsel %vm1427, %v2456, -inf
        %2501 = vmax.xlane.f32.xlu0 %v2500
        %v2502 = vpop.xlane.xlu0 %2501
        %v2503 = vsel %vm1427, %v2475, -inf
        %2504 = vmax.xlane.f32.xlu0 %v2503
        %v2505 = vpop.xlane.xlu0 %2504
        %v2506 = vsel %vm1427, %v2494, -inf
        %2507 = vmax.xlane.f32.xlu0 %v2506
        %v2508 = vpop.xlane.xlu0 %2507
        %v2509 = vsub.f32 %v2437, %v2499
        %v2510 = vsub.f32 %v2456, %v2502
        %v2511 = vsub.f32 %v2475, %v2505
        %v2512 = vsub.f32 %v2494, %v2508
        %v2513 = vmul.f32 %v2509, 1.442695
        %v2514 = vpow.pop %v2513
        %v2515 = vmul.f32 %v2510, 1.442695
        %v2516 = vpow.pop %v2515
        %v2517 = vmul.f32 %v2511, 1.442695
        %v2518 = vpow.pop %v2517
        %v2519 = vmul.f32 %v2512, 1.442695
        %v2520 = vpow.pop %v2519
        %v2521 = vsel %vm1427, %v2514, 0.0
        %2522 = vadd.xlane.f32.xlu0 %v2521
        %v2523 = vpop.xlane.xlu0 %2522
        %v2524 = vsel %vm1427, %v2516, 0.0
        %2525 = vadd.xlane.f32.xlu0 %v2524
        %v2526 = vpop.xlane.xlu0 %2525
        %v2527 = vsel %vm1427, %v2518, 0.0
        %2528 = vadd.xlane.f32.xlu0 %v2527
        %v2529 = vpop.xlane.xlu0 %2528
        %v2530 = vsel %vm1427, %v2520, 0.0
        %2531 = vadd.xlane.f32.xlu0 %v2530
        %v2532 = vpop.xlane.xlu0 %2531
        %v2533 = vrcp.pop %v2523
        %v2534 = vmul.f32 %v2523, %v2533
        %v2535 = vsub.f32 1.0, %v2534
        %v2536 = vmul.f32 %v2533, %v2535
        %v2537 = vadd.f32 %v2533, %v2536
        %vm2538 = vweird.f32 %v2523
        %vm2539 = vweird.f32 %v2533
        %vm2540 = vmor %vm2538, %vm2539
        %v2541 = vsel %vm2540, %v2533, %v2537
        %v2542 = vand.u32 2147483647, %v2523
        %vm2543 = vcmp.eq.f32.partialorder %v2542, 8.507059e+37
        %v2544 = vand.u32 %v2523, 2147483648
        %v2545 = vor.u32 1.1754944e-38, %v2544
        %v2546 = vsel %vm2543, %v2545, %v2541
        %v2547 = vmul.f32 %v2514, %v2546
        %v2548 = vrcp.pop %v2526
        %v2549 = vmul.f32 %v2526, %v2548
        %v2550 = vsub.f32 1.0, %v2549
        %v2551 = vmul.f32 %v2548, %v2550
        %v2552 = vadd.f32 %v2548, %v2551
        %vm2553 = vweird.f32 %v2526
        %vm2554 = vweird.f32 %v2548
        %vm2555 = vmor %vm2553, %vm2554
        %v2556 = vsel %vm2555, %v2548, %v2552
        %v2557 = vand.u32 2147483647, %v2526
        %vm2558 = vcmp.eq.f32.partialorder %v2557, 8.507059e+37
        %v2559 = vand.u32 %v2526, 2147483648
        %v2560 = vor.u32 1.1754944e-38, %v2559
        %v2561 = vsel %vm2558, %v2560, %v2556
        %v2562 = vmul.f32 %v2516, %v2561
        %v2563 = vrcp.pop %v2529
        %v2564 = vmul.f32 %v2529, %v2563
        %v2565 = vsub.f32 1.0, %v2564
        %v2566 = vmul.f32 %v2563, %v2565
        %v2567 = vadd.f32 %v2563, %v2566
        %vm2568 = vweird.f32 %v2529
        %vm2569 = vweird.f32 %v2563
        %vm2570 = vmor %vm2568, %vm2569
        %v2571 = vsel %vm2570, %v2563, %v2567
        %v2572 = vand.u32 2147483647, %v2529
        %vm2573 = vcmp.eq.f32.partialorder %v2572, 8.507059e+37
        %v2574 = vand.u32 %v2529, 2147483648
        %v2575 = vor.u32 1.1754944e-38, %v2574
        %v2576 = vsel %vm2573, %v2575, %v2571
        %v2577 = vmul.f32 %v2518, %v2576
        %v2578 = vrcp.pop %v2532
        %v2579 = vmul.f32 %v2532, %v2578
        %v2580 = vsub.f32 1.0, %v2579
        %v2581 = vmul.f32 %v2578, %v2580
        %v2582 = vadd.f32 %v2578, %v2581
        %vm2583 = vweird.f32 %v2532
        %vm2584 = vweird.f32 %v2578
        %vm2585 = vmor %vm2583, %vm2584
        %v2586 = vsel %vm2585, %v2578, %v2582
        %v2587 = vand.u32 2147483647, %v2532
        %vm2588 = vcmp.eq.f32.partialorder %v2587, 8.507059e+37
        %v2589 = vand.u32 %v2532, 2147483648
        %v2590 = vor.u32 1.1754944e-38, %v2589
        %v2591 = vsel %vm2588, %v2590, %v2586
        %v2592 = vmul.f32 %v2520, %v2591
        %v2593 = vpack.c.bf16 %v2547, %v2547
        %v2594 = vpack.c.bf16 %v2562, %v2562
        %v2595 = vpack.c.bf16 %v2577, %v2577
        %v2596 = vpack.c.bf16 %v2592, %v2592
        %v2597 = vpack.c.bf16 %v2414, %v2414
        %v2598 = vpack.c.bf16 %v2416, %v2416
        %v2599 = vpack.c.bf16 %v2418, %v2418
        %v2600 = vpack.c.bf16 %v2420, %v2420
        %v2602 = vsel %vm1427, %v2593, 0
        %v2605 = vsel %vm1611, %v2597, 0
        %2607 = vmatpush.bf16.msra.mxu0 0
        %2608 = vmatpush.bf16.msra.mxu0 0
        %2609 = vmatpush.bf16.msra.mxu0 0
        %2610 = vmatpush.bf16.msra.mxu0 0
        %2611 = vmatpush.bf16.msra.mxu0 0
        %2612 = vmatpush.bf16.msra.mxu0 0
        %2613 = vmatpush.bf16.msra.mxu0 0
        %2614 = vmatpush.bf16.msra.mxu0 %v2605
        %2615 = vmatmul.bf16.gmra.mxu0 %v2602
        %v2616 = vpop.f32.mrf.mxu0
        %v2617 = vadd.f32 0.0, %v2616
        %v2618 = vpop.f32.mrf.mxu0
        %2619 = vdwg.mxu0
        %v2621 = vsel %vm1427, %v2594, 0
        %v2624 = vsel %vm1611, %v2598, 0
        %2626 = vmatpush.bf16.msra.mxu0 0
        %2627 = vmatpush.bf16.msra.mxu0 0
        %2628 = vmatpush.bf16.msra.mxu0 0
        %2629 = vmatpush.bf16.msra.mxu0 0
        %2630 = vmatpush.bf16.msra.mxu0 0
        %2631 = vmatpush.bf16.msra.mxu0 0
        %2632 = vmatpush.bf16.msra.mxu0 0
        %2633 = vmatpush.bf16.msra.mxu0 %v2624
        %2634 = vmatmul.bf16.gmra.mxu0 %v2621
        %v2635 = vpop.f32.mrf.mxu0
        %v2636 = vadd.f32 0.0, %v2635
        %v2637 = vpop.f32.mrf.mxu0
        %2638 = vdwg.mxu0
        %v2640 = vsel %vm1427, %v2595, 0
        %v2643 = vsel %vm1611, %v2599, 0
        %2645 = vmatpush.bf16.msra.mxu0 0
        %2646 = vmatpush.bf16.msra.mxu0 0
        %2647 = vmatpush.bf16.msra.mxu0 0
        %2648 = vmatpush.bf16.msra.mxu0 0
        %2649 = vmatpush.bf16.msra.mxu0 0
        %2650 = vmatpush.bf16.msra.mxu0 0
        %2651 = vmatpush.bf16.msra.mxu0 0
        %2652 = vmatpush.bf16.msra.mxu0 %v2643
        %2653 = vmatmul.bf16.gmra.mxu0 %v2640
        %v2654 = vpop.f32.mrf.mxu0
        %v2655 = vadd.f32 0.0, %v2654
        %v2656 = vpop.f32.mrf.mxu0
        %2657 = vdwg.mxu0
        %v2659 = vsel %vm1427, %v2596, 0
        %v2662 = vsel %vm1611, %v2600, 0
        %2664 = vmatpush.bf16.msra.mxu0 0
        %2665 = vmatpush.bf16.msra.mxu0 0
        %2666 = vmatpush.bf16.msra.mxu0 0
        %2667 = vmatpush.bf16.msra.mxu0 0
        %2668 = vmatpush.bf16.msra.mxu0 0
        %2669 = vmatpush.bf16.msra.mxu0 0
        %2670 = vmatpush.bf16.msra.mxu0 0
        %2671 = vmatpush.bf16.msra.mxu0 %v2662
        %2672 = vmatmul.bf16.gmra.mxu0 %v2659
        %v2673 = vpop.f32.mrf.mxu0
        %v2674 = vadd.f32 0.0, %v2673
        %v2675 = vpop.f32.mrf.mxu0
        %2676 = vdwg.mxu0
        %v2677 = vrot.slane %v2655, 4
        %v2678 = vsel %vm1069, %v2677, %v2617
        %v2679 = vrot.slane %v2617, 4
        %v2680 = vsel %vm1069, %v2655, %v2679
        %v2682 = vunpack.c.l.s4 1983009808
        %v2683 = vunpack.c.0.s8 %v2682
        %v2684 = vperm.slane %v2678, %v2683
        %v2686 = vunpack.c.l.s4 1983009808
        %v2687 = vunpack.c.0.s8 %v2686
        %v2688 = vperm.slane %v2680, %v2687
        %v2689 = vrot.slane %v2674, 4
        %v2690 = vsel %vm1069, %v2689, %v2636
        %v2691 = vrot.slane %v2636, 4
        %v2692 = vsel %vm1069, %v2674, %v2691
        %v2694 = vunpack.c.l.s4 1983009808
        %v2695 = vunpack.c.0.s8 %v2694
        %v2696 = vperm.slane %v2690, %v2695
        %v2698 = vunpack.c.l.s4 1983009808
        %v2699 = vunpack.c.0.s8 %v2698
        %v2700 = vperm.slane %v2692, %v2699
        %v2701 = vrot.slane %v2696, 4
        %v2702 = vsel %vm1069, %v2701, %v2684
        %v2703 = vrot.slane %v2684, 4
        %v2704 = vsel %vm1069, %v2696, %v2703
        %v2706 = vunpack.c.l.s4 1934713408
        %v2707 = vunpack.c.0.s8 %v2706
        %v2708 = vperm.slane %v2702, %v2707
        %v2710 = vunpack.c.l.s4 1934713408
        %v2711 = vunpack.c.0.s8 %v2710
        %v2712 = vperm.slane %v2704, %v2711
        %v2713 = vrot.slane %v2700, 4
        %v2714 = vsel %vm1069, %v2713, %v2688
        %v2715 = vrot.slane %v2688, 4
        %v2716 = vsel %vm1069, %v2700, %v2715
        %v2718 = vunpack.c.l.s4 1934713408
        %v2719 = vunpack.c.0.s8 %v2718
        %v2720 = vperm.slane %v2714, %v2719
        %v2722 = vunpack.c.l.s4 1934713408
        %v2723 = vunpack.c.0.s8 %v2722
        %v2724 = vperm.slane %v2716, %v2723
        %v2725 = vrot.slane %v2708, 4
        %v2726 = vsel %vm1069, 0.0, %v2725
        %v2727 = vrot.slane %v2712, 4
        %v2728 = vsel %vm1069, 0.0, %v2727
        %v2729 = vrot.slane %v2720, 4
        %v2730 = vsel %vm1069, 0.0, %v2729
        %v2731 = vrot.slane %v2724, 4
        %v2732 = vsel %vm1069, 0.0, %v2731
        %v2733 = vsel %vm1069, %v2727, %v2708
        %v2735 = vunpack.c.l.s4 1983009808
        %v2736 = vunpack.c.0.s8 %v2735
        %v2737 = vperm.slane %v2733, %v2736
        %v2738 = vrot.slane %v2728, 4
        %v2739 = vsel %vm1069, %v2738, %v2726
        %v2741 = vunpack.c.l.s4 1983009808
        %v2742 = vunpack.c.0.s8 %v2741
        %v2743 = vperm.slane %v2739, %v2742
        %v2744 = vsel %vm1069, %v2731, %v2720
        %v2746 = vunpack.c.l.s4 1983009808
        %v2747 = vunpack.c.0.s8 %v2746
        %v2748 = vperm.slane %v2744, %v2747
        %v2749 = vrot.slane %v2732, 4
        %v2750 = vsel %vm1069, %v2749, %v2730
        %v2752 = vunpack.c.l.s4 1983009808
        %v2753 = vunpack.c.0.s8 %v2752
        %v2754 = vperm.slane %v2750, %v2753
        %v2755 = vrot.slane %v2743, 4
        %v2756 = vsel %vm1069, %v2755, %v2737
        %v2757 = vrot.slane %v2737, 4
        %v2758 = vsel %vm1069, %v2743, %v2757
        %v2760 = vunpack.c.l.s4 1934713408
        %v2761 = vunpack.c.0.s8 %v2760
        %v2762 = vperm.slane %v2756, %v2761
        %v2764 = vunpack.c.l.s4 1934713408
        %v2765 = vunpack.c.0.s8 %v2764
        %v2766 = vperm.slane %v2758, %v2765
        %v2767 = vrot.slane %v2754, 4
        %v2768 = vsel %vm1069, %v2767, %v2748
        %v2769 = vrot.slane %v2748, 4
        %v2770 = vsel %vm1069, %v2754, %v2769
        %v2772 = vunpack.c.l.s4 1934713408
        %v2773 = vunpack.c.0.s8 %v2772
        %v2774 = vperm.slane %v2768, %v2773
        %v2776 = vunpack.c.l.s4 1934713408
        %v2777 = vunpack.c.0.s8 %v2776
        %v2778 = vperm.slane %v2770, %v2777
        %v2779 = vrot.slane %v2774, 4
        %v2780 = vsel %vm1069, %v2779, %v2762
        %v2781 = vrot.slane %v2762, 4
        %v2782 = vsel %vm1069, %v2774, %v2781
        %v2783 = vrot.slane %v2778, 4
        %v2784 = vsel %vm1069, %v2783, %v2766
        %v2785 = vrot.slane %v2766, 4
        %v2786 = vsel %vm1069, %v2778, %v2785
        %2788 = vrot.lane.b32.xlu0 %v2782, 8
        %v2789 = vpop.permute.xlu0 %2788
        %2792 = vrot.lane.b32.xlu0 %v2784, 16
        %v2793 = vpop.permute.xlu0 %2792
        %2796 = vrot.lane.b32.xlu0 %v2786, 24
        %v2797 = vpop.permute.xlu0 %2796
        %v2799 = vsel %vm1427, %v2780, %v2789
        %v2800 = vsel %vm966, %v2799, %v2793
        %v2801 = vsel %vm1809, %v2800, %v2797
        %s2802 = scalar_lea.vmem [#allocation13], 32
        %v2803 = vld [vmem:[%s2802] sm:$0xff]
        %v2804 = vld [vmem:[%s2802 + $0x8] sm:$0xff]
        %v2805 = vld [vmem:[%s2802 + $0x10] sm:$0xff]
        %v2806 = vld [vmem:[%s2802 + $0x18] sm:$0xff]
        %v2807 = vpack.c.bf16 %v2801, %v2801
        %v2808 = vpack.c.bf16 %v2804, %v2803
        %v2809 = vpack.c.bf16 %v2806, %v2805
        %s2810 = scalar_lea.vmem [#allocation14], 1
        %v2811 = vld [vmem:[%s2810] sm:$0x1]
        %v2813 = vperm.slane %v2811, 0
        %v2816 = vsel %vm994, %v2807, 0
        %2818 = vmatpush.bf16.msra.mxu0 0
        %2819 = vmatpush.bf16.msra.mxu0 0
        %2820 = vmatpush.bf16.msra.mxu0 0
        %2821 = vmatpush.bf16.msra.mxu0 0
        %2822 = vmatpush.bf16.msra.mxu0 0
        %2823 = vmatpush.bf16.msra.mxu0 0
        %2824 = vmatpush.bf16.msra.mxu0 %v2809
        %2825 = vmatpush.bf16.msra.mxu0 %v2808
        %2826 = vmatmul.bf16.gmra.mxu0 %v2816
        %v2827 = vpop.f32.mrf.mxu0
        %v2828 = vadd.f32 %v2813, %v2827
        %v2829 = vpop.f32.mrf.mxu0
        %2830 = vdwg.mxu0
        %v2831 = vadd.f32 %v1972, %v2828
        %s2832 = scalar_lea.vmem [#allocation16], 1
        %v2833 = vld [vmem:[%s2832] sm:$0x1]
        %s2834 = scalar_lea.vmem [#allocation17], 1
        %v2835 = vld [vmem:[%s2834] sm:$0x1]
        %v2836 = vsel %vm994, %v2831, 0.0
        %2837 = vadd.xlane.f32.xlu0 %v2836
        %v2838 = vpop.xlane.xlu0 %2837
        %v2839 = vmul.f32 %v2838, %v1850
        %v2840 = vsub.f32 %v2831, %v2839
        %v2841 = vmul.f32 %v2840, %v2840
        %v2842 = vsel %vm994, %v2841, 0.0
        %2843 = vadd.xlane.f32.xlu0 %v2842
        %v2844 = vpop.xlane.xlu0 %2843
        %v2845 = vmul.f32 %v2844, %v1850
        %v2846 = vadd.f32 %v2845, 1e-05
        %v2847 = vrsqrt.pop %v2846
        %v2848 = vmul.f32 %v2847, %v2846
        %v2849 = vmul.f32 %v2848, %v2847
        %v2850 = vmul.f32 0.5, %v2849
        %v2851 = vsub.f32 1.5, %v2850
        %v2852 = vmul.f32 %v2847, %v2851
        %vm2853 = vweird.f32 %v2846
        %vm2854 = vweird.f32 %v2847
        %vm2855 = vmor %vm2853, %vm2854
        %v2856 = vsel %vm2855, %v2847, %v2852
        %v2857 = vmul.f32 %v2840, %v2856
        %v2859 = vperm.slane %v2833, 0
        %v2861 = vmul.f32 %v2857, %v2859
        %v2863 = vperm.slane %v2835, 0
        %v2865 = vadd.f32 %v2861, %v2863
        %s2866 = scalar_lea.vmem [#allocation19], 32
        %v2867 = vld [vmem:[%s2866] sm:$0xff]
        %v2868 = vld [vmem:[%s2866 + $0x8] sm:$0xff]
        %v2869 = vld [vmem:[%s2866 + $0x10] sm:$0xff]
        %v2870 = vld [vmem:[%s2866 + $0x18] sm:$0xff]
        %v2871 = vpack.c.bf16 %v2865, %v2865
        %v2872 = vpack.c.bf16 %v2868, %v2867
        %v2873 = vpack.c.bf16 %v2870, %v2869
        %s2874 = scalar_lea.vmem [#allocation20], 1
        %v2875 = vld [vmem:[%s2874] sm:$0x1]
        %v2877 = vperm.slane %v2875, 0
        %v2880 = vsel %vm994, %v2871, 0
        %2882 = vmatpush.bf16.msra.mxu0 0
        %2883 = vmatpush.bf16.msra.mxu0 0
        %2884 = vmatpush.bf16.msra.mxu0 0
        %2885 = vmatpush.bf16.msra.mxu0 0
        %2886 = vmatpush.bf16.msra.mxu0 0
        %2887 = vmatpush.bf16.msra.mxu0 0
        %2888 = vmatpush.bf16.msra.mxu0 %v2873
        %2889 = vmatpush.bf16.msra.mxu0 %v2872
        %2890 = vmatmul.bf16.gmra.mxu0 %v2880
        %v2891 = vpop.f32.mrf.mxu0
        %v2892 = vadd.f32 %v2877, %v2891
        %v2893 = vpop.f32.mrf.mxu0
        %2894 = vdwg.mxu0
        %v2895 = vmax.f32 %v2892, 0.0
        %s2896 = scalar_lea.vmem %s15, 64
        %v2897 = vld [vmem:[%s2896] sm:$0xff]
        %v2898 = vld [vmem:[%s2896 + $0x8] sm:$0xff]
        %v2899 = vld [vmem:[%s2896 + $0x10] sm:$0xff]
        %v2900 = vld [vmem:[%s2896 + $0x18] sm:$0xff]
        %v2901 = vld [vmem:[%s2896 + $0x20] sm:$0xff]
        %v2902 = vld [vmem:[%s2896 + $0x28] sm:$0xff]
        %v2903 = vld [vmem:[%s2896 + $0x30] sm:$0xff]
        %v2904 = vld [vmem:[%s2896 + $0x38] sm:$0xff]
        %v2905 = vpack.c.bf16 %v2895, %v2895
        %v2906 = vpack.c.bf16 %v2898, %v2897
        %v2907 = vpack.c.bf16 %v2900, %v2899
        %v2908 = vpack.c.bf16 %v2902, %v2901
        %v2909 = vpack.c.bf16 %v2904, %v2903
        %s2910 = scalar_lea.vmem [#allocation22], 1
        %v2911 = vld [vmem:[%s2910] sm:$0x1]
        %v2913 = vperm.slane %v2911, 0
        %v2916 = vsel %vm1923, %v2905, 0
        %2918 = vmatpush.bf16.msra.mxu0 0
        %2919 = vmatpush.bf16.msra.mxu0 0
        %2920 = vmatpush.bf16.msra.mxu0 0
        %2921 = vmatpush.bf16.msra.mxu0 0
        %2922 = vmatpush.bf16.msra.mxu0 %v2909
        %2923 = vmatpush.bf16.msra.mxu0 %v2908
        %2924 = vmatpush.bf16.msra.mxu0 %v2907
        %2925 = vmatpush.bf16.msra.mxu0 %v2906
        %2926 = vmatmul.bf16.gmra.mxu0 %v2916
        %v2927 = vpop.f32.mrf.mxu0
        %v2928 = vadd.f32 %v2913, %v2927
        %v2929 = vpop.f32.mrf.mxu0
        %2930 = vdwg.mxu0
        %v2931 = vadd.f32 %v2865, %v2928
        %s2932 = scalar_lea.vmem [#allocation23], 1
        %v2933 = vld [vmem:[%s2932] sm:$0x1]
        %s2934 = scalar_lea.vmem [#allocation25], 1
        %v2935 = vld [vmem:[%s2934] sm:$0x1]
        %v2936 = vsel %vm994, %v2931, 0.0
        %2937 = vadd.xlane.f32.xlu0 %v2936
        %v2938 = vpop.xlane.xlu0 %2937
        %v2939 = vmul.f32 %v2938, %v1850
        %v2940 = vsub.f32 %v2931, %v2939
        %v2941 = vmul.f32 %v2940, %v2940
        %v2942 = vsel %vm994, %v2941, 0.0
        %2943 = vadd.xlane.f32.xlu0 %v2942
        %v2944 = vpop.xlane.xlu0 %2943
        %v2945 = vmul.f32 %v2944, %v1850
        %v2946 = vadd.f32 %v2945, 1e-05
        %v2947 = vrsqrt.pop %v2946
        %v2948 = vmul.f32 %v2947, %v2946
        %v2949 = vmul.f32 %v2948, %v2947
        %v2950 = vmul.f32 0.5, %v2949
        %v2951 = vsub.f32 1.5, %v2950
        %v2952 = vmul.f32 %v2947, %v2951
        %vm2953 = vweird.f32 %v2946
        %vm2954 = vweird.f32 %v2947
        %vm2955 = vmor %vm2953, %vm2954
        %v2956 = vsel %vm2955, %v2947, %v2952
        %v2957 = vmul.f32 %v2940, %v2956
        %v2959 = vperm.slane %v2933, 0
        %v2961 = vmul.f32 %v2957, %v2959
        %v2963 = vperm.slane %v2935, 0
        %v2965 = vadd.f32 %v2961, %v2963
        %v2966 = vsel %vm994, %v2965, 0.0
        %v2967 = vrot.slane %v2966, 4
        %v2968 = vadd.f32 %v2966, %v2967
        %v2969 = vrot.slane %v2968, 2
        %v2970 = vadd.f32 %v2968, %v2969
        %v2971 = vrot.slane %v2970, 1
        %v2972 = vadd.f32 %v2970, %v2971
        %v2973 = vrcp.pop 8.0
        %v2974 = vmul.f32 8.0, %v2973
        %v2975 = vsub.f32 1.0, %v2974
        %v2976 = vmul.f32 %v2973, %v2975
        %v2977 = vadd.f32 %v2973, %v2976
        %vm2978 = vweird.f32 %v2973
        %v2979 = vsel %vm2978, %v2973, %v2977
        %v2980 = vmul.f32 %v2972, %v2979
        %v2981 = vld [vmem:[%s19] sm:$0xff]
        %v2982 = vld [vmem:[%s19 + $0x8] sm:$0xff]
        %v2983 = vld [vmem:[%s19 + $0x10] sm:$0xff]
        %v2984 = vld [vmem:[%s19 + $0x18] sm:$0xff]
        %v2985 = vpack.c.bf16 %v2980, %v2980
        %v2986 = vpack.c.bf16 %v2982, %v2981
        %v2987 = vpack.c.bf16 %v2984, %v2983
        %v2988 = vld [vmem:[%s20] sm:$0x1]
        %v2990 = vsel %vm994, %v2985, 0
        %2992 = vmatpush.bf16.msra.mxu0 0
        %2993 = vmatpush.bf16.msra.mxu0 0
        %2994 = vmatpush.bf16.msra.mxu0 0
        %2995 = vmatpush.bf16.msra.mxu0 0
        %2996 = vmatpush.bf16.msra.mxu0 0
        %2997 = vmatpush.bf16.msra.mxu0 0
        %2998 = vmatpush.bf16.msra.mxu0 %v2987
        %2999 = vmatpush.bf16.msra.mxu0 %v2986
        %3000 = vmatmul.bf16.gmra.mxu0 %v2990
        %v3001 = vpop.f32.mrf.mxu0
        %v3002 = vadd.f32 %v2988, %v3001
        %v3003 = vpop.f32.mrf.mxu0
        %3004 = vdwg.mxu0
        %v3005 = vmax.f32 %v3002, 0.0
        %v3006 = vld [vmem:[%s21] sm:$0xff]
        %v3007 = vld [vmem:[%s21 + $0x8] sm:$0xff]
        %v3008 = vpack.c.bf16 %v3005, %v3005
        %v3009 = vpack.c.bf16 %v3007, %v3006
        %v3010 = vld [vmem:[%s22] sm:$0x1]
        %v3012 = vsel %vm966, %v3008, 0
        %3014 = vmatpush.bf16.msra.mxu0 0
        %3015 = vmatpush.bf16.msra.mxu0 0
        %3016 = vmatpush.bf16.msra.mxu0 0
        %3017 = vmatpush.bf16.msra.mxu0 0
        %3018 = vmatpush.bf16.msra.mxu0 0
        %3019 = vmatpush.bf16.msra.mxu0 0
        %3020 = vmatpush.bf16.msra.mxu0 0
        %3021 = vmatpush.bf16.msra.mxu0 %v3009
        %3022 = vmatmul.bf16.gmra.mxu0 %v3012
        %v3023 = vpop.f32.mrf.mxu0
        %v3024 = vadd.f32 %v3010, %v3023
        %v3025 = vpop.f32.mrf.mxu0
        %3026 = vdwg.mxu0
        %vm3027 = vcmask 32768
        %3028 = vst.msk [vmem:[%s955] sm:$0x1] %vm3027, %v3024
        %s3029 = sand.u32 %s543, 1
        %s3030 = scalar_lea.sflag [#allocation4], %s3029
        %s3031 = sand.u32 %s543, 1
        %s3032 = scalar_lea.vmem [#allocation26], %s3031
        // Predicated region
        $region173: #{tpu_custom_call.1} parent=111 // pred_check
          %p3033 = pneg %p553
        $region174: #{tpu_custom_call.1} parent=111 // pred_check_branch
          %3035 = sbr.rel (%p3033) target = $region176
        $region175: #{tpu_custom_call.1} parent=111 // pred_region
          %3037 = vsyncadd %s3030, 0
          %s3038 = scalar_lea.hbm %s23, %s47
          %s3040 = sshll.u32 %s3032, 4
          %s3041 = int_to_ptr.vmem [resolvable:$true] %s3040
          %s3042 = sshll.u32 %s3038, 4
          %s3043 = int_to_ptr.hbm [resolvable:$true] %s3042
          %3045 = dma.vmem_to_hbm [thread:$0]  %s3041, 16, %s3043, %s3030
        $region176: #{tpu_custom_call.1} parent=111 // pred_fallthru
          _
      $region112: #{tpu_custom_call.1} parent=5 // pred_fallthru
        _
      %p3046 = scmp.le.s32.totalorder 2, %s42
      // Predicated region
      $region177: #{tpu_custom_call.1} parent=5 // pred_check
        %p3047 = pneg %p3046
      $region178: #{tpu_custom_call.1} parent=5 // pred_check_branch
        %3049 = sbr.rel (%p3047) target = $region180
      $region179: #{tpu_custom_call.1} parent=5 // pred_region
        %s3050 = ssub.s32 %s42, 2
        // Predicated region
        $region181: #{tpu_custom_call.1} parent=179 // pred_check
          %p3051 = pneg %p559
        $region182: #{tpu_custom_call.1} parent=179 // pred_check_branch
          %3053 = sbr.rel (%p3051) target = $region184
        $region183: #{tpu_custom_call.1} parent=179 // pred_region
          %s3054 = sand.u32 %s544, 1
          %s3055 = scalar_lea.sflag [#allocation4], %s3054
          %s3056 = sand.u32 %s544, 1
          %s3057 = scalar_lea.vmem [#allocation26], %s3056
          %3059 = dma.done %s3055, 16
        $region184: #{tpu_custom_call.1} parent=179 // pred_fallthru
          _
      $region180: #{tpu_custom_call.1} parent=5 // pred_fallthru
        _
    $region6: #{tpu_custom_call.1} parent=1 // loop_footer
      %s46 = sadd.s32 1, %s42
    $region7: #{tpu_custom_call.1} parent=1 // loop_footer_branch
      %41 = sbr.rel target = $region3
    $region8: #{tpu_custom_call.1} parent=1 // loop_exit
      _
    %3060 = vsyncpa [#allocation3], 1
    %s3061 = scalar_lea.sflag [#allocation3], 1
    %3062 = vsyncpa %s3061, 1
    %3063 = vsyncpa [#allocation6], 1
    %3064 = vsyncpa [#allocation9], 1
    %3065 = vsyncpa [#allocation12], 1
    %3066 = vsyncpa [#allocation15], 1
    %3067 = vsyncpa [#allocation18], 1
    %3068 = vsyncpa [#allocation21], 1
    %3069 = vsyncpa [#allocation24], 1
    %3070 = vsyncpa [#allocation4], 1
    %s3071 = scalar_lea.sflag [#allocation4], 1
    %3072 = vsyncpa %s3071, 1

</llo_original>
